<compile_context>
chip_gen: v7x
topology: tpu7x:2x2x1
jax: 0.10.0
libtpu: 0.0.40
codegen_flags: <defaults>
</compile_context>

<pallas_src>
import functools

import jax
import jax.numpy as jnp
from jax import lax
from jax.experimental import pallas as pl
from jax.experimental.pallas import tpu as pltpu


# ----------------------------- kernel ---------------------------------------


def _plane_resblock_kernel(xmain_ref, xhalo_ref, colmask_ref,
                           w1_ref, w2_ref, s1_ref, b1_ref, s2_ref, b2_ref,
                           out_ref, *, wp):
    """One (batch, row-tile) step.

    xmain_ref : (1, TH*Wp, C)      bf16  main rows of the zero-padded input
    xhalo_ref : (1, 1, 4*Wp, C)    bf16  4-row halo strip below the main block
    colmask_ref: ((TH+2)*Wp, 1)    f32   1.0 on valid W columns, 0.0 on halo
    w1/w2     : (9C, C)            bf16  im2col 3x3 weights [ (dy*3+dx)*C+ci, co ]
    s*/b*     : (1, C)             f32   folded BN scale / (conv-bias + BN) bias
    out_ref   : (1, TH*Wp, C)      f32   output rows in padded-W coordinates
    """
    n_out = out_ref.shape[1]                 # TH*Wp
    n_mid = n_out + 2 * wp                   # (TH+2)*Wp
    t = pl.program_id(1)
    last_t = pl.num_programs(1) - 1

    # (TH+4)*Wp-row input window = main block + halo strip (on-chip concat).
    window = jnp.concatenate([xmain_ref[0], xhalo_ref[0, 0]], axis=0)
    window_f32 = window.astype(jnp.float32)

    def conv9(src, n_rows, w_ref):
        # src: f32 (n_rows + 2*wp, C) with exact zeros in every W-halo column,
        # so the two whole-array rolls wrap onto zeros.
        left = pltpu.roll(src, 1, 0)                       # column w-1 taps
        right = pltpu.roll(src, src.shape[0] - 1, 0)       # column w+1 taps
        taps = []
        for dy in range(3):                                # row taps (aligned)
            off = dy * wp
            for src_v in (left, src, right):               # dx = 0, 1, 2
                taps.append(src_v[off:off + n_rows].astype(jnp.bfloat16))
        xcat = jnp.concatenate(taps, axis=-1)              # (n_rows, 9C) bf16
        return jnp.dot(xcat, w_ref[...],                   # (n_rows, C) f32
                       preferred_element_type=jnp.float32)

    # ---- conv1 -> BN1 -> ReLU over the TH+2 rows conv2 needs ----------------
    y1 = jnp.maximum(conv9(window_f32, n_mid, w1_ref) * s1_ref[0] + b1_ref[0],
                     0.0)

    # Zero the W-halo columns and, at the first / last row tile, the
    # out-of-image halo rows, so conv2's taps see exact zeros (SAME padding).
    ridx = lax.broadcasted_iota(jnp.int32, (n_mid, 1), 0)
    halo_row = ((ridx < wp) & (t == 0)) | \
               ((ridx >= n_mid - wp) & (t == last_t))
    y1 = y1 * jnp.where(halo_row, 0.0, colmask_ref[...])

    # ---- conv2 -> BN2, residual add (f32), final ReLU ------------------------
    y2 = conv9(y1, n_out, w2_ref) * s2_ref[0] + b2_ref[0]
    resid = window_f32[2 * wp:2 * wp + n_out]
    out_ref[0] = jnp.maximum(resid + y2, 0.0).astype(out_ref.dtype)


# ------------------------- VMEM budgeting helpers ----------------------------


def _vmem_capacity_bytes():
    try:
        info = pltpu.get_tpu_info()
        cap = getattr(info, "vmem_capacity_bytes", None)
        if cap:
            return int(cap)
    except Exception:
        pass
    return 64 << 20                          # conservative (v7x per-TC) fallback


def _vmem_padded_bytes(rows, cols, itemsize):
    # VMEM tiles the last two dims: lanes pad to 128, sublanes pack 32B rows.
    sub = 8 * (4 // itemsize)
    r = ((rows + sub - 1) // sub) * sub
    c = ((cols + 127) // 128) * 128
    return r * c * itemsize


def _step_vmem_bytes(th, wp, c):
    """Honest per-grid-step VMEM estimate, including in-kernel temporaries."""
    nw = (th + 4) * wp                       # input window rows
    n1 = (th + 2) * wp                       # intermediate rows
    no = th * wp                             # output rows
    b = 0
    b += 2 * _vmem_padded_bytes(no, c, 2)          # main input block (x2 bufs)
    b += 2 * _vmem_padded_bytes(4 * wp, c, 2)      # halo block (x2 bufs)
    b += _vmem_padded_bytes(nw, c, 2)              # concatenated window (bf16)
    b += 3 * _vmem_padded_bytes(nw, c, 4)          # f32 window + 2 rolled copies
    b += _vmem_padded_bytes(n1, 9 * c, 2)          # conv1 im2col slab
    b += 4 * _vmem_padded_bytes(n1, c, 4)          # acc1 / y1 + 2 rolled copies
    b += _vmem_padded_bytes(no, 9 * c, 2)          # conv2 im2col slab
    b += _vmem_padded_bytes(no, c, 4)              # acc2 / epilogue
    b += 2 * _vmem_padded_bytes(no, c, 4)          # output block (x2 bufs)
    b += _vmem_padded_bytes(n1, 1, 4)              # column mask
    b += 4 * _vmem_padded_bytes(9 * c, c, 2)       # weights / scale / bias
    return b


def _choose_tile_rows(h, wp, c, budget_bytes):
    divisors = sorted((d for d in range(1, h + 1) if h % d == 0), reverse=True)
    for th in divisors:
        if _step_vmem_bytes(th, wp, c) * 5 // 4 <= budget_bytes:
            return th
    return 1


# ------------------------------- wrapper -------------------------------------


def _fold_conv_bn(w, cb, bn, c):
    g, b, mean, var, eps = bn
    scale = g / jnp.sqrt(var + eps)                       # (C,)
    bias = (cb - mean) * scale + b                        # (C,)
    # (Cout, Cin, kh, kw) -> (kh, kw, Cin, Cout) -> (9C, C), row=(dy*3+dx)*C+ci
    w9 = jnp.transpose(w, (2, 3, 1, 0)).reshape(9 * c, c)
    return (w9.astype(jnp.bfloat16),
            scale.reshape(1, c).astype(jnp.float32),
            bias.reshape(1, c).astype(jnp.float32))


def plane_resblock_pallas(x_nchw, w1, cb1, w2, cb2, bn1, bn2, tile_rows=None):
    """x_nchw: (N, C, H, W) float32.  w*: (C, C, 3, 3).  cb*: (C,).
    bn* = (gamma, beta, running_mean, running_var, eps)  (inference mode)."""
    N, C, H, W = x_nchw.shape
    Wp = ((W + 2 + 15) // 16) * 16          # 16-aligned padded width (bf16 pack)

    cap = _vmem_capacity_bytes()
    if tile_rows is None:
        TH = _choose_tile_rows(H, Wp, C, (cap * 2) // 5)
    else:
        tile_rows = max(1, min(int(tile_rows), H))
        TH = max(d for d in range(1, tile_rows + 1) if H % d == 0)
    n_tiles = H // TH

    # ---- host-side layout: NCHW -> NHWC, pad H by 2 / W to Wp, cast bf16 ----
    x_nhwc = jnp.transpose(x_nchw, (0, 2, 3, 1)).astype(jnp.float32)
    xpad = jnp.pad(x_nhwc, ((0, 0), (2, 2), (1, Wp - W - 1), (0, 0)))
    xpad = xpad.astype(jnp.bfloat16)                       # (N, H+4, Wp, C)
    xmain = xpad.reshape(N, (H + 4) * Wp, C)               # blocks cover [0, H*Wp)

    # 4-row halo strip just below each tile's main block (4 rows per tile).
    halo_rows = (jnp.arange(n_tiles)[:, None] + 1) * TH + jnp.arange(4)[None, :]
    xhalo = jnp.take(xpad, halo_rows, axis=1).reshape(N, n_tiles, 4 * Wp, C)

    # Valid-column mask (periodic over Wp) for the TH+2 intermediate rows.
    cols = jnp.arange(Wp)
    col_valid = ((cols >= 1) & (cols <= W)).astype(jnp.float32)
    colmask = jnp.tile(col_valid, (TH + 2,)).reshape((TH + 2) * Wp, 1)

    w1b, s1, b1 = _fold_conv_bn(w1, cb1, bn1, C)
    w2b, s2, b2 = _fold_conv_bn(w2, cb2, bn2, C)

    est = _step_vmem_bytes(TH, Wp, C)
    vmem_limit = int(min(max(2 * est, 32 << 20), (cap * 3) // 4))

    grid_spec = pltpu.PrefetchScalarGridSpec(
        num_scalar_prefetch=0,
        grid=(N, n_tiles),
        in_specs=[
            pl.BlockSpec((1, TH * Wp, C), lambda b, t: (b, t, 0)),
            pl.BlockSpec((1, 1, 4 * Wp, C), lambda b, t: (b, t, 0, 0)),
            pl.BlockSpec(((TH + 2) * Wp, 1), lambda b, t: (0, 0)),
            pl.BlockSpec((9 * C, C), lambda b, t: (0, 0)),
            pl.BlockSpec((9 * C, C), lambda b, t: (0, 0)),
            pl.BlockSpec((1, C), lambda b, t: (0, 0)),
            pl.BlockSpec((1, C), lambda b, t: (0, 0)),
            pl.BlockSpec((1, C), lambda b, t: (0, 0)),
            pl.BlockSpec((1, C), lambda b, t: (0, 0)),
        ],
        out_specs=pl.BlockSpec((1, TH * Wp, C), lambda b, t: (b, t, 0)),
    )

    out_flat = pl.pallas_call(
        functools.partial(_plane_resblock_kernel, wp=Wp),
        out_shape=jax.ShapeDtypeStruct((N, H * Wp, C), jnp.float32),
        grid_spec=grid_spec,
        compiler_params=pltpu.CompilerParams(
            dimension_semantics=("parallel", "parallel"),
            vmem_limit_bytes=vmem_limit),
    )(xmain, xhalo, colmask, w1b, w2b, s1, b1, s2, b2)

    # Un-flatten, drop the W halo, NHWC -> NCHW (module API is NCHW f32).
    out = out_flat.reshape(N, H, Wp, C)[:, :, 1:W + 1, :]
    return jnp.transpose(out, (0, 3, 1, 2))


# ------------------------------ reference ------------------------------------


def plane_resblock_reference(x_nchw, w1, cb1, w2, cb2, bn1, bn2,
                             matmul_dtype=jnp.float32):
    """Pure-JAX reference (inference-mode BN).  matmul_dtype=bfloat16 mirrors
    the kernel's bf16 HBM input / bf16-operand, f32-accumulate matmuls."""
    x = jnp.transpose(x_nchw, (0, 2, 3, 1)).astype(jnp.float32)
    if matmul_dtype == jnp.bfloat16:
        # The kernel reads a bf16 copy of the input (conv taps AND residual).
        x = x.astype(jnp.bfloat16).astype(jnp.float32)

    def conv_bn(inp, w, cb, bn):
        g, b, mean, var, eps = bn
        scale = g / jnp.sqrt(var + eps)
        bias = (cb - mean) * scale + b
        w_hwio = jnp.transpose(w, (2, 3, 1, 0))
        y = lax.conv_general_dilated(
            inp.astype(matmul_dtype), w_hwio.astype(matmul_dtype),
            window_strides=(1, 1), padding="SAME",
            dimension_numbers=("NHWC", "HWIO", "NHWC"),
            preferred_element_type=jnp.float32)
        return y * scale + bias

    y1 = jax.nn.relu(conv_bn(x, w1, cb1, bn1))
    y2 = conv_bn(y1, w2, cb2, bn2)
    out = jax.nn.relu(x + y2)
    return jnp.transpose(out, (0, 3, 1, 2))


# -------------------------------- demo ---------------------------------------


if __name__ == "__main__":
    key = jax.random.PRNGKey(0)
    N, C, H, W = 2, 4, 16, 16

    k_x, k_w1, k_b1, k_w2, k_b2 = jax.random.split(key, 5)
    x = jax.random.normal(k_x, (N, C, H, W), dtype=jnp.float32)

    # Conv2d default (kaiming-uniform-ish) deterministic init.
    bound = 1.0 / (C * 9) ** 0.5
    w1 = jax.random.uniform(k_w1, (C, C, 3, 3), minval=-bound, maxval=bound)
    cb1 = jax.random.uniform(k_b1, (C,), minval=-bound, maxval=bound)
    w2 = jax.random.uniform(k_w2, (C, C, 3, 3), minval=-bound, maxval=bound)
    cb2 = jax.random.uniform(k_b2, (C,), minval=-bound, maxval=bound)

    # BatchNorm2d defaults (gamma=1, beta=0, mean=0, var=1, eps=1e-5).
    bn1 = (jnp.ones((C,)), jnp.zeros((C,)), jnp.zeros((C,)), jnp.ones((C,)), 1e-5)
    bn2 = (jnp.ones((C,)), jnp.zeros((C,)), jnp.zeros((C,)), jnp.ones((C,)), 1e-5)

    # H-tiled path (2 row tiles) -- exercises the halo / boundary handling.
    out = plane_resblock_pallas(x, w1, cb1, w2, cb2, bn1, bn2, tile_rows=8)
    out = jax.block_until_ready(out)
    assert out.shape == (N, C, H, W)

    # Tight check vs a numerically matched reference (bf16 input + bf16
    # matmul operands, f32 accumulation -- same as the kernel).
    ref_bf16 = plane_resblock_reference(x, w1, cb1, w2, cb2, bn1, bn2,
                                        matmul_dtype=jnp.bfloat16)
    err_b = float(jnp.max(jnp.abs(out - ref_bf16)))
    assert jnp.allclose(out, ref_bf16, atol=5e-3, rtol=5e-3), err_b

    # Loose sanity check vs the pure-f32 reference (bf16 rounding only).
    ref_f32 = plane_resblock_reference(x, w1, cb1, w2, cb2, bn1, bn2)
    err_f = float(jnp.max(jnp.abs(out - ref_f32)))
    assert jnp.allclose(out, ref_f32, atol=5e-2, rtol=5e-2), err_f

    # Auto-tiled path (single tile at this size) must agree as well.
    out_auto = plane_resblock_pallas(x, w1, cb1, w2, cb2, bn1, bn2)
    out_auto = jax.block_until_ready(out_auto)
    err_a = float(jnp.max(jnp.abs(out_auto - ref_bf16)))
    assert jnp.allclose(out_auto, ref_bf16, atol=5e-3, rtol=5e-3), err_a

    print("KERNEL_OK")
</pallas_src>

<mosaic_0001>
module attributes {stable_mosaic.version = 11 : i64} {
  func.func @_plane_resblock_kernel(%arg0: i32, %arg1: i32, %arg2: memref<1x256x4xbf16, #tpu.memory_space<vmem>>, %arg3: memref<1x1x128x4xbf16, #tpu.memory_space<vmem>>, %arg4: memref<320x1xf32, #tpu.memory_space<vmem>>, %arg5: memref<36x4xbf16, #tpu.memory_space<vmem>>, %arg6: memref<36x4xbf16, #tpu.memory_space<vmem>>, %arg7: memref<1x4xf32, #tpu.memory_space<vmem>>, %arg8: memref<1x4xf32, #tpu.memory_space<vmem>>, %arg9: memref<1x4xf32, #tpu.memory_space<vmem>>, %arg10: memref<1x4xf32, #tpu.memory_space<vmem>>, %arg11: memref<1x256x4xf32, #tpu.memory_space<vmem>>) attributes {dimension_semantics = [#tpu.dimension_semantics<parallel>, #tpu.dimension_semantics<parallel>], iteration_bounds = array<i64: 2, 2>, scalar_prefetch = 0 : i64, scratch_operands = 0 : i64, tpu.core_type = #tpu.core_type<tc>, window_params = [{transform_indices = @transform_0, window_bounds = array<i64: 1, 256, 4>}, {transform_indices = @transform_1, window_bounds = array<i64: 1, 1, 128, 4>}, {pipeline_mode = #tpu.pipeline_mode<synchronous>, transform_indices = @transform_2, window_bounds = array<i64: 320, 1>}, {pipeline_mode = #tpu.pipeline_mode<synchronous>, transform_indices = @transform_3, window_bounds = array<i64: 36, 4>}, {pipeline_mode = #tpu.pipeline_mode<synchronous>, transform_indices = @transform_4, window_bounds = array<i64: 36, 4>}, {pipeline_mode = #tpu.pipeline_mode<synchronous>, transform_indices = @transform_5, window_bounds = array<i64: 1, 4>}, {pipeline_mode = #tpu.pipeline_mode<synchronous>, transform_indices = @transform_6, window_bounds = array<i64: 1, 4>}, {pipeline_mode = #tpu.pipeline_mode<synchronous>, transform_indices = @transform_7, window_bounds = array<i64: 1, 4>}, {pipeline_mode = #tpu.pipeline_mode<synchronous>, transform_indices = @transform_8, window_bounds = array<i64: 1, 4>}, {transform_indices = @transform_9, window_bounds = array<i64: 1, 256, 4>}]} {
    %c0 = arith.constant 0 : index
    %c0_0 = arith.constant 0 : index
    %c0_1 = arith.constant 0 : index
    %0 = vector.load %arg2[%c0, %c0_0, %c0_1] : memref<1x256x4xbf16, #tpu.memory_space<vmem>>, vector<1x256x4xbf16>
    %1 = vector.shape_cast %0 : vector<1x256x4xbf16> to vector<256x4xbf16>
    %c0_2 = arith.constant 0 : index
    %c0_3 = arith.constant 0 : index
    %c0_4 = arith.constant 0 : index
    %c0_5 = arith.constant 0 : index
    %2 = vector.load %arg3[%c0_2, %c0_3, %c0_4, %c0_5] : memref<1x1x128x4xbf16, #tpu.memory_space<vmem>>, vector<1x1x128x4xbf16>
    %3 = vector.shape_cast %2 : vector<1x1x128x4xbf16> to vector<128x4xbf16>
    %4 = tpu.concatenate %1, %3 in 0 : vector<256x4xbf16>, vector<128x4xbf16> -> vector<384x4xbf16>
    %5 = arith.extf %4 : vector<384x4xbf16> to vector<384x4xf32>
    %c1_i32 = arith.constant 1 : i32
    %6 = tpu.dynamic_rotate %5 by %c1_i32 dim 0 : vector<384x4xf32>, i32 -> vector<384x4xf32>
    %c383_i32 = arith.constant 383 : i32
    %7 = tpu.dynamic_rotate %5 by %c383_i32 dim 0 : vector<384x4xf32>, i32 -> vector<384x4xf32>
    %8 = vector.extract_strided_slice %6 {offsets = [0, 0], sizes = [320, 4], strides = [1, 1]} : vector<384x4xf32> to vector<320x4xf32>
    %9 = arith.truncf %8 : vector<320x4xf32> to vector<320x4xbf16>
    %10 = vector.extract_strided_slice %5 {offsets = [0, 0], sizes = [320, 4], strides = [1, 1]} : vector<384x4xf32> to vector<320x4xf32>
    %11 = arith.truncf %10 : vector<320x4xf32> to vector<320x4xbf16>
    %12 = vector.extract_strided_slice %7 {offsets = [0, 0], sizes = [320, 4], strides = [1, 1]} : vector<384x4xf32> to vector<320x4xf32>
    %13 = arith.truncf %12 : vector<320x4xf32> to vector<320x4xbf16>
    %14 = vector.extract_strided_slice %6 {offsets = [32, 0], sizes = [320, 4], strides = [1, 1]} : vector<384x4xf32> to vector<320x4xf32>
    %15 = arith.truncf %14 : vector<320x4xf32> to vector<320x4xbf16>
    %16 = vector.extract_strided_slice %5 {offsets = [32, 0], sizes = [320, 4], strides = [1, 1]} : vector<384x4xf32> to vector<320x4xf32>
    %17 = arith.truncf %16 : vector<320x4xf32> to vector<320x4xbf16>
    %18 = vector.extract_strided_slice %7 {offsets = [32, 0], sizes = [320, 4], strides = [1, 1]} : vector<384x4xf32> to vector<320x4xf32>
    %19 = arith.truncf %18 : vector<320x4xf32> to vector<320x4xbf16>
    %20 = vector.extract_strided_slice %6 {offsets = [64, 0], sizes = [320, 4], strides = [1, 1]} : vector<384x4xf32> to vector<320x4xf32>
    %21 = arith.truncf %20 : vector<320x4xf32> to vector<320x4xbf16>
    %22 = vector.extract_strided_slice %5 {offsets = [64, 0], sizes = [320, 4], strides = [1, 1]} : vector<384x4xf32> to vector<320x4xf32>
    %23 = arith.truncf %22 : vector<320x4xf32> to vector<320x4xbf16>
    %24 = vector.extract_strided_slice %7 {offsets = [64, 0], sizes = [320, 4], strides = [1, 1]} : vector<384x4xf32> to vector<320x4xf32>
    %25 = arith.truncf %24 : vector<320x4xf32> to vector<320x4xbf16>
    %26 = tpu.concatenate %9, %11, %13, %15, %17, %19, %21, %23, %25 in 1 : vector<320x4xbf16>, vector<320x4xbf16>, vector<320x4xbf16>, vector<320x4xbf16>, vector<320x4xbf16>, vector<320x4xbf16>, vector<320x4xbf16>, vector<320x4xbf16>, vector<320x4xbf16> -> vector<320x36xbf16>
    %c0_6 = arith.constant 0 : index
    %c0_7 = arith.constant 0 : index
    %27 = vector.load %arg5[%c0_6, %c0_7] : memref<36x4xbf16, #tpu.memory_space<vmem>>, vector<36x4xbf16>
    %cst = arith.constant dense<0.000000e+00> : vector<320x4xf32>
    %28 = tpu.matmul %26, %27, %cst {dimension_numbers = #tpu.dot_dimension_numbers<[1], [0], [0], [1], [0, 0, 1, 1], [], []>} : vector<320x36xbf16>, vector<36x4xbf16>, vector<320x4xf32> -> vector<320x4xf32>
    %c0_8 = arith.constant 0 : index
    %c0_9 = arith.constant 0 : index
    %29 = vector.load %arg7[%c0_8, %c0_9] : memref<1x4xf32, #tpu.memory_space<vmem>>, vector<1x4xf32>
    %30 = vector.shape_cast %29 : vector<1x4xf32> to vector<4xf32>
    %31 = vector.shape_cast %30 : vector<4xf32> to vector<1x4xf32>
    %32 = vector.broadcast %31 : vector<1x4xf32> to vector<320x4xf32>
    %33 = arith.mulf %28, %32 : vector<320x4xf32>
    %c0_10 = arith.constant 0 : index
    %c0_11 = arith.constant 0 : index
    %34 = vector.load %arg8[%c0_10, %c0_11] : memref<1x4xf32, #tpu.memory_space<vmem>>, vector<1x4xf32>
    %35 = vector.shape_cast %34 : vector<1x4xf32> to vector<4xf32>
    %36 = vector.shape_cast %35 : vector<4xf32> to vector<1x4xf32>
    %37 = vector.broadcast %36 : vector<1x4xf32> to vector<320x4xf32>
    %38 = arith.addf %33, %37 : vector<320x4xf32>
    %cst_12 = arith.constant 0.000000e+00 : f32
    %39 = vector.broadcast %cst_12 : f32 to vector<320x4xf32>
    %40 = arith.maximumf %38, %39 : vector<320x4xf32>
    %41 = tpu.iota {dimensions = array<i32: 0>} : vector<320x1xi32>
    %c32_i32 = arith.constant 32 : i32
    %42 = vector.broadcast %c32_i32 : i32 to vector<320x1xi32>
    %43 = arith.cmpi slt, %41, %42 : vector<320x1xi32>
    %c0_i32 = arith.constant 0 : i32
    %44 = arith.cmpi eq, %arg1, %c0_i32 : i32
    %45 = vector.broadcast %44 : i1 to vector<320x1xi1>
    %46 = arith.andi %43, %45 : vector<320x1xi1>
    %c288_i32 = arith.constant 288 : i32
    %47 = vector.broadcast %c288_i32 : i32 to vector<320x1xi32>
    %48 = arith.cmpi sge, %41, %47 : vector<320x1xi32>
    %c1_i32_13 = arith.constant 1 : i32
    %49 = arith.cmpi eq, %arg1, %c1_i32_13 : i32
    %50 = vector.broadcast %49 : i1 to vector<320x1xi1>
    %51 = arith.andi %48, %50 : vector<320x1xi1>
    %52 = arith.ori %46, %51 : vector<320x1xi1>
    %c0_14 = arith.constant 0 : index
    %c0_15 = arith.constant 0 : index
    %53 = vector.load %arg4[%c0_14, %c0_15] : memref<320x1xf32, #tpu.memory_space<vmem>>, vector<320x1xf32>
    %cst_16 = arith.constant 0.000000e+00 : f32
    %54 = vector.broadcast %cst_16 : f32 to vector<320x1xf32>
    %55 = arith.select %52, %54, %53 : vector<320x1xi1>, vector<320x1xf32>
    %56 = vector.broadcast %55 : vector<320x1xf32> to vector<320x4xf32>
    %57 = arith.mulf %40, %56 : vector<320x4xf32>
    %c1_i32_17 = arith.constant 1 : i32
    %58 = tpu.dynamic_rotate %57 by %c1_i32_17 dim 0 : vector<320x4xf32>, i32 -> vector<320x4xf32>
    %c319_i32 = arith.constant 319 : i32
    %59 = tpu.dynamic_rotate %57 by %c319_i32 dim 0 : vector<320x4xf32>, i32 -> vector<320x4xf32>
    %60 = vector.extract_strided_slice %58 {offsets = [0, 0], sizes = [256, 4], strides = [1, 1]} : vector<320x4xf32> to vector<256x4xf32>
    %61 = arith.truncf %60 : vector<256x4xf32> to vector<256x4xbf16>
    %62 = vector.extract_strided_slice %57 {offsets = [0, 0], sizes = [256, 4], strides = [1, 1]} : vector<320x4xf32> to vector<256x4xf32>
    %63 = arith.truncf %62 : vector<256x4xf32> to vector<256x4xbf16>
    %64 = vector.extract_strided_slice %59 {offsets = [0, 0], sizes = [256, 4], strides = [1, 1]} : vector<320x4xf32> to vector<256x4xf32>
    %65 = arith.truncf %64 : vector<256x4xf32> to vector<256x4xbf16>
    %66 = vector.extract_strided_slice %58 {offsets = [32, 0], sizes = [256, 4], strides = [1, 1]} : vector<320x4xf32> to vector<256x4xf32>
    %67 = arith.truncf %66 : vector<256x4xf32> to vector<256x4xbf16>
    %68 = vector.extract_strided_slice %57 {offsets = [32, 0], sizes = [256, 4], strides = [1, 1]} : vector<320x4xf32> to vector<256x4xf32>
    %69 = arith.truncf %68 : vector<256x4xf32> to vector<256x4xbf16>
    %70 = vector.extract_strided_slice %59 {offsets = [32, 0], sizes = [256, 4], strides = [1, 1]} : vector<320x4xf32> to vector<256x4xf32>
    %71 = arith.truncf %70 : vector<256x4xf32> to vector<256x4xbf16>
    %72 = vector.extract_strided_slice %58 {offsets = [64, 0], sizes = [256, 4], strides = [1, 1]} : vector<320x4xf32> to vector<256x4xf32>
    %73 = arith.truncf %72 : vector<256x4xf32> to vector<256x4xbf16>
    %74 = vector.extract_strided_slice %57 {offsets = [64, 0], sizes = [256, 4], strides = [1, 1]} : vector<320x4xf32> to vector<256x4xf32>
    %75 = arith.truncf %74 : vector<256x4xf32> to vector<256x4xbf16>
    %76 = vector.extract_strided_slice %59 {offsets = [64, 0], sizes = [256, 4], strides = [1, 1]} : vector<320x4xf32> to vector<256x4xf32>
    %77 = arith.truncf %76 : vector<256x4xf32> to vector<256x4xbf16>
    %78 = tpu.concatenate %61, %63, %65, %67, %69, %71, %73, %75, %77 in 1 : vector<256x4xbf16>, vector<256x4xbf16>, vector<256x4xbf16>, vector<256x4xbf16>, vector<256x4xbf16>, vector<256x4xbf16>, vector<256x4xbf16>, vector<256x4xbf16>, vector<256x4xbf16> -> vector<256x36xbf16>
    %c0_18 = arith.constant 0 : index
    %c0_19 = arith.constant 0 : index
    %79 = vector.load %arg6[%c0_18, %c0_19] : memref<36x4xbf16, #tpu.memory_space<vmem>>, vector<36x4xbf16>
    %cst_20 = arith.constant dense<0.000000e+00> : vector<256x4xf32>
    %80 = tpu.matmul %78, %79, %cst_20 {dimension_numbers = #tpu.dot_dimension_numbers<[1], [0], [0], [1], [0, 0, 1, 1], [], []>} : vector<256x36xbf16>, vector<36x4xbf16>, vector<256x4xf32> -> vector<256x4xf32>
    %c0_21 = arith.constant 0 : index
    %c0_22 = arith.constant 0 : index
    %81 = vector.load %arg9[%c0_21, %c0_22] : memref<1x4xf32, #tpu.memory_space<vmem>>, vector<1x4xf32>
    %82 = vector.shape_cast %81 : vector<1x4xf32> to vector<4xf32>
    %83 = vector.shape_cast %82 : vector<4xf32> to vector<1x4xf32>
    %84 = vector.broadcast %83 : vector<1x4xf32> to vector<256x4xf32>
    %85 = arith.mulf %80, %84 : vector<256x4xf32>
    %c0_23 = arith.constant 0 : index
    %c0_24 = arith.constant 0 : index
    %86 = vector.load %arg10[%c0_23, %c0_24] : memref<1x4xf32, #tpu.memory_space<vmem>>, vector<1x4xf32>
    %87 = vector.shape_cast %86 : vector<1x4xf32> to vector<4xf32>
    %88 = vector.shape_cast %87 : vector<4xf32> to vector<1x4xf32>
    %89 = vector.broadcast %88 : vector<1x4xf32> to vector<256x4xf32>
    %90 = arith.addf %85, %89 : vector<256x4xf32>
    %91 = vector.extract_strided_slice %5 {offsets = [64, 0], sizes = [256, 4], strides = [1, 1]} : vector<384x4xf32> to vector<256x4xf32>
    %92 = arith.addf %91, %90 : vector<256x4xf32>
    %cst_25 = arith.constant 0.000000e+00 : f32
    %93 = vector.broadcast %cst_25 : f32 to vector<256x4xf32>
    %94 = arith.maximumf %92, %93 : vector<256x4xf32>
    %c0_26 = arith.constant 0 : index
    %c0_27 = arith.constant 0 : index
    %c0_28 = arith.constant 0 : index
    %95 = vector.load %arg11[%c0_26, %c0_27, %c0_28] : memref<1x256x4xf32, #tpu.memory_space<vmem>>, vector<1x256x4xf32>
    %96 = vector.shape_cast %95 : vector<1x256x4xf32> to vector<256x4xf32>
    %97 = vector.shape_cast %94 : vector<256x4xf32> to vector<1x256x4xf32>
    tpu.vector_store %arg11[%c0_26, %c0_27, %c0_28], %97 {strides = array<i32>} : memref<1x256x4xf32, #tpu.memory_space<vmem>>, vector<1x256x4xf32>,
    return
  }
  func.func @transform_0(%arg0: i32, %arg1: i32) -> (i32, i32, i32) {
    %c0_i32 = arith.constant 0 : i32
    %c0_i32_0 = arith.constant 0 : i32
    return %arg0, %arg1, %c0_i32 : i32, i32, i32
  }
  func.func @transform_1(%arg0: i32, %arg1: i32) -> (i32, i32, i32, i32) {
    %c0_i32 = arith.constant 0 : i32
    %c0_i32_0 = arith.constant 0 : i32
    %c0_i32_1 = arith.constant 0 : i32
    return %arg0, %arg1, %c0_i32, %c0_i32_0 : i32, i32, i32, i32
  }
  func.func @transform_2(%arg0: i32, %arg1: i32) -> (i32, i32) {
    %c0_i32 = arith.constant 0 : i32
    %c0_i32_0 = arith.constant 0 : i32
    %c0_i32_1 = arith.constant 0 : i32
    return %c0_i32, %c0_i32_0 : i32, i32
  }
  func.func @transform_3(%arg0: i32, %arg1: i32) -> (i32, i32) {
    %c0_i32 = arith.constant 0 : i32
    %c0_i32_0 = arith.constant 0 : i32
    %c0_i32_1 = arith.constant 0 : i32
    return %c0_i32, %c0_i32_0 : i32, i32
  }
  func.func @transform_4(%arg0: i32, %arg1: i32) -> (i32, i32) {
    %c0_i32 = arith.constant 0 : i32
    %c0_i32_0 = arith.constant 0 : i32
    %c0_i32_1 = arith.constant 0 : i32
    return %c0_i32, %c0_i32_0 : i32, i32
  }
  func.func @transform_5(%arg0: i32, %arg1: i32) -> (i32, i32) {
    %c0_i32 = arith.constant 0 : i32
    %c0_i32_0 = arith.constant 0 : i32
    %c0_i32_1 = arith.constant 0 : i32
    return %c0_i32, %c0_i32_0 : i32, i32
  }
  func.func @transform_6(%arg0: i32, %arg1: i32) -> (i32, i32) {
    %c0_i32 = arith.constant 0 : i32
    %c0_i32_0 = arith.constant 0 : i32
    %c0_i32_1 = arith.constant 0 : i32
    return %c0_i32, %c0_i32_0 : i32, i32
  }
  func.func @transform_7(%arg0: i32, %arg1: i32) -> (i32, i32) {
    %c0_i32 = arith.constant 0 : i32
    %c0_i32_0 = arith.constant 0 : i32
    %c0_i32_1 = arith.constant 0 : i32
    return %c0_i32, %c0_i32_0 : i32, i32
  }
  func.func @transform_8(%arg0: i32, %arg1: i32) -> (i32, i32) {
    %c0_i32 = arith.constant 0 : i32
    %c0_i32_0 = arith.constant 0 : i32
    %c0_i32_1 = arith.constant 0 : i32
    return %c0_i32, %c0_i32_0 : i32, i32
  }
  func.func @transform_9(%arg0: i32, %arg1: i32) -> (i32, i32, i32) {
    %c0_i32 = arith.constant 0 : i32
    %c0_i32_0 = arith.constant 0 : i32
    return %arg0, %arg1, %c0_i32 : i32, i32, i32
  }
}

</mosaic_0001>

<llo_original>
// kernel: tpu_custom_call.1
$region0: #{tpu_custom_call.1}
  #allocation0 [shape = 'u32[]', space=smem, size = 0x4, offset = 0x4, fixed_abs, tag = 'smem constant byte address 0x4 - core index']
  #allocation1 [shape = 'u32[144,128]{1,0:T(1,128)}', space=vmem, size = 0x12000, scoped, tag = 'internal scratch']
  %s0 = inlined_call_operand.vmem [shape: bf16[2,640,4], index: 0, kind: input, shape index: {}]
  %s1 = inlined_call_operand.vmem [shape: bf16[2,2,128,4], index: 1, kind: input, shape index: {}]
  %s2 = inlined_call_operand.vmem [shape: f32[320,1], index: 2, kind: input, shape index: {}]
  %s3 = inlined_call_operand.vmem [shape: bf16[36,4], index: 3, kind: input, shape index: {}]
  %s4 = inlined_call_operand.vmem [shape: bf16[36,4], index: 4, kind: input, shape index: {}]
  %s5 = inlined_call_operand.vmem [shape: f32[1,4], index: 5, kind: input, shape index: {}]
  %s6 = inlined_call_operand.vmem [shape: f32[1,4], index: 6, kind: input, shape index: {}]
  %s7 = inlined_call_operand.vmem [shape: f32[1,4], index: 7, kind: input, shape index: {}]
  %s8 = inlined_call_operand.vmem [shape: f32[1,4], index: 8, kind: input, shape index: {}]
  %s9 = inlined_call_operand.vmem [shape: f32[2,512,4], index: 9, kind: output, shape index: {}]
  %s10 = sld [smem:[#allocation0]]
  $region69: #{tpu_custom_call.1} parent=0
    _
  %s12 = ssub.s32 1, %s10
  %s13 = scalar_select 0, %s12, %s10
  loop: start=0, step=1, limit=6
  $region2: #{tpu_custom_call.1} parent=0 // loop_pre_header
    _
  $region3: #{tpu_custom_call.1} parent=0 // loop_header
    %s15 = sphi 0, %s19
    %p16 = scmp.ge.s32.totalorder %s15, 6
    %s22 = sphi 0, %s34
    %s23 = sphi 0, %s30
    %s24 = sphi 0, %s22
    %s25 = sphi 0, %s23
    %s26 = sphi 0, %s24
    %s27 = sphi 0, %s25
    %s39 = sphi 0, %s41
    %s42 = sphi 0, %s39
    %s43 = sphi 0, %s42
    %s59 = sphi 0, %s43
    %s67 = sphi 0, %s69
    %s70 = sphi 0, %s67
    %s71 = sphi 0, %s70
    %s87 = sphi 0, %s71
    %s91 = sphi 0, %s91
    %s93 = sphi 0, %s91
    %s94 = sphi 0, %s93
    %s108 = sphi 0, %s94
    %s112 = sphi 0, %s112
    %s114 = sphi 0, %s112
    %s115 = sphi 0, %s114
    %s129 = sphi 0, %s115
    %s133 = sphi 0, %s133
    %s135 = sphi 0, %s133
    %s136 = sphi 0, %s135
    %s150 = sphi 0, %s136
    %s154 = sphi 0, %s154
    %s156 = sphi 0, %s154
    %s157 = sphi 0, %s156
    %s171 = sphi 0, %s157
    %s175 = sphi 0, %s175
    %s177 = sphi 0, %s175
    %s178 = sphi 0, %s177
    %s192 = sphi 0, %s178
    %s196 = sphi 0, %s196
    %s198 = sphi 0, %s196
    %s199 = sphi 0, %s198
    %s213 = sphi 0, %s199
    %s217 = sphi 0, %s217
    %s219 = sphi 0, %s217
    %s220 = sphi 0, %s219
    %s234 = sphi 0, %s220
    %s242 = sphi 0, %s244
    %s245 = sphi 0, %s242
    %s246 = sphi 0, %s245
    %s262 = sphi 0, %s246
  $region4: #{tpu_custom_call.1} parent=0 // loop_header_branch
    %18 = sbr.rel (%p16) target = $region8
  $region5: #{tpu_custom_call.1} parent=0 // loop_body
    %s20 = ssub.s32 %s15, 1
    %s21 = ssub.s32 %s15, 2
    %s28 = sadd.s32 1, %s23
    %p29 = scmp.ge.s32.totalorder %s28, 2
    %s30 = scalar_select %p29, 0, %s28
    %s31 = sadd.s32 1, %s22
    %s32 = scalar_select %p29, %s31, %s22
    %p33 = scmp.ge.s32.totalorder %s32, 2
    %s34 = scalar_select %p33, 0, %s32
    %s35 = ssub.s32 %s22, %s34
    %s36 = ssub.s32 %s23, %s30
    %s37 = sor.u32 %s35, %s36
    %p38 = scmp.eq.s32.totalorder %s37, 0
    %s40 = sadd.s32 %s39, 1
    %s41 = scalar_select %p38, %s39, %s40
    %p44 = pneg %p38
    %p45 = scmp.eq.s32.totalorder %s15, 3
    %p46 = por %p44, %p45
    %p47 = scmp.ne.s32.totalorder %s39, %s42
    %p48 = scmp.eq.s32.totalorder %s15, 0
    %p49 = por %p47, %p48
    %p50 = scmp.ne.s32.totalorder %s39, %s42
    %p51 = scmp.eq.s32.totalorder %s20, 3
    %p52 = por %p50, %p51
    %p53 = scmp.ne.s32.totalorder %s42, %s43
    %p54 = scmp.eq.s32.totalorder %s20, 0
    %p55 = por %p53, %p54
    %p56 = scmp.ne.s32.totalorder %s42, %s43
    %p57 = scmp.eq.s32.totalorder %s21, 3
    %p58 = por %p56, %p57
    %p60 = scmp.ne.s32.totalorder %s43, %s59
    %p61 = scmp.eq.s32.totalorder %s21, 0
    %p62 = por %p60, %p61
    %s63 = ssub.s32 %s22, %s34
    %s64 = ssub.s32 %s23, %s30
    %s65 = sor.u32 %s63, %s64
    %p66 = scmp.eq.s32.totalorder %s65, 0
    %s68 = sadd.s32 %s67, 1
    %s69 = scalar_select %p66, %s67, %s68
    %p72 = pneg %p66
    %p73 = scmp.eq.s32.totalorder %s15, 3
    %p74 = por %p72, %p73
    %p75 = scmp.ne.s32.totalorder %s67, %s70
    %p76 = scmp.eq.s32.totalorder %s15, 0
    %p77 = por %p75, %p76
    %p78 = scmp.ne.s32.totalorder %s67, %s70
    %p79 = scmp.eq.s32.totalorder %s20, 3
    %p80 = por %p78, %p79
    %p81 = scmp.ne.s32.totalorder %s70, %s71
    %p82 = scmp.eq.s32.totalorder %s20, 0
    %p83 = por %p81, %p82
    %p84 = scmp.ne.s32.totalorder %s70, %s71
    %p85 = scmp.eq.s32.totalorder %s21, 3
    %p86 = por %p84, %p85
    %p88 = scmp.ne.s32.totalorder %s71, %s87
    %p89 = scmp.eq.s32.totalorder %s21, 0
    %p90 = por %p88, %p89
    %s92 = sadd.s32 %s91, 1
    %p95 = scmp.eq.s32.totalorder %s15, 3
    %p96 = scmp.ne.s32.totalorder %s91, %s93
    %p97 = scmp.eq.s32.totalorder %s15, 0
    %p98 = por %p96, %p97
    %p99 = scmp.ne.s32.totalorder %s91, %s93
    %p100 = scmp.eq.s32.totalorder %s20, 3
    %p101 = por %p99, %p100
    %p102 = scmp.ne.s32.totalorder %s93, %s94
    %p103 = scmp.eq.s32.totalorder %s20, 0
    %p104 = por %p102, %p103
    %p105 = scmp.ne.s32.totalorder %s93, %s94
    %p106 = scmp.eq.s32.totalorder %s21, 3
    %p107 = por %p105, %p106
    %p109 = scmp.ne.s32.totalorder %s94, %s108
    %p110 = scmp.eq.s32.totalorder %s21, 0
    %p111 = por %p109, %p110
    %s113 = sadd.s32 %s112, 1
    %p116 = scmp.eq.s32.totalorder %s15, 3
    %p117 = scmp.ne.s32.totalorder %s112, %s114
    %p118 = scmp.eq.s32.totalorder %s15, 0
    %p119 = por %p117, %p118
    %p120 = scmp.ne.s32.totalorder %s112, %s114
    %p121 = scmp.eq.s32.totalorder %s20, 3
    %p122 = por %p120, %p121
    %p123 = scmp.ne.s32.totalorder %s114, %s115
    %p124 = scmp.eq.s32.totalorder %s20, 0
    %p125 = por %p123, %p124
    %p126 = scmp.ne.s32.totalorder %s114, %s115
    %p127 = scmp.eq.s32.totalorder %s21, 3
    %p128 = por %p126, %p127
    %p130 = scmp.ne.s32.totalorder %s115, %s129
    %p131 = scmp.eq.s32.totalorder %s21, 0
    %p132 = por %p130, %p131
    %s134 = sadd.s32 %s133, 1
    %p137 = scmp.eq.s32.totalorder %s15, 3
    %p138 = scmp.ne.s32.totalorder %s133, %s135
    %p139 = scmp.eq.s32.totalorder %s15, 0
    %p140 = por %p138, %p139
    %p141 = scmp.ne.s32.totalorder %s133, %s135
    %p142 = scmp.eq.s32.totalorder %s20, 3
    %p143 = por %p141, %p142
    %p144 = scmp.ne.s32.totalorder %s135, %s136
    %p145 = scmp.eq.s32.totalorder %s20, 0
    %p146 = por %p144, %p145
    %p147 = scmp.ne.s32.totalorder %s135, %s136
    %p148 = scmp.eq.s32.totalorder %s21, 3
    %p149 = por %p147, %p148
    %p151 = scmp.ne.s32.totalorder %s136, %s150
    %p152 = scmp.eq.s32.totalorder %s21, 0
    %p153 = por %p151, %p152
    %s155 = sadd.s32 %s154, 1
    %p158 = scmp.eq.s32.totalorder %s15, 3
    %p159 = scmp.ne.s32.totalorder %s154, %s156
    %p160 = scmp.eq.s32.totalorder %s15, 0
    %p161 = por %p159, %p160
    %p162 = scmp.ne.s32.totalorder %s154, %s156
    %p163 = scmp.eq.s32.totalorder %s20, 3
    %p164 = por %p162, %p163
    %p165 = scmp.ne.s32.totalorder %s156, %s157
    %p166 = scmp.eq.s32.totalorder %s20, 0
    %p167 = por %p165, %p166
    %p168 = scmp.ne.s32.totalorder %s156, %s157
    %p169 = scmp.eq.s32.totalorder %s21, 3
    %p170 = por %p168, %p169
    %p172 = scmp.ne.s32.totalorder %s157, %s171
    %p173 = scmp.eq.s32.totalorder %s21, 0
    %p174 = por %p172, %p173
    %s176 = sadd.s32 %s175, 1
    %p179 = scmp.eq.s32.totalorder %s15, 3
    %p180 = scmp.ne.s32.totalorder %s175, %s177
    %p181 = scmp.eq.s32.totalorder %s15, 0
    %p182 = por %p180, %p181
    %p183 = scmp.ne.s32.totalorder %s175, %s177
    %p184 = scmp.eq.s32.totalorder %s20, 3
    %p185 = por %p183, %p184
    %p186 = scmp.ne.s32.totalorder %s177, %s178
    %p187 = scmp.eq.s32.totalorder %s20, 0
    %p188 = por %p186, %p187
    %p189 = scmp.ne.s32.totalorder %s177, %s178
    %p190 = scmp.eq.s32.totalorder %s21, 3
    %p191 = por %p189, %p190
    %p193 = scmp.ne.s32.totalorder %s178, %s192
    %p194 = scmp.eq.s32.totalorder %s21, 0
    %p195 = por %p193, %p194
    %s197 = sadd.s32 %s196, 1
    %p200 = scmp.eq.s32.totalorder %s15, 3
    %p201 = scmp.ne.s32.totalorder %s196, %s198
    %p202 = scmp.eq.s32.totalorder %s15, 0
    %p203 = por %p201, %p202
    %p204 = scmp.ne.s32.totalorder %s196, %s198
    %p205 = scmp.eq.s32.totalorder %s20, 3
    %p206 = por %p204, %p205
    %p207 = scmp.ne.s32.totalorder %s198, %s199
    %p208 = scmp.eq.s32.totalorder %s20, 0
    %p209 = por %p207, %p208
    %p210 = scmp.ne.s32.totalorder %s198, %s199
    %p211 = scmp.eq.s32.totalorder %s21, 3
    %p212 = por %p210, %p211
    %p214 = scmp.ne.s32.totalorder %s199, %s213
    %p215 = scmp.eq.s32.totalorder %s21, 0
    %p216 = por %p214, %p215
    %s218 = sadd.s32 %s217, 1
    %p221 = scmp.eq.s32.totalorder %s15, 3
    %p222 = scmp.ne.s32.totalorder %s217, %s219
    %p223 = scmp.eq.s32.totalorder %s15, 0
    %p224 = por %p222, %p223
    %p225 = scmp.ne.s32.totalorder %s217, %s219
    %p226 = scmp.eq.s32.totalorder %s20, 3
    %p227 = por %p225, %p226
    %p228 = scmp.ne.s32.totalorder %s219, %s220
    %p229 = scmp.eq.s32.totalorder %s20, 0
    %p230 = por %p228, %p229
    %p231 = scmp.ne.s32.totalorder %s219, %s220
    %p232 = scmp.eq.s32.totalorder %s21, 3
    %p233 = por %p231, %p232
    %p235 = scmp.ne.s32.totalorder %s220, %s234
    %p236 = scmp.eq.s32.totalorder %s21, 0
    %p237 = por %p235, %p236
    %s238 = ssub.s32 %s22, %s34
    %s239 = ssub.s32 %s23, %s30
    %s240 = sor.u32 %s238, %s239
    %p241 = scmp.eq.s32.totalorder %s240, 0
    %s243 = sadd.s32 %s242, 1
    %s244 = scalar_select %p241, %s242, %s243
    %p247 = pneg %p241
    %p248 = scmp.eq.s32.totalorder %s15, 3
    %p249 = por %p247, %p248
    %p250 = scmp.ne.s32.totalorder %s242, %s245
    %p251 = scmp.eq.s32.totalorder %s15, 0
    %p252 = por %p250, %p251
    %p253 = scmp.ne.s32.totalorder %s242, %s245
    %p254 = scmp.eq.s32.totalorder %s20, 3
    %p255 = por %p253, %p254
    %p256 = scmp.ne.s32.totalorder %s245, %s246
    %p257 = scmp.eq.s32.totalorder %s20, 0
    %p258 = por %p256, %p257
    %p259 = scmp.ne.s32.totalorder %s245, %s246
    %p260 = scmp.eq.s32.totalorder %s21, 3
    %p261 = por %p259, %p260
    %p263 = scmp.ne.s32.totalorder %s246, %s262
    %p264 = scmp.eq.s32.totalorder %s21, 0
    %p265 = por %p263, %p264
    %p266 = scmp.le.s32.totalorder 1, %s15
    %p267 = scmp.lt.s32.totalorder %s15, 5
    %p268 = pnand %p266, %p267
    %p269 = pneg %p268
    // Predicated region
    $region9: #{tpu_custom_call.1} parent=5 // pred_check
      _
    $region10: #{tpu_custom_call.1} parent=5 // pred_check_branch
      %271 = sbr.rel (%p268) target = $region12
    $region11: #{tpu_custom_call.1} parent=5 // pred_region
      %s272 = ssub.s32 %s15, 1
      // Predicated region
      $region13: #{tpu_custom_call.1} parent=11 // pred_check
        %p273 = pneg %p104
      $region14: #{tpu_custom_call.1} parent=11 // pred_check_branch
        %275 = sbr.rel (%p273) target = $region16
      $region15: #{tpu_custom_call.1} parent=11 // pred_region
        _
      $region16: #{tpu_custom_call.1} parent=11 // pred_fallthru
        _
      // Predicated region
      $region17: #{tpu_custom_call.1} parent=11 // pred_check
        %p276 = pneg %p125
      $region18: #{tpu_custom_call.1} parent=11 // pred_check_branch
        %278 = sbr.rel (%p276) target = $region20
      $region19: #{tpu_custom_call.1} parent=11 // pred_region
        _
      $region20: #{tpu_custom_call.1} parent=11 // pred_fallthru
        _
      // Predicated region
      $region21: #{tpu_custom_call.1} parent=11 // pred_check
        %p279 = pneg %p146
      $region22: #{tpu_custom_call.1} parent=11 // pred_check_branch
        %281 = sbr.rel (%p279) target = $region24
      $region23: #{tpu_custom_call.1} parent=11 // pred_region
        _
      $region24: #{tpu_custom_call.1} parent=11 // pred_fallthru
        _
      // Predicated region
      $region25: #{tpu_custom_call.1} parent=11 // pred_check
        %p282 = pneg %p167
      $region26: #{tpu_custom_call.1} parent=11 // pred_check_branch
        %284 = sbr.rel (%p282) target = $region28
      $region27: #{tpu_custom_call.1} parent=11 // pred_region
        _
      $region28: #{tpu_custom_call.1} parent=11 // pred_fallthru
        _
      // Predicated region
      $region29: #{tpu_custom_call.1} parent=11 // pred_check
        %p285 = pneg %p188
      $region30: #{tpu_custom_call.1} parent=11 // pred_check_branch
        %287 = sbr.rel (%p285) target = $region32
      $region31: #{tpu_custom_call.1} parent=11 // pred_region
        _
      $region32: #{tpu_custom_call.1} parent=11 // pred_fallthru
        _
      // Predicated region
      $region33: #{tpu_custom_call.1} parent=11 // pred_check
        %p288 = pneg %p209
      $region34: #{tpu_custom_call.1} parent=11 // pred_check_branch
        %290 = sbr.rel (%p288) target = $region36
      $region35: #{tpu_custom_call.1} parent=11 // pred_region
        _
      $region36: #{tpu_custom_call.1} parent=11 // pred_fallthru
        _
      // Predicated region
      $region37: #{tpu_custom_call.1} parent=11 // pred_check
        %p291 = pneg %p230
      $region38: #{tpu_custom_call.1} parent=11 // pred_check_branch
        %293 = sbr.rel (%p291) target = $region40
      $region39: #{tpu_custom_call.1} parent=11 // pred_region
        _
      $region40: #{tpu_custom_call.1} parent=11 // pred_fallthru
        _
    $region12: #{tpu_custom_call.1} parent=5 // pred_fallthru
      _
    %p294 = scmp.lt.s32.totalorder %s15, 4
    // Predicated region
    $region41: #{tpu_custom_call.1} parent=5 // pred_check
      %p295 = pneg %p294
    $region42: #{tpu_custom_call.1} parent=5 // pred_check_branch
      %297 = sbr.rel (%p295) target = $region44
    $region43: #{tpu_custom_call.1} parent=5 // pred_region
      // Predicated region
      $region45: #{tpu_custom_call.1} parent=43 // pred_check
        %p298 = pneg %p49
      $region46: #{tpu_custom_call.1} parent=43 // pred_check_branch
        %300 = sbr.rel (%p298) target = $region48
      $region47: #{tpu_custom_call.1} parent=43 // pred_region
        %s301 = smul.u32 32, %s23
        %s302 = ssub.s32 80, %s301
        %p303 = scmp.lt.s32.totalorder %s302, 32
        %s304 = scalar_select %p303, %s302, 32
        %s305 = smul.u32 64, %s304
        %p306 = scmp.lt.s32.totalorder %s22, 1
        %s307 = scalar_select %p306, %s22, 1
        %p308 = scmp.lt.s32.totalorder %s301, 79
        %s309 = scalar_select %p308, %s301, 79
        %s310 = smul.addr %s307, 80
        %s311 = sadd.s32 %s309, %s310
        %s312 = smul.addr %s311, 4
        %s313 = scalar_lea.vmem %s0, %s312
        %s314 = smul.u32 32, %s23
        %s315 = ssub.s32 80, %s314
        %p316 = scmp.lt.s32.totalorder %s315, 32
        %s317 = scalar_select %p316, %s315, 32
        %s318 = smul.u32 64, %s317
      $region48: #{tpu_custom_call.1} parent=43 // pred_fallthru
        _
      // Predicated region
      $region49: #{tpu_custom_call.1} parent=43 // pred_check
        %p319 = pneg %p77
      $region50: #{tpu_custom_call.1} parent=43 // pred_check_branch
        %321 = sbr.rel (%p319) target = $region52
      $region51: #{tpu_custom_call.1} parent=43 // pred_region
        %p322 = scmp.lt.s32.totalorder %s22, 1
        %s323 = scalar_select %p322, %s22, 1
        %p324 = scmp.lt.s32.totalorder %s23, 1
        %s325 = scalar_select %p324, %s23, 1
        %s326 = smul.addr %s325, 16
        %s327 = smul.addr %s323, 32
        %s328 = sadd.s32 %s326, %s327
        %s329 = smul.addr %s328, 4
        %s330 = scalar_lea.vmem %s1, %s329
      $region52: #{tpu_custom_call.1} parent=43 // pred_fallthru
        _
    $region44: #{tpu_custom_call.1} parent=5 // pred_fallthru
      _
    %p331 = scmp.le.s32.totalorder 1, %s15
    %p332 = scmp.lt.s32.totalorder %s15, 5
    %p333 = pnand %p331, %p332
    %p334 = pneg %p333
    // Predicated region
    $region53: #{tpu_custom_call.1} parent=5 // pred_check
      _
    $region54: #{tpu_custom_call.1} parent=5 // pred_check_branch
      %336 = sbr.rel (%p333) target = $region56
    $region55: #{tpu_custom_call.1} parent=5 // pred_region
      %s337 = ssub.s32 %s15, 1
      %s338 = smul.u32 32, %s25
      %s339 = ssub.s32 80, %s338
      %p340 = scmp.lt.s32.totalorder %s339, 32
      %s341 = scalar_select %p340, %s339, 32
      %s342 = smul.u32 64, %s341
      %p343 = scmp.lt.s32.totalorder %s24, 1
      %s344 = scalar_select %p343, %s24, 1
      %p345 = scmp.lt.s32.totalorder %s338, 79
      %s346 = scalar_select %p345, %s338, 79
      %s347 = smul.addr %s344, 80
      %s348 = sadd.s32 %s346, %s347
      %s349 = smul.addr %s348, 4
      %s350 = scalar_lea.vmem %s0, %s349
      %p351 = pneg %p55
      %p352 = pneg %p52
      %p353 = scmp.lt.s32.totalorder %s24, 1
      %s354 = scalar_select %p353, %s24, 1
      %p355 = scmp.lt.s32.totalorder %s25, 1
      %s356 = scalar_select %p355, %s25, 1
      %s357 = smul.addr %s356, 16
      %s358 = smul.addr %s354, 32
      %s359 = sadd.s32 %s357, %s358
      %s360 = smul.addr %s359, 4
      %s361 = scalar_lea.vmem %s1, %s360
      %p362 = pneg %p83
      %p363 = pneg %p80
      %p364 = pneg %p104
      %p365 = pneg %p101
      %p366 = pneg %p125
      %p367 = pneg %p122
      %p368 = pneg %p146
      %p369 = pneg %p143
      %p370 = pneg %p167
      %p371 = pneg %p164
      %p372 = pneg %p188
      %p373 = pneg %p185
      %p374 = pneg %p209
      %p375 = pneg %p206
      %p376 = pneg %p230
      %p377 = pneg %p227
      %p378 = pneg %p258
      %p379 = pneg %p255
      %s380 = smul.u32 32, %s25
      %p381 = scmp.lt.s32.totalorder %s24, 1
      %s382 = scalar_select %p381, %s24, 1
      %p383 = scmp.lt.s32.totalorder %s380, 63
      %s384 = scalar_select %p383, %s380, 63
      %s385 = smul.addr %s382, 64
      %s386 = sadd.s32 %s384, %s385
      %s387 = smul.addr %s386, 8
      %s388 = scalar_lea.vmem %s9, %s387
      %s389 = smul.u32 32, %s25
      %s390 = ssub.s32 80, %s389
      %p391 = scmp.lt.s32.totalorder %s390, 32
      %s392 = scalar_select %p391, %s390, 32
      %s393 = smul.u32 64, %s392
      %p394 = scmp.lt.s32.totalorder %s24, 1
      %s395 = scalar_select %p394, %s24, 1
      %p396 = scmp.lt.s32.totalorder %s389, 79
      %s397 = scalar_select %p396, %s389, 79
      %s398 = smul.addr %s395, 80
      %s399 = sadd.s32 %s397, %s398
      %s400 = smul.addr %s399, 4
      %s401 = scalar_lea.vmem %s0, %s400
      %s402 = smul.u32 32, %s25
      %s403 = ssub.s32 80, %s402
      %p404 = scmp.lt.s32.totalorder %s403, 32
      %s405 = scalar_select %p404, %s403, 32
      %s406 = smul.u32 64, %s405
      %p407 = scmp.lt.s32.totalorder %s24, 1
      %s408 = scalar_select %p407, %s24, 1
      %p409 = scmp.lt.s32.totalorder %s25, 1
      %s410 = scalar_select %p409, %s25, 1
      %s411 = smul.addr %s410, 16
      %s412 = smul.addr %s408, 32
      %s413 = sadd.s32 %s411, %s412
      %s414 = smul.addr %s413, 4
      %s415 = scalar_lea.vmem %s1, %s414
      %s416 = smul.u32 32, %s25
      %p417 = scmp.lt.s32.totalorder %s24, 1
      %s418 = scalar_select %p417, %s24, 1
      %p419 = scmp.lt.s32.totalorder %s416, 63
      %s420 = scalar_select %p419, %s416, 63
      %s421 = smul.addr %s418, 64
      %s422 = sadd.s32 %s420, %s421
      %s423 = smul.addr %s422, 8
      %s424 = scalar_lea.vmem %s9, %s423
      %s425 = smul.u32 32, %s25
      %v427 = vld [vmem:[%s401] sm:$0xf]
      %v428 = vld [vmem:[%s401 + $0x4] sm:$0xf]
      %v429 = vld [vmem:[%s401 + $0x8] sm:$0xf]
      %v430 = vld [vmem:[%s401 + $0xc] sm:$0xf]
      %v431 = vld [vmem:[%s401 + $0x10] sm:$0xf]
      %v432 = vld [vmem:[%s401 + $0x14] sm:$0xf]
      %v433 = vld [vmem:[%s401 + $0x18] sm:$0xf]
      %v434 = vld [vmem:[%s401 + $0x1c] sm:$0xf]
      %v435 = vld [vmem:[%s401 + $0x20] sm:$0xf]
      %v436 = vld [vmem:[%s401 + $0x24] sm:$0xf]
      %v437 = vld [vmem:[%s401 + $0x28] sm:$0xf]
      %v438 = vld [vmem:[%s401 + $0x2c] sm:$0xf]
      %v439 = vld [vmem:[%s401 + $0x30] sm:$0xf]
      %v440 = vld [vmem:[%s401 + $0x34] sm:$0xf]
      %v441 = vld [vmem:[%s401 + $0x38] sm:$0xf]
      %v442 = vld [vmem:[%s401 + $0x3c] sm:$0xf]
      %v443 = vld [vmem:[%s401 + $0x40] sm:$0xf]
      %v444 = vld [vmem:[%s401 + $0x44] sm:$0xf]
      %v445 = vld [vmem:[%s401 + $0x48] sm:$0xf]
      %v446 = vld [vmem:[%s401 + $0x4c] sm:$0xf]
      %v447 = vld [vmem:[%s401 + $0x50] sm:$0xf]
      %v448 = vld [vmem:[%s401 + $0x54] sm:$0xf]
      %v449 = vld [vmem:[%s401 + $0x58] sm:$0xf]
      %v450 = vld [vmem:[%s401 + $0x5c] sm:$0xf]
      %v451 = vld [vmem:[%s401 + $0x60] sm:$0xf]
      %v452 = vld [vmem:[%s401 + $0x64] sm:$0xf]
      %v453 = vld [vmem:[%s401 + $0x68] sm:$0xf]
      %v454 = vld [vmem:[%s401 + $0x6c] sm:$0xf]
      %v455 = vld [vmem:[%s401 + $0x70] sm:$0xf]
      %v456 = vld [vmem:[%s401 + $0x74] sm:$0xf]
      %v457 = vld [vmem:[%s401 + $0x78] sm:$0xf]
      %v458 = vld [vmem:[%s401 + $0x7c] sm:$0xf]
      %v459 = vld [vmem:[%s415] sm:$0xf]
      %v460 = vld [vmem:[%s415 + $0x4] sm:$0xf]
      %v461 = vld [vmem:[%s415 + $0x8] sm:$0xf]
      %v462 = vld [vmem:[%s415 + $0xc] sm:$0xf]
      %v463 = vld [vmem:[%s415 + $0x10] sm:$0xf]
      %v464 = vld [vmem:[%s415 + $0x14] sm:$0xf]
      %v465 = vld [vmem:[%s415 + $0x18] sm:$0xf]
      %v466 = vld [vmem:[%s415 + $0x1c] sm:$0xf]
      %v467 = vld [vmem:[%s415 + $0x20] sm:$0xf]
      %v468 = vld [vmem:[%s415 + $0x24] sm:$0xf]
      %v469 = vld [vmem:[%s415 + $0x28] sm:$0xf]
      %v470 = vld [vmem:[%s415 + $0x2c] sm:$0xf]
      %v471 = vld [vmem:[%s415 + $0x30] sm:$0xf]
      %v472 = vld [vmem:[%s415 + $0x34] sm:$0xf]
      %v473 = vld [vmem:[%s415 + $0x38] sm:$0xf]
      %v474 = vld [vmem:[%s415 + $0x3c] sm:$0xf]
      %v507 = vunpack.c.l.b16 %v427
      %v508 = vunpack.c.l.b16 %v428
      %v509 = vunpack.c.l.b16 %v429
      %v510 = vunpack.c.l.b16 %v430
      %v511 = vunpack.c.l.b16 %v431
      %v512 = vunpack.c.l.b16 %v432
      %v513 = vunpack.c.l.b16 %v433
      %v514 = vunpack.c.l.b16 %v434
      %v515 = vunpack.c.l.b16 %v435
      %v516 = vunpack.c.l.b16 %v436
      %v517 = vunpack.c.l.b16 %v437
      %v518 = vunpack.c.l.b16 %v438
      %v519 = vunpack.c.l.b16 %v439
      %v520 = vunpack.c.l.b16 %v440
      %v521 = vunpack.c.l.b16 %v441
      %v522 = vunpack.c.l.b16 %v442
      %v523 = vunpack.c.l.b16 %v443
      %v524 = vunpack.c.l.b16 %v444
      %v525 = vunpack.c.l.b16 %v445
      %v526 = vunpack.c.l.b16 %v446
      %v527 = vunpack.c.l.b16 %v447
      %v528 = vunpack.c.l.b16 %v448
      %v529 = vunpack.c.l.b16 %v449
      %v530 = vunpack.c.l.b16 %v450
      %v531 = vunpack.c.l.b16 %v451
      %v532 = vunpack.c.l.b16 %v452
      %v533 = vunpack.c.l.b16 %v453
      %v534 = vunpack.c.l.b16 %v454
      %v535 = vunpack.c.l.b16 %v455
      %v536 = vunpack.c.l.b16 %v456
      %v537 = vunpack.c.l.b16 %v457
      %v538 = vunpack.c.l.b16 %v458
      %v539 = vpack.c.b16 %v508, %v507
      %v540 = vpack.c.b16 %v510, %v509
      %v541 = vpack.c.b16 %v512, %v511
      %v542 = vpack.c.b16 %v514, %v513
      %v543 = vpack.c.b16 %v516, %v515
      %v544 = vpack.c.b16 %v518, %v517
      %v545 = vpack.c.b16 %v520, %v519
      %v546 = vpack.c.b16 %v522, %v521
      %v547 = vpack.c.b16 %v524, %v523
      %v548 = vpack.c.b16 %v526, %v525
      %v549 = vpack.c.b16 %v528, %v527
      %v550 = vpack.c.b16 %v530, %v529
      %v551 = vpack.c.b16 %v532, %v531
      %v552 = vpack.c.b16 %v534, %v533
      %v553 = vpack.c.b16 %v536, %v535
      %v554 = vpack.c.b16 %v538, %v537
      %v587 = vunpack.c.l.b16 %v459
      %v588 = vunpack.c.l.b16 %v460
      %v589 = vunpack.c.l.b16 %v461
      %v590 = vunpack.c.l.b16 %v462
      %v591 = vunpack.c.l.b16 %v463
      %v592 = vunpack.c.l.b16 %v464
      %v593 = vunpack.c.l.b16 %v465
      %v594 = vunpack.c.l.b16 %v466
      %v595 = vunpack.c.l.b16 %v467
      %v596 = vunpack.c.l.b16 %v468
      %v597 = vunpack.c.l.b16 %v469
      %v598 = vunpack.c.l.b16 %v470
      %v599 = vunpack.c.l.b16 %v471
      %v600 = vunpack.c.l.b16 %v472
      %v601 = vunpack.c.l.b16 %v473
      %v602 = vunpack.c.l.b16 %v474
      %v603 = vpack.c.b16 %v588, %v587
      %v604 = vpack.c.b16 %v590, %v589
      %v605 = vpack.c.b16 %v592, %v591
      %v606 = vpack.c.b16 %v594, %v593
      %v607 = vpack.c.b16 %v596, %v595
      %v608 = vpack.c.b16 %v598, %v597
      %v609 = vpack.c.b16 %v600, %v599
      %v610 = vpack.c.b16 %v602, %v601
      %v619 = vunpack.c.l.bf16 %v539
      %v620 = vunpack.c.h.bf16 %v539
      %v621 = vunpack.c.l.bf16 %v540
      %v622 = vunpack.c.h.bf16 %v540
      %v623 = vunpack.c.l.bf16 %v541
      %v624 = vunpack.c.h.bf16 %v541
      %v625 = vunpack.c.l.bf16 %v542
      %v626 = vunpack.c.h.bf16 %v542
      %v627 = vunpack.c.l.bf16 %v543
      %v628 = vunpack.c.h.bf16 %v543
      %v629 = vunpack.c.l.bf16 %v544
      %v630 = vunpack.c.h.bf16 %v544
      %v631 = vunpack.c.l.bf16 %v545
      %v632 = vunpack.c.h.bf16 %v545
      %v633 = vunpack.c.l.bf16 %v546
      %v634 = vunpack.c.h.bf16 %v546
      %v635 = vunpack.c.l.bf16 %v547
      %v636 = vunpack.c.h.bf16 %v547
      %v637 = vunpack.c.l.bf16 %v548
      %v638 = vunpack.c.h.bf16 %v548
      %v639 = vunpack.c.l.bf16 %v549
      %v640 = vunpack.c.h.bf16 %v549
      %v641 = vunpack.c.l.bf16 %v550
      %v642 = vunpack.c.h.bf16 %v550
      %v643 = vunpack.c.l.bf16 %v551
      %v644 = vunpack.c.h.bf16 %v551
      %v645 = vunpack.c.l.bf16 %v552
      %v646 = vunpack.c.h.bf16 %v552
      %v647 = vunpack.c.l.bf16 %v553
      %v648 = vunpack.c.h.bf16 %v553
      %v649 = vunpack.c.l.bf16 %v554
      %v650 = vunpack.c.h.bf16 %v554
      %v651 = vunpack.c.l.bf16 %v603
      %v652 = vunpack.c.h.bf16 %v603
      %v653 = vunpack.c.l.bf16 %v604
      %v654 = vunpack.c.h.bf16 %v604
      %v655 = vunpack.c.l.bf16 %v605
      %v656 = vunpack.c.h.bf16 %v605
      %v657 = vunpack.c.l.bf16 %v606
      %v658 = vunpack.c.h.bf16 %v606
      %v659 = vunpack.c.l.bf16 %v607
      %v660 = vunpack.c.h.bf16 %v607
      %v661 = vunpack.c.l.bf16 %v608
      %v662 = vunpack.c.h.bf16 %v608
      %v663 = vunpack.c.l.bf16 %v609
      %v664 = vunpack.c.h.bf16 %v609
      %v665 = vunpack.c.l.bf16 %v610
      %v666 = vunpack.c.h.bf16 %v610
      %v667 = vrot.slane %v619, 7
      %v668 = vrot.slane %v620, 7
      %v669 = vrot.slane %v621, 7
      %v670 = vrot.slane %v622, 7
      %v671 = vrot.slane %v623, 7
      %v672 = vrot.slane %v624, 7
      %v673 = vrot.slane %v625, 7
      %v674 = vrot.slane %v626, 7
      %v675 = vrot.slane %v627, 7
      %v676 = vrot.slane %v628, 7
      %v677 = vrot.slane %v629, 7
      %v678 = vrot.slane %v630, 7
      %v679 = vrot.slane %v631, 7
      %v680 = vrot.slane %v632, 7
      %v681 = vrot.slane %v633, 7
      %v682 = vrot.slane %v634, 7
      %v683 = vrot.slane %v635, 7
      %v684 = vrot.slane %v636, 7
      %v685 = vrot.slane %v637, 7
      %v686 = vrot.slane %v638, 7
      %v687 = vrot.slane %v639, 7
      %v688 = vrot.slane %v640, 7
      %v689 = vrot.slane %v641, 7
      %v690 = vrot.slane %v642, 7
      %v691 = vrot.slane %v643, 7
      %v692 = vrot.slane %v644, 7
      %v693 = vrot.slane %v645, 7
      %v694 = vrot.slane %v646, 7
      %v695 = vrot.slane %v647, 7
      %v696 = vrot.slane %v648, 7
      %v697 = vrot.slane %v649, 7
      %v698 = vrot.slane %v650, 7
      %v699 = vrot.slane %v651, 7
      %v700 = vrot.slane %v652, 7
      %v701 = vrot.slane %v653, 7
      %v702 = vrot.slane %v654, 7
      %v703 = vrot.slane %v655, 7
      %v704 = vrot.slane %v656, 7
      %v705 = vrot.slane %v657, 7
      %v706 = vrot.slane %v658, 7
      %v707 = vrot.slane %v659, 7
      %v708 = vrot.slane %v660, 7
      %v709 = vrot.slane %v661, 7
      %v710 = vrot.slane %v662, 7
      %v711 = vrot.slane %v663, 7
      %v712 = vrot.slane %v664, 7
      %v713 = vrot.slane %v665, 7
      %v714 = vrot.slane %v666, 7
      %v715 = vlaneseq
      %v716 = vshrl.u32 %v715, 7
      %vm717 = vcmp.lt.s32.totalorder %v716, 1
      %v718 = vsel %vm717, %v713, %v714
      %v719 = vsel %vm717, %v712, %v713
      %v720 = vsel %vm717, %v711, %v712
      %v721 = vsel %vm717, %v710, %v711
      %v722 = vsel %vm717, %v709, %v710
      %v723 = vsel %vm717, %v708, %v709
      %v724 = vsel %vm717, %v707, %v708
      %v725 = vsel %vm717, %v706, %v707
      %v726 = vsel %vm717, %v705, %v706
      %v727 = vsel %vm717, %v704, %v705
      %v728 = vsel %vm717, %v703, %v704
      %v729 = vsel %vm717, %v702, %v703
      %v730 = vsel %vm717, %v701, %v702
      %v731 = vsel %vm717, %v700, %v701
      %v732 = vsel %vm717, %v699, %v700
      %v733 = vsel %vm717, %v698, %v699
      %v734 = vsel %vm717, %v697, %v698
      %v735 = vsel %vm717, %v696, %v697
      %v736 = vsel %vm717, %v695, %v696
      %v737 = vsel %vm717, %v694, %v695
      %v738 = vsel %vm717, %v693, %v694
      %v739 = vsel %vm717, %v692, %v693
      %v740 = vsel %vm717, %v691, %v692
      %v741 = vsel %vm717, %v690, %v691
      %v742 = vsel %vm717, %v689, %v690
      %v743 = vsel %vm717, %v688, %v689
      %v744 = vsel %vm717, %v687, %v688
      %v745 = vsel %vm717, %v686, %v687
      %v746 = vsel %vm717, %v685, %v686
      %v747 = vsel %vm717, %v684, %v685
      %v748 = vsel %vm717, %v683, %v684
      %v749 = vsel %vm717, %v682, %v683
      %v750 = vsel %vm717, %v681, %v682
      %v751 = vsel %vm717, %v680, %v681
      %v752 = vsel %vm717, %v679, %v680
      %v753 = vsel %vm717, %v678, %v679
      %v754 = vsel %vm717, %v677, %v678
      %v755 = vsel %vm717, %v676, %v677
      %v756 = vsel %vm717, %v675, %v676
      %v757 = vsel %vm717, %v674, %v675
      %v758 = vsel %vm717, %v673, %v674
      %v759 = vsel %vm717, %v672, %v673
      %v760 = vsel %vm717, %v671, %v672
      %v761 = vsel %vm717, %v670, %v671
      %v762 = vsel %vm717, %v669, %v670
      %v763 = vsel %vm717, %v668, %v669
      %v764 = vsel %vm717, %v667, %v668
      %v765 = vsel %vm717, %v714, %v667
      %v766 = vrot.slane %v619, 1
      %v767 = vrot.slane %v620, 1
      %v768 = vrot.slane %v621, 1
      %v769 = vrot.slane %v622, 1
      %v770 = vrot.slane %v623, 1
      %v771 = vrot.slane %v624, 1
      %v772 = vrot.slane %v625, 1
      %v773 = vrot.slane %v626, 1
      %v774 = vrot.slane %v627, 1
      %v775 = vrot.slane %v628, 1
      %v776 = vrot.slane %v629, 1
      %v777 = vrot.slane %v630, 1
      %v778 = vrot.slane %v631, 1
      %v779 = vrot.slane %v632, 1
      %v780 = vrot.slane %v633, 1
      %v781 = vrot.slane %v634, 1
      %v782 = vrot.slane %v635, 1
      %v783 = vrot.slane %v636, 1
      %v784 = vrot.slane %v637, 1
      %v785 = vrot.slane %v638, 1
      %v786 = vrot.slane %v639, 1
      %v787 = vrot.slane %v640, 1
      %v788 = vrot.slane %v641, 1
      %v789 = vrot.slane %v642, 1
      %v790 = vrot.slane %v643, 1
      %v791 = vrot.slane %v644, 1
      %v792 = vrot.slane %v645, 1
      %v793 = vrot.slane %v646, 1
      %v794 = vrot.slane %v647, 1
      %v795 = vrot.slane %v648, 1
      %v796 = vrot.slane %v649, 1
      %v797 = vrot.slane %v650, 1
      %v798 = vrot.slane %v651, 1
      %v799 = vrot.slane %v652, 1
      %v800 = vrot.slane %v653, 1
      %v801 = vrot.slane %v654, 1
      %v802 = vrot.slane %v655, 1
      %v803 = vrot.slane %v656, 1
      %v804 = vrot.slane %v657, 1
      %v805 = vrot.slane %v658, 1
      %v806 = vrot.slane %v659, 1
      %v807 = vrot.slane %v660, 1
      %v808 = vrot.slane %v661, 1
      %v809 = vrot.slane %v662, 1
      %v810 = vrot.slane %v663, 1
      %v811 = vrot.slane %v664, 1
      %v812 = vrot.slane %v665, 1
      %v813 = vrot.slane %v666, 1
      %vm814 = vcmp.lt.s32.totalorder %v716, 7
      %v815 = vsel %vm814, %v812, %v813
      %v816 = vsel %vm814, %v811, %v812
      %v817 = vsel %vm814, %v810, %v811
      %v818 = vsel %vm814, %v809, %v810
      %v819 = vsel %vm814, %v808, %v809
      %v820 = vsel %vm814, %v807, %v808
      %v821 = vsel %vm814, %v806, %v807
      %v822 = vsel %vm814, %v805, %v806
      %v823 = vsel %vm814, %v804, %v805
      %v824 = vsel %vm814, %v803, %v804
      %v825 = vsel %vm814, %v802, %v803
      %v826 = vsel %vm814, %v801, %v802
      %v827 = vsel %vm814, %v800, %v801
      %v828 = vsel %vm814, %v799, %v800
      %v829 = vsel %vm814, %v798, %v799
      %v830 = vsel %vm814, %v797, %v798
      %v831 = vsel %vm814, %v796, %v797
      %v832 = vsel %vm814, %v795, %v796
      %v833 = vsel %vm814, %v794, %v795
      %v834 = vsel %vm814, %v793, %v794
      %v835 = vsel %vm814, %v792, %v793
      %v836 = vsel %vm814, %v791, %v792
      %v837 = vsel %vm814, %v790, %v791
      %v838 = vsel %vm814, %v789, %v790
      %v839 = vsel %vm814, %v788, %v789
      %v840 = vsel %vm814, %v787, %v788
      %v841 = vsel %vm814, %v786, %v787
      %v842 = vsel %vm814, %v785, %v786
      %v843 = vsel %vm814, %v784, %v785
      %v844 = vsel %vm814, %v783, %v784
      %v845 = vsel %vm814, %v782, %v783
      %v846 = vsel %vm814, %v781, %v782
      %v847 = vsel %vm814, %v780, %v781
      %v848 = vsel %vm814, %v779, %v780
      %v849 = vsel %vm814, %v778, %v779
      %v850 = vsel %vm814, %v777, %v778
      %v851 = vsel %vm814, %v776, %v777
      %v852 = vsel %vm814, %v775, %v776
      %v853 = vsel %vm814, %v774, %v775
      %v854 = vsel %vm814, %v773, %v774
      %v855 = vsel %vm814, %v772, %v773
      %v856 = vsel %vm814, %v771, %v772
      %v857 = vsel %vm814, %v770, %v771
      %v858 = vsel %vm814, %v769, %v770
      %v859 = vsel %vm814, %v768, %v769
      %v860 = vsel %vm814, %v767, %v768
      %v861 = vsel %vm814, %v766, %v767
      %v862 = vsel %vm814, %v813, %v766
      %v863 = vpack.c.bf16 %v764, %v765
      %v864 = vpack.c.bf16 %v762, %v763
      %v865 = vpack.c.bf16 %v760, %v761
      %v866 = vpack.c.bf16 %v758, %v759
      %v867 = vpack.c.bf16 %v756, %v757
      %v868 = vpack.c.bf16 %v754, %v755
      %v869 = vpack.c.bf16 %v752, %v753
      %v870 = vpack.c.bf16 %v750, %v751
      %v871 = vpack.c.bf16 %v748, %v749
      %v872 = vpack.c.bf16 %v746, %v747
      %v873 = vpack.c.bf16 %v744, %v745
      %v874 = vpack.c.bf16 %v742, %v743
      %v875 = vpack.c.bf16 %v740, %v741
      %v876 = vpack.c.bf16 %v738, %v739
      %v877 = vpack.c.bf16 %v736, %v737
      %v878 = vpack.c.bf16 %v734, %v735
      %v879 = vpack.c.bf16 %v732, %v733
      %v880 = vpack.c.bf16 %v730, %v731
      %v881 = vpack.c.bf16 %v728, %v729
      %v882 = vpack.c.bf16 %v726, %v727
      %v883 = vpack.c.bf16 %v620, %v619
      %v884 = vpack.c.bf16 %v622, %v621
      %v885 = vpack.c.bf16 %v624, %v623
      %v886 = vpack.c.bf16 %v626, %v625
      %v887 = vpack.c.bf16 %v628, %v627
      %v888 = vpack.c.bf16 %v630, %v629
      %v889 = vpack.c.bf16 %v632, %v631
      %v890 = vpack.c.bf16 %v634, %v633
      %v891 = vpack.c.bf16 %v636, %v635
      %v892 = vpack.c.bf16 %v638, %v637
      %v893 = vpack.c.bf16 %v640, %v639
      %v894 = vpack.c.bf16 %v642, %v641
      %v895 = vpack.c.bf16 %v644, %v643
      %v896 = vpack.c.bf16 %v646, %v645
      %v897 = vpack.c.bf16 %v648, %v647
      %v898 = vpack.c.bf16 %v650, %v649
      %v899 = vpack.c.bf16 %v652, %v651
      %v900 = vpack.c.bf16 %v654, %v653
      %v901 = vpack.c.bf16 %v656, %v655
      %v902 = vpack.c.bf16 %v658, %v657
      %v903 = vpack.c.bf16 %v860, %v861
      %v904 = vpack.c.bf16 %v858, %v859
      %v905 = vpack.c.bf16 %v856, %v857
      %v906 = vpack.c.bf16 %v854, %v855
      %v907 = vpack.c.bf16 %v852, %v853
      %v908 = vpack.c.bf16 %v850, %v851
      %v909 = vpack.c.bf16 %v848, %v849
      %v910 = vpack.c.bf16 %v846, %v847
      %v911 = vpack.c.bf16 %v844, %v845
      %v912 = vpack.c.bf16 %v842, %v843
      %v913 = vpack.c.bf16 %v840, %v841
      %v914 = vpack.c.bf16 %v838, %v839
      %v915 = vpack.c.bf16 %v836, %v837
      %v916 = vpack.c.bf16 %v834, %v835
      %v917 = vpack.c.bf16 %v832, %v833
      %v918 = vpack.c.bf16 %v830, %v831
      %v919 = vpack.c.bf16 %v828, %v829
      %v920 = vpack.c.bf16 %v826, %v827
      %v921 = vpack.c.bf16 %v824, %v825
      %v922 = vpack.c.bf16 %v822, %v823
      %v923 = vpack.c.bf16 %v724, %v725
      %v924 = vpack.c.bf16 %v722, %v723
      %v925 = vpack.c.bf16 %v660, %v659
      %v926 = vpack.c.bf16 %v662, %v661
      %v927 = vpack.c.bf16 %v820, %v821
      %v928 = vpack.c.bf16 %v818, %v819
      %v929 = vpack.c.bf16 %v720, %v721
      %v930 = vpack.c.bf16 %v718, %v719
      %v931 = vpack.c.bf16 %v664, %v663
      %v932 = vpack.c.bf16 %v666, %v665
      %v933 = vpack.c.bf16 %v816, %v817
      %v934 = vpack.c.bf16 %v862, %v815
      %955 = vrot.lane.b32.xlu0 %v883, 4
      %v956 = vpop.permute.xlu0 %955
      %957 = vrot.lane.b32.xlu0 %v884, 4
      %v958 = vpop.permute.xlu0 %957
      %959 = vrot.lane.b32.xlu0 %v885, 4
      %v960 = vpop.permute.xlu0 %959
      %961 = vrot.lane.b32.xlu0 %v886, 4
      %v962 = vpop.permute.xlu0 %961
      %963 = vrot.lane.b32.xlu0 %v887, 4
      %v964 = vpop.permute.xlu0 %963
      %965 = vrot.lane.b32.xlu0 %v888, 4
      %v966 = vpop.permute.xlu0 %965
      %967 = vrot.lane.b32.xlu0 %v889, 4
      %v968 = vpop.permute.xlu0 %967
      %969 = vrot.lane.b32.xlu0 %v890, 4
      %v970 = vpop.permute.xlu0 %969
      %971 = vrot.lane.b32.xlu0 %v891, 4
      %v972 = vpop.permute.xlu0 %971
      %973 = vrot.lane.b32.xlu0 %v892, 4
      %v974 = vpop.permute.xlu0 %973
      %975 = vrot.lane.b32.xlu0 %v893, 4
      %v976 = vpop.permute.xlu0 %975
      %977 = vrot.lane.b32.xlu0 %v894, 4
      %v978 = vpop.permute.xlu0 %977
      %979 = vrot.lane.b32.xlu0 %v895, 4
      %v980 = vpop.permute.xlu0 %979
      %981 = vrot.lane.b32.xlu0 %v896, 4
      %v982 = vpop.permute.xlu0 %981
      %983 = vrot.lane.b32.xlu0 %v897, 4
      %v984 = vpop.permute.xlu0 %983
      %985 = vrot.lane.b32.xlu0 %v898, 4
      %v986 = vpop.permute.xlu0 %985
      %987 = vrot.lane.b32.xlu0 %v899, 4
      %v988 = vpop.permute.xlu0 %987
      %989 = vrot.lane.b32.xlu0 %v900, 4
      %v990 = vpop.permute.xlu0 %989
      %991 = vrot.lane.b32.xlu0 %v901, 4
      %v992 = vpop.permute.xlu0 %991
      %993 = vrot.lane.b32.xlu0 %v902, 4
      %v994 = vpop.permute.xlu0 %993
      %1015 = vrot.lane.b32.xlu0 %v903, 8
      %v1016 = vpop.permute.xlu0 %1015
      %1017 = vrot.lane.b32.xlu0 %v904, 8
      %v1018 = vpop.permute.xlu0 %1017
      %1019 = vrot.lane.b32.xlu0 %v905, 8
      %v1020 = vpop.permute.xlu0 %1019
      %1021 = vrot.lane.b32.xlu0 %v906, 8
      %v1022 = vpop.permute.xlu0 %1021
      %1023 = vrot.lane.b32.xlu0 %v907, 8
      %v1024 = vpop.permute.xlu0 %1023
      %1025 = vrot.lane.b32.xlu0 %v908, 8
      %v1026 = vpop.permute.xlu0 %1025
      %1027 = vrot.lane.b32.xlu0 %v909, 8
      %v1028 = vpop.permute.xlu0 %1027
      %1029 = vrot.lane.b32.xlu0 %v910, 8
      %v1030 = vpop.permute.xlu0 %1029
      %1031 = vrot.lane.b32.xlu0 %v911, 8
      %v1032 = vpop.permute.xlu0 %1031
      %1033 = vrot.lane.b32.xlu0 %v912, 8
      %v1034 = vpop.permute.xlu0 %1033
      %1035 = vrot.lane.b32.xlu0 %v913, 8
      %v1036 = vpop.permute.xlu0 %1035
      %1037 = vrot.lane.b32.xlu0 %v914, 8
      %v1038 = vpop.permute.xlu0 %1037
      %1039 = vrot.lane.b32.xlu0 %v915, 8
      %v1040 = vpop.permute.xlu0 %1039
      %1041 = vrot.lane.b32.xlu0 %v916, 8
      %v1042 = vpop.permute.xlu0 %1041
      %1043 = vrot.lane.b32.xlu0 %v917, 8
      %v1044 = vpop.permute.xlu0 %1043
      %1045 = vrot.lane.b32.xlu0 %v918, 8
      %v1046 = vpop.permute.xlu0 %1045
      %1047 = vrot.lane.b32.xlu0 %v919, 8
      %v1048 = vpop.permute.xlu0 %1047
      %1049 = vrot.lane.b32.xlu0 %v920, 8
      %v1050 = vpop.permute.xlu0 %1049
      %1051 = vrot.lane.b32.xlu0 %v921, 8
      %v1052 = vpop.permute.xlu0 %1051
      %1053 = vrot.lane.b32.xlu0 %v922, 8
      %v1054 = vpop.permute.xlu0 %1053
      %1075 = vrot.lane.b32.xlu0 %v865, 12
      %v1076 = vpop.permute.xlu0 %1075
      %1077 = vrot.lane.b32.xlu0 %v866, 12
      %v1078 = vpop.permute.xlu0 %1077
      %1079 = vrot.lane.b32.xlu0 %v867, 12
      %v1080 = vpop.permute.xlu0 %1079
      %1081 = vrot.lane.b32.xlu0 %v868, 12
      %v1082 = vpop.permute.xlu0 %1081
      %1083 = vrot.lane.b32.xlu0 %v869, 12
      %v1084 = vpop.permute.xlu0 %1083
      %1085 = vrot.lane.b32.xlu0 %v870, 12
      %v1086 = vpop.permute.xlu0 %1085
      %1087 = vrot.lane.b32.xlu0 %v871, 12
      %v1088 = vpop.permute.xlu0 %1087
      %1089 = vrot.lane.b32.xlu0 %v872, 12
      %v1090 = vpop.permute.xlu0 %1089
      %1091 = vrot.lane.b32.xlu0 %v873, 12
      %v1092 = vpop.permute.xlu0 %1091
      %1093 = vrot.lane.b32.xlu0 %v874, 12
      %v1094 = vpop.permute.xlu0 %1093
      %1095 = vrot.lane.b32.xlu0 %v875, 12
      %v1096 = vpop.permute.xlu0 %1095
      %1097 = vrot.lane.b32.xlu0 %v876, 12
      %v1098 = vpop.permute.xlu0 %1097
      %1099 = vrot.lane.b32.xlu0 %v877, 12
      %v1100 = vpop.permute.xlu0 %1099
      %1101 = vrot.lane.b32.xlu0 %v878, 12
      %v1102 = vpop.permute.xlu0 %1101
      %1103 = vrot.lane.b32.xlu0 %v879, 12
      %v1104 = vpop.permute.xlu0 %1103
      %1105 = vrot.lane.b32.xlu0 %v880, 12
      %v1106 = vpop.permute.xlu0 %1105
      %1107 = vrot.lane.b32.xlu0 %v881, 12
      %v1108 = vpop.permute.xlu0 %1107
      %1109 = vrot.lane.b32.xlu0 %v882, 12
      %v1110 = vpop.permute.xlu0 %1109
      %1111 = vrot.lane.b32.xlu0 %v923, 12
      %v1112 = vpop.permute.xlu0 %1111
      %1113 = vrot.lane.b32.xlu0 %v924, 12
      %v1114 = vpop.permute.xlu0 %1113
      %1117 = vrot.lane.b32.xlu0 %v885, 16
      %v1118 = vpop.permute.xlu0 %1117
      %1119 = vrot.lane.b32.xlu0 %v886, 16
      %v1120 = vpop.permute.xlu0 %1119
      %1121 = vrot.lane.b32.xlu0 %v887, 16
      %v1122 = vpop.permute.xlu0 %1121
      %1123 = vrot.lane.b32.xlu0 %v888, 16
      %v1124 = vpop.permute.xlu0 %1123
      %1125 = vrot.lane.b32.xlu0 %v889, 16
      %v1126 = vpop.permute.xlu0 %1125
      %1127 = vrot.lane.b32.xlu0 %v890, 16
      %v1128 = vpop.permute.xlu0 %1127
      %1129 = vrot.lane.b32.xlu0 %v891, 16
      %v1130 = vpop.permute.xlu0 %1129
      %1131 = vrot.lane.b32.xlu0 %v892, 16
      %v1132 = vpop.permute.xlu0 %1131
      %1133 = vrot.lane.b32.xlu0 %v893, 16
      %v1134 = vpop.permute.xlu0 %1133
      %1135 = vrot.lane.b32.xlu0 %v894, 16
      %v1136 = vpop.permute.xlu0 %1135
      %1137 = vrot.lane.b32.xlu0 %v895, 16
      %v1138 = vpop.permute.xlu0 %1137
      %1139 = vrot.lane.b32.xlu0 %v896, 16
      %v1140 = vpop.permute.xlu0 %1139
      %1141 = vrot.lane.b32.xlu0 %v897, 16
      %v1142 = vpop.permute.xlu0 %1141
      %1143 = vrot.lane.b32.xlu0 %v898, 16
      %v1144 = vpop.permute.xlu0 %1143
      %1145 = vrot.lane.b32.xlu0 %v899, 16
      %v1146 = vpop.permute.xlu0 %1145
      %1147 = vrot.lane.b32.xlu0 %v900, 16
      %v1148 = vpop.permute.xlu0 %1147
      %1149 = vrot.lane.b32.xlu0 %v901, 16
      %v1150 = vpop.permute.xlu0 %1149
      %1151 = vrot.lane.b32.xlu0 %v902, 16
      %v1152 = vpop.permute.xlu0 %1151
      %1153 = vrot.lane.b32.xlu0 %v925, 16
      %v1154 = vpop.permute.xlu0 %1153
      %1155 = vrot.lane.b32.xlu0 %v926, 16
      %v1156 = vpop.permute.xlu0 %1155
      %1159 = vrot.lane.b32.xlu0 %v905, 20
      %v1160 = vpop.permute.xlu0 %1159
      %1161 = vrot.lane.b32.xlu0 %v906, 20
      %v1162 = vpop.permute.xlu0 %1161
      %1163 = vrot.lane.b32.xlu0 %v907, 20
      %v1164 = vpop.permute.xlu0 %1163
      %1165 = vrot.lane.b32.xlu0 %v908, 20
      %v1166 = vpop.permute.xlu0 %1165
      %1167 = vrot.lane.b32.xlu0 %v909, 20
      %v1168 = vpop.permute.xlu0 %1167
      %1169 = vrot.lane.b32.xlu0 %v910, 20
      %v1170 = vpop.permute.xlu0 %1169
      %1171 = vrot.lane.b32.xlu0 %v911, 20
      %v1172 = vpop.permute.xlu0 %1171
      %1173 = vrot.lane.b32.xlu0 %v912, 20
      %v1174 = vpop.permute.xlu0 %1173
      %1175 = vrot.lane.b32.xlu0 %v913, 20
      %v1176 = vpop.permute.xlu0 %1175
      %1177 = vrot.lane.b32.xlu0 %v914, 20
      %v1178 = vpop.permute.xlu0 %1177
      %1179 = vrot.lane.b32.xlu0 %v915, 20
      %v1180 = vpop.permute.xlu0 %1179
      %1181 = vrot.lane.b32.xlu0 %v916, 20
      %v1182 = vpop.permute.xlu0 %1181
      %1183 = vrot.lane.b32.xlu0 %v917, 20
      %v1184 = vpop.permute.xlu0 %1183
      %1185 = vrot.lane.b32.xlu0 %v918, 20
      %v1186 = vpop.permute.xlu0 %1185
      %1187 = vrot.lane.b32.xlu0 %v919, 20
      %v1188 = vpop.permute.xlu0 %1187
      %1189 = vrot.lane.b32.xlu0 %v920, 20
      %v1190 = vpop.permute.xlu0 %1189
      %1191 = vrot.lane.b32.xlu0 %v921, 20
      %v1192 = vpop.permute.xlu0 %1191
      %1193 = vrot.lane.b32.xlu0 %v922, 20
      %v1194 = vpop.permute.xlu0 %1193
      %1195 = vrot.lane.b32.xlu0 %v927, 20
      %v1196 = vpop.permute.xlu0 %1195
      %1197 = vrot.lane.b32.xlu0 %v928, 20
      %v1198 = vpop.permute.xlu0 %1197
      %1201 = vrot.lane.b32.xlu0 %v867, 24
      %v1202 = vpop.permute.xlu0 %1201
      %1203 = vrot.lane.b32.xlu0 %v868, 24
      %v1204 = vpop.permute.xlu0 %1203
      %1205 = vrot.lane.b32.xlu0 %v869, 24
      %v1206 = vpop.permute.xlu0 %1205
      %1207 = vrot.lane.b32.xlu0 %v870, 24
      %v1208 = vpop.permute.xlu0 %1207
      %1209 = vrot.lane.b32.xlu0 %v871, 24
      %v1210 = vpop.permute.xlu0 %1209
      %1211 = vrot.lane.b32.xlu0 %v872, 24
      %v1212 = vpop.permute.xlu0 %1211
      %1213 = vrot.lane.b32.xlu0 %v873, 24
      %v1214 = vpop.permute.xlu0 %1213
      %1215 = vrot.lane.b32.xlu0 %v874, 24
      %v1216 = vpop.permute.xlu0 %1215
      %1217 = vrot.lane.b32.xlu0 %v875, 24
      %v1218 = vpop.permute.xlu0 %1217
      %1219 = vrot.lane.b32.xlu0 %v876, 24
      %v1220 = vpop.permute.xlu0 %1219
      %1221 = vrot.lane.b32.xlu0 %v877, 24
      %v1222 = vpop.permute.xlu0 %1221
      %1223 = vrot.lane.b32.xlu0 %v878, 24
      %v1224 = vpop.permute.xlu0 %1223
      %1225 = vrot.lane.b32.xlu0 %v879, 24
      %v1226 = vpop.permute.xlu0 %1225
      %1227 = vrot.lane.b32.xlu0 %v880, 24
      %v1228 = vpop.permute.xlu0 %1227
      %1229 = vrot.lane.b32.xlu0 %v881, 24
      %v1230 = vpop.permute.xlu0 %1229
      %1231 = vrot.lane.b32.xlu0 %v882, 24
      %v1232 = vpop.permute.xlu0 %1231
      %1233 = vrot.lane.b32.xlu0 %v923, 24
      %v1234 = vpop.permute.xlu0 %1233
      %1235 = vrot.lane.b32.xlu0 %v924, 24
      %v1236 = vpop.permute.xlu0 %1235
      %1237 = vrot.lane.b32.xlu0 %v929, 24
      %v1238 = vpop.permute.xlu0 %1237
      %1239 = vrot.lane.b32.xlu0 %v930, 24
      %v1240 = vpop.permute.xlu0 %1239
      %1243 = vrot.lane.b32.xlu0 %v887, 28
      %v1244 = vpop.permute.xlu0 %1243
      %1245 = vrot.lane.b32.xlu0 %v888, 28
      %v1246 = vpop.permute.xlu0 %1245
      %1247 = vrot.lane.b32.xlu0 %v889, 28
      %v1248 = vpop.permute.xlu0 %1247
      %1249 = vrot.lane.b32.xlu0 %v890, 28
      %v1250 = vpop.permute.xlu0 %1249
      %1251 = vrot.lane.b32.xlu0 %v891, 28
      %v1252 = vpop.permute.xlu0 %1251
      %1253 = vrot.lane.b32.xlu0 %v892, 28
      %v1254 = vpop.permute.xlu0 %1253
      %1255 = vrot.lane.b32.xlu0 %v893, 28
      %v1256 = vpop.permute.xlu0 %1255
      %1257 = vrot.lane.b32.xlu0 %v894, 28
      %v1258 = vpop.permute.xlu0 %1257
      %1259 = vrot.lane.b32.xlu0 %v895, 28
      %v1260 = vpop.permute.xlu0 %1259
      %1261 = vrot.lane.b32.xlu0 %v896, 28
      %v1262 = vpop.permute.xlu0 %1261
      %1263 = vrot.lane.b32.xlu0 %v897, 28
      %v1264 = vpop.permute.xlu0 %1263
      %1265 = vrot.lane.b32.xlu0 %v898, 28
      %v1266 = vpop.permute.xlu0 %1265
      %1267 = vrot.lane.b32.xlu0 %v899, 28
      %v1268 = vpop.permute.xlu0 %1267
      %1269 = vrot.lane.b32.xlu0 %v900, 28
      %v1270 = vpop.permute.xlu0 %1269
      %1271 = vrot.lane.b32.xlu0 %v901, 28
      %v1272 = vpop.permute.xlu0 %1271
      %1273 = vrot.lane.b32.xlu0 %v902, 28
      %v1274 = vpop.permute.xlu0 %1273
      %1275 = vrot.lane.b32.xlu0 %v925, 28
      %v1276 = vpop.permute.xlu0 %1275
      %1277 = vrot.lane.b32.xlu0 %v926, 28
      %v1278 = vpop.permute.xlu0 %1277
      %1279 = vrot.lane.b32.xlu0 %v931, 28
      %v1280 = vpop.permute.xlu0 %1279
      %1281 = vrot.lane.b32.xlu0 %v932, 28
      %v1282 = vpop.permute.xlu0 %1281
      %1285 = vrot.lane.b32.xlu0 %v907, 32
      %v1286 = vpop.permute.xlu0 %1285
      %1287 = vrot.lane.b32.xlu0 %v908, 32
      %v1288 = vpop.permute.xlu0 %1287
      %1289 = vrot.lane.b32.xlu0 %v909, 32
      %v1290 = vpop.permute.xlu0 %1289
      %1291 = vrot.lane.b32.xlu0 %v910, 32
      %v1292 = vpop.permute.xlu0 %1291
      %1293 = vrot.lane.b32.xlu0 %v911, 32
      %v1294 = vpop.permute.xlu0 %1293
      %1295 = vrot.lane.b32.xlu0 %v912, 32
      %v1296 = vpop.permute.xlu0 %1295
      %1297 = vrot.lane.b32.xlu0 %v913, 32
      %v1298 = vpop.permute.xlu0 %1297
      %1299 = vrot.lane.b32.xlu0 %v914, 32
      %v1300 = vpop.permute.xlu0 %1299
      %1301 = vrot.lane.b32.xlu0 %v915, 32
      %v1302 = vpop.permute.xlu0 %1301
      %1303 = vrot.lane.b32.xlu0 %v916, 32
      %v1304 = vpop.permute.xlu0 %1303
      %1305 = vrot.lane.b32.xlu0 %v917, 32
      %v1306 = vpop.permute.xlu0 %1305
      %1307 = vrot.lane.b32.xlu0 %v918, 32
      %v1308 = vpop.permute.xlu0 %1307
      %1309 = vrot.lane.b32.xlu0 %v919, 32
      %v1310 = vpop.permute.xlu0 %1309
      %1311 = vrot.lane.b32.xlu0 %v920, 32
      %v1312 = vpop.permute.xlu0 %1311
      %1313 = vrot.lane.b32.xlu0 %v921, 32
      %v1314 = vpop.permute.xlu0 %1313
      %1315 = vrot.lane.b32.xlu0 %v922, 32
      %v1316 = vpop.permute.xlu0 %1315
      %1317 = vrot.lane.b32.xlu0 %v927, 32
      %v1318 = vpop.permute.xlu0 %1317
      %1319 = vrot.lane.b32.xlu0 %v928, 32
      %v1320 = vpop.permute.xlu0 %1319
      %1321 = vrot.lane.b32.xlu0 %v933, 32
      %v1322 = vpop.permute.xlu0 %1321
      %1323 = vrot.lane.b32.xlu0 %v934, 32
      %v1324 = vpop.permute.xlu0 %1323
      %vm1325 = vcmask 31744
      %v1328 = vsel %vm1325, %v863, %v956
      %v1331 = vsel %vm1325, %v864, %v958
      %v1334 = vsel %vm1325, %v865, %v960
      %v1337 = vsel %vm1325, %v866, %v962
      %v1340 = vsel %vm1325, %v867, %v964
      %v1343 = vsel %vm1325, %v868, %v966
      %v1346 = vsel %vm1325, %v869, %v968
      %v1349 = vsel %vm1325, %v870, %v970
      %v1352 = vsel %vm1325, %v871, %v972
      %v1355 = vsel %vm1325, %v872, %v974
      %v1358 = vsel %vm1325, %v873, %v976
      %v1361 = vsel %vm1325, %v874, %v978
      %v1364 = vsel %vm1325, %v875, %v980
      %v1367 = vsel %vm1325, %v876, %v982
      %v1370 = vsel %vm1325, %v877, %v984
      %v1373 = vsel %vm1325, %v878, %v986
      %v1376 = vsel %vm1325, %v879, %v988
      %v1379 = vsel %vm1325, %v880, %v990
      %v1382 = vsel %vm1325, %v881, %v992
      %v1385 = vsel %vm1325, %v882, %v994
      %vm1386 = vcmask 64512
      %v1388 = vsel %vm1386, %v1328, %v1016
      %v1390 = vsel %vm1386, %v1331, %v1018
      %v1392 = vsel %vm1386, %v1334, %v1020
      %v1394 = vsel %vm1386, %v1337, %v1022
      %v1396 = vsel %vm1386, %v1340, %v1024
      %v1398 = vsel %vm1386, %v1343, %v1026
      %v1400 = vsel %vm1386, %v1346, %v1028
      %v1402 = vsel %vm1386, %v1349, %v1030
      %v1404 = vsel %vm1386, %v1352, %v1032
      %v1406 = vsel %vm1386, %v1355, %v1034
      %v1408 = vsel %vm1386, %v1358, %v1036
      %v1410 = vsel %vm1386, %v1361, %v1038
      %v1412 = vsel %vm1386, %v1364, %v1040
      %v1414 = vsel %vm1386, %v1367, %v1042
      %v1416 = vsel %vm1386, %v1370, %v1044
      %v1418 = vsel %vm1386, %v1373, %v1046
      %v1420 = vsel %vm1386, %v1376, %v1048
      %v1422 = vsel %vm1386, %v1379, %v1050
      %v1424 = vsel %vm1386, %v1382, %v1052
      %v1426 = vsel %vm1386, %v1385, %v1054
      %vm1427 = vcmask 97280
      %v1429 = vsel %vm1427, %v1388, %v1076
      %v1431 = vsel %vm1427, %v1390, %v1078
      %v1433 = vsel %vm1427, %v1392, %v1080
      %v1435 = vsel %vm1427, %v1394, %v1082
      %v1437 = vsel %vm1427, %v1396, %v1084
      %v1439 = vsel %vm1427, %v1398, %v1086
      %v1441 = vsel %vm1427, %v1400, %v1088
      %v1443 = vsel %vm1427, %v1402, %v1090
      %v1445 = vsel %vm1427, %v1404, %v1092
      %v1447 = vsel %vm1427, %v1406, %v1094
      %v1449 = vsel %vm1427, %v1408, %v1096
      %v1451 = vsel %vm1427, %v1410, %v1098
      %v1453 = vsel %vm1427, %v1412, %v1100
      %v1455 = vsel %vm1427, %v1414, %v1102
      %v1457 = vsel %vm1427, %v1416, %v1104
      %v1459 = vsel %vm1427, %v1418, %v1106
      %v1461 = vsel %vm1427, %v1420, %v1108
      %v1463 = vsel %vm1427, %v1422, %v1110
      %v1465 = vsel %vm1427, %v1424, %v1112
      %v1467 = vsel %vm1427, %v1426, %v1114
      %vm1468 = vcmask 130048
      %v1470 = vsel %vm1468, %v1429, %v1118
      %v1472 = vsel %vm1468, %v1431, %v1120
      %v1474 = vsel %vm1468, %v1433, %v1122
      %v1476 = vsel %vm1468, %v1435, %v1124
      %v1478 = vsel %vm1468, %v1437, %v1126
      %v1480 = vsel %vm1468, %v1439, %v1128
      %v1482 = vsel %vm1468, %v1441, %v1130
      %v1484 = vsel %vm1468, %v1443, %v1132
      %v1486 = vsel %vm1468, %v1445, %v1134
      %v1488 = vsel %vm1468, %v1447, %v1136
      %v1490 = vsel %vm1468, %v1449, %v1138
      %v1492 = vsel %vm1468, %v1451, %v1140
      %v1494 = vsel %vm1468, %v1453, %v1142
      %v1496 = vsel %vm1468, %v1455, %v1144
      %v1498 = vsel %vm1468, %v1457, %v1146
      %v1500 = vsel %vm1468, %v1459, %v1148
      %v1502 = vsel %vm1468, %v1461, %v1150
      %v1504 = vsel %vm1468, %v1463, %v1152
      %v1506 = vsel %vm1468, %v1465, %v1154
      %v1508 = vsel %vm1468, %v1467, %v1156
      %vm1509 = vcmask 162816
      %v1511 = vsel %vm1509, %v1470, %v1160
      %v1513 = vsel %vm1509, %v1472, %v1162
      %v1515 = vsel %vm1509, %v1474, %v1164
      %v1517 = vsel %vm1509, %v1476, %v1166
      %v1519 = vsel %vm1509, %v1478, %v1168
      %v1521 = vsel %vm1509, %v1480, %v1170
      %v1523 = vsel %vm1509, %v1482, %v1172
      %v1525 = vsel %vm1509, %v1484, %v1174
      %v1527 = vsel %vm1509, %v1486, %v1176
      %v1529 = vsel %vm1509, %v1488, %v1178
      %v1531 = vsel %vm1509, %v1490, %v1180
      %v1533 = vsel %vm1509, %v1492, %v1182
      %v1535 = vsel %vm1509, %v1494, %v1184
      %v1537 = vsel %vm1509, %v1496, %v1186
      %v1539 = vsel %vm1509, %v1498, %v1188
      %v1541 = vsel %vm1509, %v1500, %v1190
      %v1543 = vsel %vm1509, %v1502, %v1192
      %v1545 = vsel %vm1509, %v1504, %v1194
      %v1547 = vsel %vm1509, %v1506, %v1196
      %v1549 = vsel %vm1509, %v1508, %v1198
      %vm1550 = vcmask 195584
      %v1552 = vsel %vm1550, %v1511, %v1202
      %v1554 = vsel %vm1550, %v1513, %v1204
      %v1556 = vsel %vm1550, %v1515, %v1206
      %v1558 = vsel %vm1550, %v1517, %v1208
      %v1560 = vsel %vm1550, %v1519, %v1210
      %v1562 = vsel %vm1550, %v1521, %v1212
      %v1564 = vsel %vm1550, %v1523, %v1214
      %v1566 = vsel %vm1550, %v1525, %v1216
      %v1568 = vsel %vm1550, %v1527, %v1218
      %v1570 = vsel %vm1550, %v1529, %v1220
      %v1572 = vsel %vm1550, %v1531, %v1222
      %v1574 = vsel %vm1550, %v1533, %v1224
      %v1576 = vsel %vm1550, %v1535, %v1226
      %v1578 = vsel %vm1550, %v1537, %v1228
      %v1580 = vsel %vm1550, %v1539, %v1230
      %v1582 = vsel %vm1550, %v1541, %v1232
      %v1584 = vsel %vm1550, %v1543, %v1234
      %v1586 = vsel %vm1550, %v1545, %v1236
      %v1588 = vsel %vm1550, %v1547, %v1238
      %v1590 = vsel %vm1550, %v1549, %v1240
      %vm1591 = vcmask 228352
      %v1593 = vsel %vm1591, %v1552, %v1244
      %v1595 = vsel %vm1591, %v1554, %v1246
      %v1597 = vsel %vm1591, %v1556, %v1248
      %v1599 = vsel %vm1591, %v1558, %v1250
      %v1601 = vsel %vm1591, %v1560, %v1252
      %v1603 = vsel %vm1591, %v1562, %v1254
      %v1605 = vsel %vm1591, %v1564, %v1256
      %v1607 = vsel %vm1591, %v1566, %v1258
      %v1609 = vsel %vm1591, %v1568, %v1260
      %v1611 = vsel %vm1591, %v1570, %v1262
      %v1613 = vsel %vm1591, %v1572, %v1264
      %v1615 = vsel %vm1591, %v1574, %v1266
      %v1617 = vsel %vm1591, %v1576, %v1268
      %v1619 = vsel %vm1591, %v1578, %v1270
      %v1621 = vsel %vm1591, %v1580, %v1272
      %v1623 = vsel %vm1591, %v1582, %v1274
      %v1625 = vsel %vm1591, %v1584, %v1276
      %v1627 = vsel %vm1591, %v1586, %v1278
      %v1629 = vsel %vm1591, %v1588, %v1280
      %v1631 = vsel %vm1591, %v1590, %v1282
      %vm1632 = vcmask 261120
      %v1634 = vsel %vm1632, %v1593, %v1286
      %v1636 = vsel %vm1632, %v1595, %v1288
      %v1638 = vsel %vm1632, %v1597, %v1290
      %v1640 = vsel %vm1632, %v1599, %v1292
      %v1642 = vsel %vm1632, %v1601, %v1294
      %v1644 = vsel %vm1632, %v1603, %v1296
      %v1646 = vsel %vm1632, %v1605, %v1298
      %v1648 = vsel %vm1632, %v1607, %v1300
      %v1650 = vsel %vm1632, %v1609, %v1302
      %v1652 = vsel %vm1632, %v1611, %v1304
      %v1654 = vsel %vm1632, %v1613, %v1306
      %v1656 = vsel %vm1632, %v1615, %v1308
      %v1658 = vsel %vm1632, %v1617, %v1310
      %v1660 = vsel %vm1632, %v1619, %v1312
      %v1662 = vsel %vm1632, %v1621, %v1314
      %v1664 = vsel %vm1632, %v1623, %v1316
      %v1666 = vsel %vm1632, %v1625, %v1318
      %v1668 = vsel %vm1632, %v1627, %v1320
      %v1670 = vsel %vm1632, %v1629, %v1322
      %v1672 = vsel %vm1632, %v1631, %v1324
      %v1673 = vld [vmem:[%s3] sm:$0xf]
      %v1674 = vld [vmem:[%s3 + $0x4] sm:$0xf]
      %v1675 = vld [vmem:[%s3 + $0x8] sm:$0xf]
      %v1676 = vld [vmem:[%s3 + $0xc] sm:$0xf]
      %v1677 = vld [vmem:[%s3 + $0x10] sm:$0x3]
      %v1683 = vunpack.c.l.b16 %v1673
      %v1684 = vunpack.c.l.b16 %v1674
      %v1685 = vunpack.c.l.b16 %v1675
      %v1686 = vunpack.c.l.b16 %v1676
      %v1687 = vunpack.c.l.b16 %v1677
      %v1688 = vpack.c.b16 %v1684, %v1683
      %v1689 = vpack.c.b16 %v1686, %v1685
      %v1690 = vpack.c.b16 %v1687, %v1687
      %vm1693 = vcmask 293888
      %v1694 = vsel %vm1693, %v1634, 0
      %v1696 = vsel %vm1693, %v1636, 0
      %v1698 = vsel %vm1693, %v1638, 0
      %v1700 = vsel %vm1693, %v1640, 0
      %v1702 = vsel %vm1693, %v1642, 0
      %v1704 = vsel %vm1693, %v1644, 0
      %v1706 = vsel %vm1693, %v1646, 0
      %v1708 = vsel %vm1693, %v1648, 0
      %v1710 = vsel %vm1693, %v1650, 0
      %v1712 = vsel %vm1693, %v1652, 0
      %v1714 = vsel %vm1693, %v1654, 0
      %v1716 = vsel %vm1693, %v1656, 0
      %v1718 = vsel %vm1693, %v1658, 0
      %v1720 = vsel %vm1693, %v1660, 0
      %v1722 = vsel %vm1693, %v1662, 0
      %v1724 = vsel %vm1693, %v1664, 0
      %v1726 = vsel %vm1693, %v1666, 0
      %v1728 = vsel %vm1693, %v1668, 0
      %v1730 = vsel %vm1693, %v1670, 0
      %v1732 = vsel %vm1693, %v1672, 0
      %vm1734 = vcmask 1041408
      %v1736 = vsel %vm1734, %v1690, 0
      %1738 = vmatprep.subr.bf16.mxu0 0
      %1739 = vmatpush1.bf16.msra.mxu0 %v1688
      %1740 = vmatprep.subr.bf16.mxu0 0
      %1741 = vmatpush1.bf16.msra.mxu0 %v1689
      %1742 = vmatprep.subr.bf16.mxu0 0
      %1743 = vmatpush1.bf16.msra.mxu0 %v1736
      %1744 = vmatprep.subr.bf16.mxu0 0
      %1745 = vmatpush1.bf16.msra.mxu0 0
      %1746 = vmatprep.subr.bf16.mxu0 0
      %1747 = vmatpush1.bf16.msra.mxu0 0
      %1748 = vmatprep.subr.bf16.mxu0 0
      %1749 = vmatpush1.bf16.msra.mxu0 0
      %1750 = vmatprep.subr.bf16.mxu0 0
      %1751 = vmatpush1.bf16.msra.mxu0 0
      %1752 = vmatprep.subr.bf16.mxu0 0
      %1753 = vmatpush1.bf16.msra.mxu0 0
      %1754 = vmatprep.subr.bf16.mxu0 0
      %1755 = vmatpush1.bf16.msra.mxu0 0
      %1756 = vmatprep.subr.bf16.mxu0 0
      %1757 = vmatpush1.bf16.msra.mxu0 0
      %1758 = vmatprep.subr.bf16.mxu0 0
      %1759 = vmatpush1.bf16.msra.mxu0 0
      %1760 = vmatprep.subr.bf16.mxu0 0
      %1761 = vmatpush1.bf16.msra.mxu0 0
      %1762 = vmatprep.subr.bf16.mxu0 0
      %1763 = vmatpush1.bf16.msra.mxu0 0
      %1764 = vmatprep.subr.bf16.mxu0 0
      %1765 = vmatpush1.bf16.msra.mxu0 0
      %1766 = vmatprep.subr.bf16.mxu0 0
      %1767 = vmatpush1.bf16.msra.mxu0 0
      %1768 = vmatprep.subr.bf16.mxu0 0
      %1769 = vmatpush1.bf16.msra.mxu0 0
      %1770 = vmatprep.mubr.bf16.mxu0 0
      %1771 = vmatmul.mubr.bf16.gmra.mrb[0].mxu0 %v1694
      %v1772 = vpop.f32.mrb[0].mxu0
      %v1773 = vadd.f32 0.0, %v1772
      %v1774 = vpop.f32.mrb[0].mxu0
      %v1775 = vpop.f32.mrb[0].mxu0
      %v1776 = vadd.f32 0.0, %v1775
      %v1777 = vpop.f32.mrb[0].mxu0
      %1778 = vmatprep.mubr.bf16.mxu0 0
      %1779 = vmatmul.mubr.bf16.gmra.mrb[0].mxu0 %v1696
      %v1780 = vpop.f32.mrb[0].mxu0
      %v1781 = vadd.f32 0.0, %v1780
      %v1782 = vpop.f32.mrb[0].mxu0
      %v1783 = vpop.f32.mrb[0].mxu0
      %v1784 = vadd.f32 0.0, %v1783
      %v1785 = vpop.f32.mrb[0].mxu0
      %1786 = vmatprep.mubr.bf16.mxu0 0
      %1787 = vmatmul.mubr.bf16.gmra.mrb[0].mxu0 %v1698
      %v1788 = vpop.f32.mrb[0].mxu0
      %v1789 = vadd.f32 0.0, %v1788
      %v1790 = vpop.f32.mrb[0].mxu0
      %v1791 = vpop.f32.mrb[0].mxu0
      %v1792 = vadd.f32 0.0, %v1791
      %v1793 = vpop.f32.mrb[0].mxu0
      %1794 = vmatprep.mubr.bf16.mxu0 0
      %1795 = vmatmul.mubr.bf16.gmra.mrb[0].mxu0 %v1700
      %v1796 = vpop.f32.mrb[0].mxu0
      %v1797 = vadd.f32 0.0, %v1796
      %v1798 = vpop.f32.mrb[0].mxu0
      %v1799 = vpop.f32.mrb[0].mxu0
      %v1800 = vadd.f32 0.0, %v1799
      %v1801 = vpop.f32.mrb[0].mxu0
      %1802 = vmatprep.mubr.bf16.mxu0 0
      %1803 = vmatmul.mubr.bf16.gmra.mrb[0].mxu0 %v1702
      %v1804 = vpop.f32.mrb[0].mxu0
      %v1805 = vadd.f32 0.0, %v1804
      %v1806 = vpop.f32.mrb[0].mxu0
      %v1807 = vpop.f32.mrb[0].mxu0
      %v1808 = vadd.f32 0.0, %v1807
      %v1809 = vpop.f32.mrb[0].mxu0
      %1810 = vmatprep.mubr.bf16.mxu0 0
      %1811 = vmatmul.mubr.bf16.gmra.mrb[0].mxu0 %v1704
      %v1812 = vpop.f32.mrb[0].mxu0
      %v1813 = vadd.f32 0.0, %v1812
      %v1814 = vpop.f32.mrb[0].mxu0
      %v1815 = vpop.f32.mrb[0].mxu0
      %v1816 = vadd.f32 0.0, %v1815
      %v1817 = vpop.f32.mrb[0].mxu0
      %1818 = vmatprep.mubr.bf16.mxu0 0
      %1819 = vmatmul.mubr.bf16.gmra.mrb[0].mxu0 %v1706
      %v1820 = vpop.f32.mrb[0].mxu0
      %v1821 = vadd.f32 0.0, %v1820
      %v1822 = vpop.f32.mrb[0].mxu0
      %v1823 = vpop.f32.mrb[0].mxu0
      %v1824 = vadd.f32 0.0, %v1823
      %v1825 = vpop.f32.mrb[0].mxu0
      %1826 = vmatprep.mubr.bf16.mxu0 0
      %1827 = vmatmul.mubr.bf16.gmra.mrb[0].mxu0 %v1708
      %v1828 = vpop.f32.mrb[0].mxu0
      %v1829 = vadd.f32 0.0, %v1828
      %v1830 = vpop.f32.mrb[0].mxu0
      %v1831 = vpop.f32.mrb[0].mxu0
      %v1832 = vadd.f32 0.0, %v1831
      %v1833 = vpop.f32.mrb[0].mxu0
      %1834 = vmatprep.mubr.bf16.mxu0 0
      %1835 = vmatmul.mubr.bf16.gmra.mrb[0].mxu0 %v1710
      %v1836 = vpop.f32.mrb[0].mxu0
      %v1837 = vadd.f32 0.0, %v1836
      %v1838 = vpop.f32.mrb[0].mxu0
      %v1839 = vpop.f32.mrb[0].mxu0
      %v1840 = vadd.f32 0.0, %v1839
      %v1841 = vpop.f32.mrb[0].mxu0
      %1842 = vmatprep.mubr.bf16.mxu0 0
      %1843 = vmatmul.mubr.bf16.gmra.mrb[0].mxu0 %v1712
      %v1844 = vpop.f32.mrb[0].mxu0
      %v1845 = vadd.f32 0.0, %v1844
      %v1846 = vpop.f32.mrb[0].mxu0
      %v1847 = vpop.f32.mrb[0].mxu0
      %v1848 = vadd.f32 0.0, %v1847
      %v1849 = vpop.f32.mrb[0].mxu0
      %1850 = vmatprep.mubr.bf16.mxu0 0
      %1851 = vmatmul.mubr.bf16.gmra.mrb[0].mxu0 %v1714
      %v1852 = vpop.f32.mrb[0].mxu0
      %v1853 = vadd.f32 0.0, %v1852
      %v1854 = vpop.f32.mrb[0].mxu0
      %v1855 = vpop.f32.mrb[0].mxu0
      %v1856 = vadd.f32 0.0, %v1855
      %v1857 = vpop.f32.mrb[0].mxu0
      %1858 = vmatprep.mubr.bf16.mxu0 0
      %1859 = vmatmul.mubr.bf16.gmra.mrb[0].mxu0 %v1716
      %v1860 = vpop.f32.mrb[0].mxu0
      %v1861 = vadd.f32 0.0, %v1860
      %v1862 = vpop.f32.mrb[0].mxu0
      %v1863 = vpop.f32.mrb[0].mxu0
      %v1864 = vadd.f32 0.0, %v1863
      %v1865 = vpop.f32.mrb[0].mxu0
      %1866 = vmatprep.mubr.bf16.mxu0 0
      %1867 = vmatmul.mubr.bf16.gmra.mrb[0].mxu0 %v1718
      %v1868 = vpop.f32.mrb[0].mxu0
      %v1869 = vadd.f32 0.0, %v1868
      %v1870 = vpop.f32.mrb[0].mxu0
      %v1871 = vpop.f32.mrb[0].mxu0
      %v1872 = vadd.f32 0.0, %v1871
      %v1873 = vpop.f32.mrb[0].mxu0
      %1874 = vmatprep.mubr.bf16.mxu0 0
      %1875 = vmatmul.mubr.bf16.gmra.mrb[0].mxu0 %v1720
      %v1876 = vpop.f32.mrb[0].mxu0
      %v1877 = vadd.f32 0.0, %v1876
      %v1878 = vpop.f32.mrb[0].mxu0
      %v1879 = vpop.f32.mrb[0].mxu0
      %v1880 = vadd.f32 0.0, %v1879
      %v1881 = vpop.f32.mrb[0].mxu0
      %1882 = vmatprep.mubr.bf16.mxu0 0
      %1883 = vmatmul.mubr.bf16.gmra.mrb[0].mxu0 %v1722
      %v1884 = vpop.f32.mrb[0].mxu0
      %v1885 = vadd.f32 0.0, %v1884
      %v1886 = vpop.f32.mrb[0].mxu0
      %v1887 = vpop.f32.mrb[0].mxu0
      %v1888 = vadd.f32 0.0, %v1887
      %v1889 = vpop.f32.mrb[0].mxu0
      %1890 = vmatprep.mubr.bf16.mxu0 0
      %1891 = vmatmul.mubr.bf16.gmra.mrb[0].mxu0 %v1724
      %v1892 = vpop.f32.mrb[0].mxu0
      %v1893 = vadd.f32 0.0, %v1892
      %v1894 = vpop.f32.mrb[0].mxu0
      %v1895 = vpop.f32.mrb[0].mxu0
      %v1896 = vadd.f32 0.0, %v1895
      %v1897 = vpop.f32.mrb[0].mxu0
      %1898 = vmatprep.mubr.bf16.mxu0 0
      %1899 = vmatmul.mubr.bf16.gmra.mrb[0].mxu0 %v1726
      %v1900 = vpop.f32.mrb[0].mxu0
      %v1901 = vadd.f32 0.0, %v1900
      %v1902 = vpop.f32.mrb[0].mxu0
      %v1903 = vpop.f32.mrb[0].mxu0
      %v1904 = vadd.f32 0.0, %v1903
      %v1905 = vpop.f32.mrb[0].mxu0
      %1906 = vmatprep.mubr.bf16.mxu0 0
      %1907 = vmatmul.mubr.bf16.gmra.mrb[0].mxu0 %v1728
      %v1908 = vpop.f32.mrb[0].mxu0
      %v1909 = vadd.f32 0.0, %v1908
      %v1910 = vpop.f32.mrb[0].mxu0
      %v1911 = vpop.f32.mrb[0].mxu0
      %v1912 = vadd.f32 0.0, %v1911
      %v1913 = vpop.f32.mrb[0].mxu0
      %1914 = vmatprep.mubr.bf16.mxu0 0
      %1915 = vmatmul.mubr.bf16.gmra.mrb[0].mxu0 %v1730
      %v1916 = vpop.f32.mrb[0].mxu0
      %v1917 = vadd.f32 0.0, %v1916
      %v1918 = vpop.f32.mrb[0].mxu0
      %v1919 = vpop.f32.mrb[0].mxu0
      %v1920 = vadd.f32 0.0, %v1919
      %v1921 = vpop.f32.mrb[0].mxu0
      %1922 = vmatprep.mubr.bf16.mxu0 0
      %1923 = vmatmul.mubr.bf16.gmra.mrb[0].mxu0 %v1732
      %v1924 = vpop.f32.mrb[0].mxu0
      %v1925 = vadd.f32 0.0, %v1924
      %v1926 = vpop.f32.mrb[0].mxu0
      %v1927 = vpop.f32.mrb[0].mxu0
      %v1928 = vadd.f32 0.0, %v1927
      %v1929 = vpop.f32.mrb[0].mxu0
      %1930 = vdwg.mxu0
      %v1931 = vld [vmem:[%s5] sm:$0x1]
      %v1933 = vlaneseq
      %v1934 = vshrl.u32 %v1933, 7
      %v1935 = vsub.s32 0, %v1934
      %v1936 = vrot.slane %v1931, %v1935
      %v1938 = vmul.f32 %v1773, %v1936
      %v1939 = vmul.f32 %v1776, %v1936
      %v1940 = vmul.f32 %v1781, %v1936
      %v1941 = vmul.f32 %v1784, %v1936
      %v1942 = vmul.f32 %v1789, %v1936
      %v1943 = vmul.f32 %v1792, %v1936
      %v1944 = vmul.f32 %v1797, %v1936
      %v1945 = vmul.f32 %v1800, %v1936
      %v1946 = vmul.f32 %v1805, %v1936
      %v1947 = vmul.f32 %v1808, %v1936
      %v1948 = vmul.f32 %v1813, %v1936
      %v1949 = vmul.f32 %v1816, %v1936
      %v1950 = vmul.f32 %v1821, %v1936
      %v1951 = vmul.f32 %v1824, %v1936
      %v1952 = vmul.f32 %v1829, %v1936
      %v1953 = vmul.f32 %v1832, %v1936
      %v1954 = vmul.f32 %v1837, %v1936
      %v1955 = vmul.f32 %v1840, %v1936
      %v1956 = vmul.f32 %v1845, %v1936
      %v1957 = vmul.f32 %v1848, %v1936
      %v1958 = vmul.f32 %v1853, %v1936
      %v1959 = vmul.f32 %v1856, %v1936
      %v1960 = vmul.f32 %v1861, %v1936
      %v1961 = vmul.f32 %v1864, %v1936
      %v1962 = vmul.f32 %v1869, %v1936
      %v1963 = vmul.f32 %v1872, %v1936
      %v1964 = vmul.f32 %v1877, %v1936
      %v1965 = vmul.f32 %v1880, %v1936
      %v1966 = vmul.f32 %v1885, %v1936
      %v1967 = vmul.f32 %v1888, %v1936
      %v1968 = vmul.f32 %v1893, %v1936
      %v1969 = vmul.f32 %v1896, %v1936
      %v1970 = vmul.f32 %v1901, %v1936
      %v1971 = vmul.f32 %v1904, %v1936
      %v1972 = vmul.f32 %v1909, %v1936
      %v1973 = vmul.f32 %v1912, %v1936
      %v1974 = vmul.f32 %v1917, %v1936
      %v1975 = vmul.f32 %v1920, %v1936
      %v1976 = vmul.f32 %v1925, %v1936
      %v1977 = vmul.f32 %v1928, %v1936
      %v1978 = vld [vmem:[%s6] sm:$0x1]
      %v1980 = vlaneseq
      %v1981 = vshrl.u32 %v1980, 7
      %v1982 = vsub.s32 0, %v1981
      %v1983 = vrot.slane %v1978, %v1982
      %v1985 = vadd.f32 %v1938, %v1983
      %v1986 = vadd.f32 %v1939, %v1983
      %v1987 = vadd.f32 %v1940, %v1983
      %v1988 = vadd.f32 %v1941, %v1983
      %v1989 = vadd.f32 %v1942, %v1983
      %v1990 = vadd.f32 %v1943, %v1983
      %v1991 = vadd.f32 %v1944, %v1983
      %v1992 = vadd.f32 %v1945, %v1983
      %v1993 = vadd.f32 %v1946, %v1983
      %v1994 = vadd.f32 %v1947, %v1983
      %v1995 = vadd.f32 %v1948, %v1983
      %v1996 = vadd.f32 %v1949, %v1983
      %v1997 = vadd.f32 %v1950, %v1983
      %v1998 = vadd.f32 %v1951, %v1983
      %v1999 = vadd.f32 %v1952, %v1983
      %v2000 = vadd.f32 %v1953, %v1983
      %v2001 = vadd.f32 %v1954, %v1983
      %v2002 = vadd.f32 %v1955, %v1983
      %v2003 = vadd.f32 %v1956, %v1983
      %v2004 = vadd.f32 %v1957, %v1983
      %v2005 = vadd.f32 %v1958, %v1983
      %v2006 = vadd.f32 %v1959, %v1983
      %v2007 = vadd.f32 %v1960, %v1983
      %v2008 = vadd.f32 %v1961, %v1983
      %v2009 = vadd.f32 %v1962, %v1983
      %v2010 = vadd.f32 %v1963, %v1983
      %v2011 = vadd.f32 %v1964, %v1983
      %v2012 = vadd.f32 %v1965, %v1983
      %v2013 = vadd.f32 %v1966, %v1983
      %v2014 = vadd.f32 %v1967, %v1983
      %v2015 = vadd.f32 %v1968, %v1983
      %v2016 = vadd.f32 %v1969, %v1983
      %v2017 = vadd.f32 %v1970, %v1983
      %v2018 = vadd.f32 %v1971, %v1983
      %v2019 = vadd.f32 %v1972, %v1983
      %v2020 = vadd.f32 %v1973, %v1983
      %v2021 = vadd.f32 %v1974, %v1983
      %v2022 = vadd.f32 %v1975, %v1983
      %v2023 = vadd.f32 %v1976, %v1983
      %v2024 = vadd.f32 %v1977, %v1983
      %v2025 = vmax.f32 %v1985, 0.0
      %v2026 = vmax.f32 %v1986, 0.0
      %v2027 = vmax.f32 %v1987, 0.0
      %v2028 = vmax.f32 %v1988, 0.0
      %v2029 = vmax.f32 %v1989, 0.0
      %v2030 = vmax.f32 %v1990, 0.0
      %v2031 = vmax.f32 %v1991, 0.0
      %v2032 = vmax.f32 %v1992, 0.0
      %v2033 = vmax.f32 %v1993, 0.0
      %v2034 = vmax.f32 %v1994, 0.0
      %v2035 = vmax.f32 %v1995, 0.0
      %v2036 = vmax.f32 %v1996, 0.0
      %v2037 = vmax.f32 %v1997, 0.0
      %v2038 = vmax.f32 %v1998, 0.0
      %v2039 = vmax.f32 %v1999, 0.0
      %v2040 = vmax.f32 %v2000, 0.0
      %v2041 = vmax.f32 %v2001, 0.0
      %v2042 = vmax.f32 %v2002, 0.0
      %v2043 = vmax.f32 %v2003, 0.0
      %v2044 = vmax.f32 %v2004, 0.0
      %v2045 = vmax.f32 %v2005, 0.0
      %v2046 = vmax.f32 %v2006, 0.0
      %v2047 = vmax.f32 %v2007, 0.0
      %v2048 = vmax.f32 %v2008, 0.0
      %v2049 = vmax.f32 %v2009, 0.0
      %v2050 = vmax.f32 %v2010, 0.0
      %v2051 = vmax.f32 %v2011, 0.0
      %v2052 = vmax.f32 %v2012, 0.0
      %v2053 = vmax.f32 %v2013, 0.0
      %v2054 = vmax.f32 %v2014, 0.0
      %v2055 = vmax.f32 %v2015, 0.0
      %v2056 = vmax.f32 %v2016, 0.0
      %v2057 = vmax.f32 %v2017, 0.0
      %v2058 = vmax.f32 %v2018, 0.0
      %v2059 = vmax.f32 %v2019, 0.0
      %v2060 = vmax.f32 %v2020, 0.0
      %v2061 = vmax.f32 %v2021, 0.0
      %v2062 = vmax.f32 %v2022, 0.0
      %v2063 = vmax.f32 %v2023, 0.0
      %v2064 = vmax.f32 %v2024, 0.0
      %v2065 = vadd.s32 %v716, 8
      %v2066 = vadd.s32 %v716, 16
      %v2067 = vadd.s32 %v716, 24
      %v2068 = vadd.s32 %v716, 32
      %v2069 = vadd.s32 %v716, 40
      %v2070 = vadd.s32 %v716, 48
      %v2071 = vadd.s32 %v716, 56
      %v2072 = vadd.s32 %v716, 64
      %v2073 = vadd.s32 %v716, 72
      %v2074 = vadd.s32 %v716, 80
      %v2075 = vadd.s32 %v716, 88
      %v2076 = vadd.s32 %v716, 96
      %v2077 = vadd.s32 %v716, 104
      %v2078 = vadd.s32 %v716, 112
      %v2079 = vadd.s32 %v716, 120
      %v2080 = vadd.s32 %v716, 128
      %v2081 = vadd.s32 %v716, 136
      %v2082 = vadd.s32 %v716, 144
      %v2083 = vadd.s32 %v716, 152
      %v2084 = vadd.s32 %v716, 160
      %v2085 = vadd.s32 %v716, 168
      %v2086 = vadd.s32 %v716, 176
      %v2087 = vadd.s32 %v716, 184
      %v2088 = vadd.s32 %v716, 192
      %v2089 = vadd.s32 %v716, 200
      %v2090 = vadd.s32 %v716, 208
      %v2091 = vadd.s32 %v716, 216
      %v2092 = vadd.s32 %v716, 224
      %v2093 = vadd.s32 %v716, 232
      %v2094 = vadd.s32 %v716, 240
      %v2095 = vadd.s32 %v716, 248
      %v2096 = vadd.s32 %v716, 256
      %v2097 = vadd.s32 %v716, 264
      %v2098 = vadd.s32 %v716, 272
      %v2099 = vadd.s32 %v716, 280
      %v2100 = vadd.s32 %v716, 288
      %v2101 = vadd.s32 %v716, 296
      %v2102 = vadd.s32 %v716, 304
      %v2103 = vadd.s32 %v716, 312
      %vm2104 = vcmp.lt.s32.totalorder %v716, 32
      %vm2105 = vcmp.lt.s32.totalorder %v2065, 32
      %vm2106 = vcmp.lt.s32.totalorder %v2066, 32
      %vm2107 = vcmp.lt.s32.totalorder %v2067, 32
      %vm2108 = vcmp.lt.s32.totalorder %v2068, 32
      %vm2109 = vcmp.lt.s32.totalorder %v2069, 32
      %vm2110 = vcmp.lt.s32.totalorder %v2070, 32
      %vm2111 = vcmp.lt.s32.totalorder %v2071, 32
      %vm2112 = vcmp.lt.s32.totalorder %v2072, 32
      %vm2113 = vcmp.lt.s32.totalorder %v2073, 32
      %vm2114 = vcmp.lt.s32.totalorder %v2074, 32
      %vm2115 = vcmp.lt.s32.totalorder %v2075, 32
      %vm2116 = vcmp.lt.s32.totalorder %v2076, 32
      %vm2117 = vcmp.lt.s32.totalorder %v2077, 32
      %vm2118 = vcmp.lt.s32.totalorder %v2078, 32
      %vm2119 = vcmp.lt.s32.totalorder %v2079, 32
      %vm2120 = vcmp.lt.s32.totalorder %v2080, 32
      %vm2121 = vcmp.lt.s32.totalorder %v2081, 32
      %vm2122 = vcmp.lt.s32.totalorder %v2082, 32
      %vm2123 = vcmp.lt.s32.totalorder %v2083, 32
      %vm2124 = vcmp.lt.s32.totalorder %v2084, 32
      %vm2125 = vcmp.lt.s32.totalorder %v2085, 32
      %vm2126 = vcmp.lt.s32.totalorder %v2086, 32
      %vm2127 = vcmp.lt.s32.totalorder %v2087, 32
      %vm2128 = vcmp.lt.s32.totalorder %v2088, 32
      %vm2129 = vcmp.lt.s32.totalorder %v2089, 32
      %vm2130 = vcmp.lt.s32.totalorder %v2090, 32
      %vm2131 = vcmp.lt.s32.totalorder %v2091, 32
      %vm2132 = vcmp.lt.s32.totalorder %v2092, 32
      %vm2133 = vcmp.lt.s32.totalorder %v2093, 32
      %vm2134 = vcmp.lt.s32.totalorder %v2094, 32
      %vm2135 = vcmp.lt.s32.totalorder %v2095, 32
      %vm2136 = vcmp.lt.s32.totalorder %v2096, 32
      %vm2137 = vcmp.lt.s32.totalorder %v2097, 32
      %vm2138 = vcmp.lt.s32.totalorder %v2098, 32
      %vm2139 = vcmp.lt.s32.totalorder %v2099, 32
      %vm2140 = vcmp.lt.s32.totalorder %v2100, 32
      %vm2141 = vcmp.lt.s32.totalorder %v2101, 32
      %vm2142 = vcmp.lt.s32.totalorder %v2102, 32
      %vm2143 = vcmp.lt.s32.totalorder %v2103, 32
      %p2144 = scmp.eq.s32.totalorder %s25, 0
      %s2145 = scalar_select %p2144, 1, 0
      %v2146 = vstv %s2145
      %vm2147 = vcmp.eq.s32.totalorder %v2146, 1
      %vm2148 = vmand %vm2104, %vm2147
      %vm2149 = vmand %vm2105, %vm2147
      %vm2150 = vmand %vm2106, %vm2147
      %vm2151 = vmand %vm2107, %vm2147
      %vm2152 = vmand %vm2108, %vm2147
      %vm2153 = vmand %vm2109, %vm2147
      %vm2154 = vmand %vm2110, %vm2147
      %vm2155 = vmand %vm2111, %vm2147
      %vm2156 = vmand %vm2112, %vm2147
      %vm2157 = vmand %vm2113, %vm2147
      %vm2158 = vmand %vm2114, %vm2147
      %vm2159 = vmand %vm2115, %vm2147
      %vm2160 = vmand %vm2116, %vm2147
      %vm2161 = vmand %vm2117, %vm2147
      %vm2162 = vmand %vm2118, %vm2147
      %vm2163 = vmand %vm2119, %vm2147
      %vm2164 = vmand %vm2120, %vm2147
      %vm2165 = vmand %vm2121, %vm2147
      %vm2166 = vmand %vm2122, %vm2147
      %vm2167 = vmand %vm2123, %vm2147
      %vm2168 = vmand %vm2124, %vm2147
      %vm2169 = vmand %vm2125, %vm2147
      %vm2170 = vmand %vm2126, %vm2147
      %vm2171 = vmand %vm2127, %vm2147
      %vm2172 = vmand %vm2128, %vm2147
      %vm2173 = vmand %vm2129, %vm2147
      %vm2174 = vmand %vm2130, %vm2147
      %vm2175 = vmand %vm2131, %vm2147
      %vm2176 = vmand %vm2132, %vm2147
      %vm2177 = vmand %vm2133, %vm2147
      %vm2178 = vmand %vm2134, %vm2147
      %vm2179 = vmand %vm2135, %vm2147
      %vm2180 = vmand %vm2136, %vm2147
      %vm2181 = vmand %vm2137, %vm2147
      %vm2182 = vmand %vm2138, %vm2147
      %vm2183 = vmand %vm2139, %vm2147
      %vm2184 = vmand %vm2140, %vm2147
      %vm2185 = vmand %vm2141, %vm2147
      %vm2186 = vmand %vm2142, %vm2147
      %vm2187 = vmand %vm2143, %vm2147
      %vm2188 = vcmp.ge.s32.totalorder %v716, 288
      %vm2189 = vcmp.ge.s32.totalorder %v2065, 288
      %vm2190 = vcmp.ge.s32.totalorder %v2066, 288
      %vm2191 = vcmp.ge.s32.totalorder %v2067, 288
      %vm2192 = vcmp.ge.s32.totalorder %v2068, 288
      %vm2193 = vcmp.ge.s32.totalorder %v2069, 288
      %vm2194 = vcmp.ge.s32.totalorder %v2070, 288
      %vm2195 = vcmp.ge.s32.totalorder %v2071, 288
      %vm2196 = vcmp.ge.s32.totalorder %v2072, 288
      %vm2197 = vcmp.ge.s32.totalorder %v2073, 288
      %vm2198 = vcmp.ge.s32.totalorder %v2074, 288
      %vm2199 = vcmp.ge.s32.totalorder %v2075, 288
      %vm2200 = vcmp.ge.s32.totalorder %v2076, 288
      %vm2201 = vcmp.ge.s32.totalorder %v2077, 288
      %vm2202 = vcmp.ge.s32.totalorder %v2078, 288
      %vm2203 = vcmp.ge.s32.totalorder %v2079, 288
      %vm2204 = vcmp.ge.s32.totalorder %v2080, 288
      %vm2205 = vcmp.ge.s32.totalorder %v2081, 288
      %vm2206 = vcmp.ge.s32.totalorder %v2082, 288
      %vm2207 = vcmp.ge.s32.totalorder %v2083, 288
      %vm2208 = vcmp.ge.s32.totalorder %v2084, 288
      %vm2209 = vcmp.ge.s32.totalorder %v2085, 288
      %vm2210 = vcmp.ge.s32.totalorder %v2086, 288
      %vm2211 = vcmp.ge.s32.totalorder %v2087, 288
      %vm2212 = vcmp.ge.s32.totalorder %v2088, 288
      %vm2213 = vcmp.ge.s32.totalorder %v2089, 288
      %vm2214 = vcmp.ge.s32.totalorder %v2090, 288
      %vm2215 = vcmp.ge.s32.totalorder %v2091, 288
      %vm2216 = vcmp.ge.s32.totalorder %v2092, 288
      %vm2217 = vcmp.ge.s32.totalorder %v2093, 288
      %vm2218 = vcmp.ge.s32.totalorder %v2094, 288
      %vm2219 = vcmp.ge.s32.totalorder %v2095, 288
      %vm2220 = vcmp.ge.s32.totalorder %v2096, 288
      %vm2221 = vcmp.ge.s32.totalorder %v2097, 288
      %vm2222 = vcmp.ge.s32.totalorder %v2098, 288
      %vm2223 = vcmp.ge.s32.totalorder %v2099, 288
      %vm2224 = vcmp.ge.s32.totalorder %v2100, 288
      %vm2225 = vcmp.ge.s32.totalorder %v2101, 288
      %vm2226 = vcmp.ge.s32.totalorder %v2102, 288
      %vm2227 = vcmp.ge.s32.totalorder %v2103, 288
      %p2228 = scmp.eq.s32.totalorder %s25, 1
      %s2229 = scalar_select %p2228, 1, 0
      %v2230 = vstv %s2229
      %vm2231 = vcmp.eq.s32.totalorder %v2230, 1
      %vm2232 = vmand %vm2188, %vm2231
      %vm2233 = vmand %vm2189, %vm2231
      %vm2234 = vmand %vm2190, %vm2231
      %vm2235 = vmand %vm2191, %vm2231
      %vm2236 = vmand %vm2192, %vm2231
      %vm2237 = vmand %vm2193, %vm2231
      %vm2238 = vmand %vm2194, %vm2231
      %vm2239 = vmand %vm2195, %vm2231
      %vm2240 = vmand %vm2196, %vm2231
      %vm2241 = vmand %vm2197, %vm2231
      %vm2242 = vmand %vm2198, %vm2231
      %vm2243 = vmand %vm2199, %vm2231
      %vm2244 = vmand %vm2200, %vm2231
      %vm2245 = vmand %vm2201, %vm2231
      %vm2246 = vmand %vm2202, %vm2231
      %vm2247 = vmand %vm2203, %vm2231
      %vm2248 = vmand %vm2204, %vm2231
      %vm2249 = vmand %vm2205, %vm2231
      %vm2250 = vmand %vm2206, %vm2231
      %vm2251 = vmand %vm2207, %vm2231
      %vm2252 = vmand %vm2208, %vm2231
      %vm2253 = vmand %vm2209, %vm2231
      %vm2254 = vmand %vm2210, %vm2231
      %vm2255 = vmand %vm2211, %vm2231
      %vm2256 = vmand %vm2212, %vm2231
      %vm2257 = vmand %vm2213, %vm2231
      %vm2258 = vmand %vm2214, %vm2231
      %vm2259 = vmand %vm2215, %vm2231
      %vm2260 = vmand %vm2216, %vm2231
      %vm2261 = vmand %vm2217, %vm2231
      %vm2262 = vmand %vm2218, %vm2231
      %vm2263 = vmand %vm2219, %vm2231
      %vm2264 = vmand %vm2220, %vm2231
      %vm2265 = vmand %vm2221, %vm2231
      %vm2266 = vmand %vm2222, %vm2231
      %vm2267 = vmand %vm2223, %vm2231
      %vm2268 = vmand %vm2224, %vm2231
      %vm2269 = vmand %vm2225, %vm2231
      %vm2270 = vmand %vm2226, %vm2231
      %vm2271 = vmand %vm2227, %vm2231
      %vm2272 = vmor %vm2148, %vm2232
      %vm2273 = vmor %vm2149, %vm2233
      %vm2274 = vmor %vm2150, %vm2234
      %vm2275 = vmor %vm2151, %vm2235
      %vm2276 = vmor %vm2152, %vm2236
      %vm2277 = vmor %vm2153, %vm2237
      %vm2278 = vmor %vm2154, %vm2238
      %vm2279 = vmor %vm2155, %vm2239
      %vm2280 = vmor %vm2156, %vm2240
      %vm2281 = vmor %vm2157, %vm2241
      %vm2282 = vmor %vm2158, %vm2242
      %vm2283 = vmor %vm2159, %vm2243
      %vm2284 = vmor %vm2160, %vm2244
      %vm2285 = vmor %vm2161, %vm2245
      %vm2286 = vmor %vm2162, %vm2246
      %vm2287 = vmor %vm2163, %vm2247
      %vm2288 = vmor %vm2164, %vm2248
      %vm2289 = vmor %vm2165, %vm2249
      %vm2290 = vmor %vm2166, %vm2250
      %vm2291 = vmor %vm2167, %vm2251
      %vm2292 = vmor %vm2168, %vm2252
      %vm2293 = vmor %vm2169, %vm2253
      %vm2294 = vmor %vm2170, %vm2254
      %vm2295 = vmor %vm2171, %vm2255
      %vm2296 = vmor %vm2172, %vm2256
      %vm2297 = vmor %vm2173, %vm2257
      %vm2298 = vmor %vm2174, %vm2258
      %vm2299 = vmor %vm2175, %vm2259
      %vm2300 = vmor %vm2176, %vm2260
      %vm2301 = vmor %vm2177, %vm2261
      %vm2302 = vmor %vm2178, %vm2262
      %vm2303 = vmor %vm2179, %vm2263
      %vm2304 = vmor %vm2180, %vm2264
      %vm2305 = vmor %vm2181, %vm2265
      %vm2306 = vmor %vm2182, %vm2266
      %vm2307 = vmor %vm2183, %vm2267
      %vm2308 = vmor %vm2184, %vm2268
      %vm2309 = vmor %vm2185, %vm2269
      %vm2310 = vmor %vm2186, %vm2270
      %vm2311 = vmor %vm2187, %vm2271
      %v2312 = vld [vmem:[%s2] sm:$0xff]
      %v2313 = vld [vmem:[%s2 + $0x8] sm:$0xff]
      %v2314 = vld [vmem:[%s2 + $0x10] sm:$0xff]
      %v2315 = vld [vmem:[%s2 + $0x18] sm:$0xff]
      %v2316 = vld [vmem:[%s2 + $0x20] sm:$0xff]
      %v2317 = vld [vmem:[%s2 + $0x28] sm:$0xff]
      %v2318 = vld [vmem:[%s2 + $0x30] sm:$0xff]
      %v2319 = vld [vmem:[%s2 + $0x38] sm:$0xff]
      %v2320 = vld [vmem:[%s2 + $0x40] sm:$0xff]
      %v2321 = vld [vmem:[%s2 + $0x48] sm:$0xff]
      %v2322 = vld [vmem:[%s2 + $0x50] sm:$0xff]
      %v2323 = vld [vmem:[%s2 + $0x58] sm:$0xff]
      %v2324 = vld [vmem:[%s2 + $0x60] sm:$0xff]
      %v2325 = vld [vmem:[%s2 + $0x68] sm:$0xff]
      %v2326 = vld [vmem:[%s2 + $0x70] sm:$0xff]
      %v2327 = vld [vmem:[%s2 + $0x78] sm:$0xff]
      %v2328 = vld [vmem:[%s2 + $0x80] sm:$0xff]
      %v2329 = vld [vmem:[%s2 + $0x88] sm:$0xff]
      %v2330 = vld [vmem:[%s2 + $0x90] sm:$0xff]
      %v2331 = vld [vmem:[%s2 + $0x98] sm:$0xff]
      %v2332 = vld [vmem:[%s2 + $0xa0] sm:$0xff]
      %v2333 = vld [vmem:[%s2 + $0xa8] sm:$0xff]
      %v2334 = vld [vmem:[%s2 + $0xb0] sm:$0xff]
      %v2335 = vld [vmem:[%s2 + $0xb8] sm:$0xff]
      %v2336 = vld [vmem:[%s2 + $0xc0] sm:$0xff]
      %v2337 = vld [vmem:[%s2 + $0xc8] sm:$0xff]
      %v2338 = vld [vmem:[%s2 + $0xd0] sm:$0xff]
      %v2339 = vld [vmem:[%s2 + $0xd8] sm:$0xff]
      %v2340 = vld [vmem:[%s2 + $0xe0] sm:$0xff]
      %v2341 = vld [vmem:[%s2 + $0xe8] sm:$0xff]
      %v2342 = vld [vmem:[%s2 + $0xf0] sm:$0xff]
      %v2343 = vld [vmem:[%s2 + $0xf8] sm:$0xff]
      %v2344 = vld [vmem:[%s2 + $0x100] sm:$0xff]
      %v2345 = vld [vmem:[%s2 + $0x108] sm:$0xff]
      %v2346 = vld [vmem:[%s2 + $0x110] sm:$0xff]
      %v2347 = vld [vmem:[%s2 + $0x118] sm:$0xff]
      %v2348 = vld [vmem:[%s2 + $0x120] sm:$0xff]
      %v2349 = vld [vmem:[%s2 + $0x128] sm:$0xff]
      %v2350 = vld [vmem:[%s2 + $0x130] sm:$0xff]
      %v2351 = vld [vmem:[%s2 + $0x138] sm:$0xff]
      %v2352 = vsel %vm2272, 0.0, %v2312
      %v2353 = vsel %vm2273, 0.0, %v2313
      %v2354 = vsel %vm2274, 0.0, %v2314
      %v2355 = vsel %vm2275, 0.0, %v2315
      %v2356 = vsel %vm2276, 0.0, %v2316
      %v2357 = vsel %vm2277, 0.0, %v2317
      %v2358 = vsel %vm2278, 0.0, %v2318
      %v2359 = vsel %vm2279, 0.0, %v2319
      %v2360 = vsel %vm2280, 0.0, %v2320
      %v2361 = vsel %vm2281, 0.0, %v2321
      %v2362 = vsel %vm2282, 0.0, %v2322
      %v2363 = vsel %vm2283, 0.0, %v2323
      %v2364 = vsel %vm2284, 0.0, %v2324
      %v2365 = vsel %vm2285, 0.0, %v2325
      %v2366 = vsel %vm2286, 0.0, %v2326
      %v2367 = vsel %vm2287, 0.0, %v2327
      %v2368 = vsel %vm2288, 0.0, %v2328
      %v2369 = vsel %vm2289, 0.0, %v2329
      %v2370 = vsel %vm2290, 0.0, %v2330
      %v2371 = vsel %vm2291, 0.0, %v2331
      %v2372 = vsel %vm2292, 0.0, %v2332
      %v2373 = vsel %vm2293, 0.0, %v2333
      %v2374 = vsel %vm2294, 0.0, %v2334
      %v2375 = vsel %vm2295, 0.0, %v2335
      %v2376 = vsel %vm2296, 0.0, %v2336
      %v2377 = vsel %vm2297, 0.0, %v2337
      %v2378 = vsel %vm2298, 0.0, %v2338
      %v2379 = vsel %vm2299, 0.0, %v2339
      %v2380 = vsel %vm2300, 0.0, %v2340
      %v2381 = vsel %vm2301, 0.0, %v2341
      %v2382 = vsel %vm2302, 0.0, %v2342
      %v2383 = vsel %vm2303, 0.0, %v2343
      %v2384 = vsel %vm2304, 0.0, %v2344
      %v2385 = vsel %vm2305, 0.0, %v2345
      %v2386 = vsel %vm2306, 0.0, %v2346
      %v2387 = vsel %vm2307, 0.0, %v2347
      %v2388 = vsel %vm2308, 0.0, %v2348
      %v2389 = vsel %vm2309, 0.0, %v2349
      %v2390 = vsel %vm2310, 0.0, %v2350
      %v2391 = vsel %vm2311, 0.0, %v2351
      %2393 = vset.pattern.permute.xlu0 0
      %2394 = vperm.xlu0 %2393, %v2352
      %v2395 = vpop.permute.xlu0 %2394
      %2398 = vset.pattern.permute.xlu0 0
      %2399 = vperm.xlu0 %2398, %v2353
      %v2400 = vpop.permute.xlu0 %2399
      %2403 = vset.pattern.permute.xlu0 0
      %2404 = vperm.xlu0 %2403, %v2354
      %v2405 = vpop.permute.xlu0 %2404
      %2408 = vset.pattern.permute.xlu0 0
      %2409 = vperm.xlu0 %2408, %v2355
      %v2410 = vpop.permute.xlu0 %2409
      %2413 = vset.pattern.permute.xlu0 0
      %2414 = vperm.xlu0 %2413, %v2356
      %v2415 = vpop.permute.xlu0 %2414
      %2418 = vset.pattern.permute.xlu0 0
      %2419 = vperm.xlu0 %2418, %v2357
      %v2420 = vpop.permute.xlu0 %2419
      %2423 = vset.pattern.permute.xlu0 0
      %2424 = vperm.xlu0 %2423, %v2358
      %v2425 = vpop.permute.xlu0 %2424
      %2428 = vset.pattern.permute.xlu0 0
      %2429 = vperm.xlu0 %2428, %v2359
      %v2430 = vpop.permute.xlu0 %2429
      %2433 = vset.pattern.permute.xlu0 0
      %2434 = vperm.xlu0 %2433, %v2360
      %v2435 = vpop.permute.xlu0 %2434
      %2438 = vset.pattern.permute.xlu0 0
      %2439 = vperm.xlu0 %2438, %v2361
      %v2440 = vpop.permute.xlu0 %2439
      %2443 = vset.pattern.permute.xlu0 0
      %2444 = vperm.xlu0 %2443, %v2362
      %v2445 = vpop.permute.xlu0 %2444
      %2448 = vset.pattern.permute.xlu0 0
      %2449 = vperm.xlu0 %2448, %v2363
      %v2450 = vpop.permute.xlu0 %2449
      %2453 = vset.pattern.permute.xlu0 0
      %2454 = vperm.xlu0 %2453, %v2364
      %v2455 = vpop.permute.xlu0 %2454
      %2458 = vset.pattern.permute.xlu0 0
      %2459 = vperm.xlu0 %2458, %v2365
      %v2460 = vpop.permute.xlu0 %2459
      %2463 = vset.pattern.permute.xlu0 0
      %2464 = vperm.xlu0 %2463, %v2366
      %v2465 = vpop.permute.xlu0 %2464
      %2468 = vset.pattern.permute.xlu0 0
      %2469 = vperm.xlu0 %2468, %v2367
      %v2470 = vpop.permute.xlu0 %2469
      %2473 = vset.pattern.permute.xlu0 0
      %2474 = vperm.xlu0 %2473, %v2368
      %v2475 = vpop.permute.xlu0 %2474
      %2478 = vset.pattern.permute.xlu0 0
      %2479 = vperm.xlu0 %2478, %v2369
      %v2480 = vpop.permute.xlu0 %2479
      %2483 = vset.pattern.permute.xlu0 0
      %2484 = vperm.xlu0 %2483, %v2370
      %v2485 = vpop.permute.xlu0 %2484
      %2488 = vset.pattern.permute.xlu0 0
      %2489 = vperm.xlu0 %2488, %v2371
      %v2490 = vpop.permute.xlu0 %2489
      %2493 = vset.pattern.permute.xlu0 0
      %2494 = vperm.xlu0 %2493, %v2372
      %v2495 = vpop.permute.xlu0 %2494
      %2498 = vset.pattern.permute.xlu0 0
      %2499 = vperm.xlu0 %2498, %v2373
      %v2500 = vpop.permute.xlu0 %2499
      %2503 = vset.pattern.permute.xlu0 0
      %2504 = vperm.xlu0 %2503, %v2374
      %v2505 = vpop.permute.xlu0 %2504
      %2508 = vset.pattern.permute.xlu0 0
      %2509 = vperm.xlu0 %2508, %v2375
      %v2510 = vpop.permute.xlu0 %2509
      %2513 = vset.pattern.permute.xlu0 0
      %2514 = vperm.xlu0 %2513, %v2376
      %v2515 = vpop.permute.xlu0 %2514
      %2518 = vset.pattern.permute.xlu0 0
      %2519 = vperm.xlu0 %2518, %v2377
      %v2520 = vpop.permute.xlu0 %2519
      %2523 = vset.pattern.permute.xlu0 0
      %2524 = vperm.xlu0 %2523, %v2378
      %v2525 = vpop.permute.xlu0 %2524
      %2528 = vset.pattern.permute.xlu0 0
      %2529 = vperm.xlu0 %2528, %v2379
      %v2530 = vpop.permute.xlu0 %2529
      %2533 = vset.pattern.permute.xlu0 0
      %2534 = vperm.xlu0 %2533, %v2380
      %v2535 = vpop.permute.xlu0 %2534
      %2538 = vset.pattern.permute.xlu0 0
      %2539 = vperm.xlu0 %2538, %v2381
      %v2540 = vpop.permute.xlu0 %2539
      %2543 = vset.pattern.permute.xlu0 0
      %2544 = vperm.xlu0 %2543, %v2382
      %v2545 = vpop.permute.xlu0 %2544
      %2548 = vset.pattern.permute.xlu0 0
      %2549 = vperm.xlu0 %2548, %v2383
      %v2550 = vpop.permute.xlu0 %2549
      %2553 = vset.pattern.permute.xlu0 0
      %2554 = vperm.xlu0 %2553, %v2384
      %v2555 = vpop.permute.xlu0 %2554
      %2558 = vset.pattern.permute.xlu0 0
      %2559 = vperm.xlu0 %2558, %v2385
      %v2560 = vpop.permute.xlu0 %2559
      %2563 = vset.pattern.permute.xlu0 0
      %2564 = vperm.xlu0 %2563, %v2386
      %v2565 = vpop.permute.xlu0 %2564
      %2568 = vset.pattern.permute.xlu0 0
      %2569 = vperm.xlu0 %2568, %v2387
      %v2570 = vpop.permute.xlu0 %2569
      %2573 = vset.pattern.permute.xlu0 0
      %2574 = vperm.xlu0 %2573, %v2388
      %v2575 = vpop.permute.xlu0 %2574
      %2578 = vset.pattern.permute.xlu0 0
      %2579 = vperm.xlu0 %2578, %v2389
      %v2580 = vpop.permute.xlu0 %2579
      %2583 = vset.pattern.permute.xlu0 0
      %2584 = vperm.xlu0 %2583, %v2390
      %v2585 = vpop.permute.xlu0 %2584
      %2588 = vset.pattern.permute.xlu0 0
      %2589 = vperm.xlu0 %2588, %v2391
      %v2590 = vpop.permute.xlu0 %2589
      %v2592 = vmul.f32 %v2025, %v2395
      %v2593 = vmul.f32 %v2026, %v2400
      %v2594 = vmul.f32 %v2027, %v2405
      %v2595 = vmul.f32 %v2028, %v2410
      %v2596 = vmul.f32 %v2029, %v2415
      %v2597 = vmul.f32 %v2030, %v2420
      %v2598 = vmul.f32 %v2031, %v2425
      %v2599 = vmul.f32 %v2032, %v2430
      %v2600 = vmul.f32 %v2033, %v2435
      %v2601 = vmul.f32 %v2034, %v2440
      %v2602 = vmul.f32 %v2035, %v2445
      %v2603 = vmul.f32 %v2036, %v2450
      %v2604 = vmul.f32 %v2037, %v2455
      %v2605 = vmul.f32 %v2038, %v2460
      %v2606 = vmul.f32 %v2039, %v2465
      %v2607 = vmul.f32 %v2040, %v2470
      %v2608 = vmul.f32 %v2041, %v2475
      %v2609 = vmul.f32 %v2042, %v2480
      %v2610 = vmul.f32 %v2043, %v2485
      %v2611 = vmul.f32 %v2044, %v2490
      %v2612 = vmul.f32 %v2045, %v2495
      %v2613 = vmul.f32 %v2046, %v2500
      %v2614 = vmul.f32 %v2047, %v2505
      %v2615 = vmul.f32 %v2048, %v2510
      %v2616 = vmul.f32 %v2049, %v2515
      %v2617 = vmul.f32 %v2050, %v2520
      %v2618 = vmul.f32 %v2051, %v2525
      %v2619 = vmul.f32 %v2052, %v2530
      %v2620 = vmul.f32 %v2053, %v2535
      %v2621 = vmul.f32 %v2054, %v2540
      %v2622 = vmul.f32 %v2055, %v2545
      %v2623 = vmul.f32 %v2056, %v2550
      %v2624 = vmul.f32 %v2057, %v2555
      %v2625 = vmul.f32 %v2058, %v2560
      %v2626 = vmul.f32 %v2059, %v2565
      %v2627 = vmul.f32 %v2060, %v2570
      %v2628 = vmul.f32 %v2061, %v2575
      %v2629 = vmul.f32 %v2062, %v2580
      %v2630 = vmul.f32 %v2063, %v2585
      %v2631 = vmul.f32 %v2064, %v2590
      %v2632 = vrot.slane %v2592, 7
      %v2633 = vrot.slane %v2593, 7
      %v2634 = vrot.slane %v2594, 7
      %v2635 = vrot.slane %v2595, 7
      %v2636 = vrot.slane %v2596, 7
      %v2637 = vrot.slane %v2597, 7
      %v2638 = vrot.slane %v2598, 7
      %v2639 = vrot.slane %v2599, 7
      %v2640 = vrot.slane %v2600, 7
      %v2641 = vrot.slane %v2601, 7
      %v2642 = vrot.slane %v2602, 7
      %v2643 = vrot.slane %v2603, 7
      %v2644 = vrot.slane %v2604, 7
      %v2645 = vrot.slane %v2605, 7
      %v2646 = vrot.slane %v2606, 7
      %v2647 = vrot.slane %v2607, 7
      %v2648 = vrot.slane %v2608, 7
      %v2649 = vrot.slane %v2609, 7
      %v2650 = vrot.slane %v2610, 7
      %v2651 = vrot.slane %v2611, 7
      %v2652 = vrot.slane %v2612, 7
      %v2653 = vrot.slane %v2613, 7
      %v2654 = vrot.slane %v2614, 7
      %v2655 = vrot.slane %v2615, 7
      %v2656 = vrot.slane %v2616, 7
      %v2657 = vrot.slane %v2617, 7
      %v2658 = vrot.slane %v2618, 7
      %v2659 = vrot.slane %v2619, 7
      %v2660 = vrot.slane %v2620, 7
      %v2661 = vrot.slane %v2621, 7
      %v2662 = vrot.slane %v2622, 7
      %v2663 = vrot.slane %v2623, 7
      %v2664 = vrot.slane %v2624, 7
      %v2665 = vrot.slane %v2625, 7
      %v2666 = vrot.slane %v2626, 7
      %v2667 = vrot.slane %v2627, 7
      %v2668 = vrot.slane %v2628, 7
      %v2669 = vrot.slane %v2629, 7
      %v2670 = vrot.slane %v2630, 7
      %v2671 = vrot.slane %v2631, 7
      %v2672 = vsel %vm717, %v2670, %v2671
      %v2673 = vsel %vm717, %v2669, %v2670
      %v2674 = vsel %vm717, %v2668, %v2669
      %v2675 = vsel %vm717, %v2667, %v2668
      %v2676 = vsel %vm717, %v2666, %v2667
      %v2677 = vsel %vm717, %v2665, %v2666
      %v2678 = vsel %vm717, %v2664, %v2665
      %v2679 = vsel %vm717, %v2663, %v2664
      %v2680 = vsel %vm717, %v2662, %v2663
      %v2681 = vsel %vm717, %v2661, %v2662
      %v2682 = vsel %vm717, %v2660, %v2661
      %v2683 = vsel %vm717, %v2659, %v2660
      %v2684 = vsel %vm717, %v2658, %v2659
      %v2685 = vsel %vm717, %v2657, %v2658
      %v2686 = vsel %vm717, %v2656, %v2657
      %v2687 = vsel %vm717, %v2655, %v2656
      %v2688 = vsel %vm717, %v2654, %v2655
      %v2689 = vsel %vm717, %v2653, %v2654
      %v2690 = vsel %vm717, %v2652, %v2653
      %v2691 = vsel %vm717, %v2651, %v2652
      %v2692 = vsel %vm717, %v2650, %v2651
      %v2693 = vsel %vm717, %v2649, %v2650
      %v2694 = vsel %vm717, %v2648, %v2649
      %v2695 = vsel %vm717, %v2647, %v2648
      %v2696 = vsel %vm717, %v2646, %v2647
      %v2697 = vsel %vm717, %v2645, %v2646
      %v2698 = vsel %vm717, %v2644, %v2645
      %v2699 = vsel %vm717, %v2643, %v2644
      %v2700 = vsel %vm717, %v2642, %v2643
      %v2701 = vsel %vm717, %v2641, %v2642
      %v2702 = vsel %vm717, %v2640, %v2641
      %v2703 = vsel %vm717, %v2639, %v2640
      %v2704 = vsel %vm717, %v2638, %v2639
      %v2705 = vsel %vm717, %v2637, %v2638
      %v2706 = vsel %vm717, %v2636, %v2637
      %v2707 = vsel %vm717, %v2635, %v2636
      %v2708 = vsel %vm717, %v2634, %v2635
      %v2709 = vsel %vm717, %v2633, %v2634
      %v2710 = vsel %vm717, %v2632, %v2633
      %v2711 = vsel %vm717, %v2671, %v2632
      %v2712 = vrot.slane %v2592, 1
      %v2713 = vrot.slane %v2593, 1
      %v2714 = vrot.slane %v2594, 1
      %v2715 = vrot.slane %v2595, 1
      %v2716 = vrot.slane %v2596, 1
      %v2717 = vrot.slane %v2597, 1
      %v2718 = vrot.slane %v2598, 1
      %v2719 = vrot.slane %v2599, 1
      %v2720 = vrot.slane %v2600, 1
      %v2721 = vrot.slane %v2601, 1
      %v2722 = vrot.slane %v2602, 1
      %v2723 = vrot.slane %v2603, 1
      %v2724 = vrot.slane %v2604, 1
      %v2725 = vrot.slane %v2605, 1
      %v2726 = vrot.slane %v2606, 1
      %v2727 = vrot.slane %v2607, 1
      %v2728 = vrot.slane %v2608, 1
      %v2729 = vrot.slane %v2609, 1
      %v2730 = vrot.slane %v2610, 1
      %v2731 = vrot.slane %v2611, 1
      %v2732 = vrot.slane %v2612, 1
      %v2733 = vrot.slane %v2613, 1
      %v2734 = vrot.slane %v2614, 1
      %v2735 = vrot.slane %v2615, 1
      %v2736 = vrot.slane %v2616, 1
      %v2737 = vrot.slane %v2617, 1
      %v2738 = vrot.slane %v2618, 1
      %v2739 = vrot.slane %v2619, 1
      %v2740 = vrot.slane %v2620, 1
      %v2741 = vrot.slane %v2621, 1
      %v2742 = vrot.slane %v2622, 1
      %v2743 = vrot.slane %v2623, 1
      %v2744 = vrot.slane %v2624, 1
      %v2745 = vrot.slane %v2625, 1
      %v2746 = vrot.slane %v2626, 1
      %v2747 = vrot.slane %v2627, 1
      %v2748 = vrot.slane %v2628, 1
      %v2749 = vrot.slane %v2629, 1
      %v2750 = vrot.slane %v2630, 1
      %v2751 = vrot.slane %v2631, 1
      %v2752 = vsel %vm814, %v2750, %v2751
      %v2753 = vsel %vm814, %v2749, %v2750
      %v2754 = vsel %vm814, %v2748, %v2749
      %v2755 = vsel %vm814, %v2747, %v2748
      %v2756 = vsel %vm814, %v2746, %v2747
      %v2757 = vsel %vm814, %v2745, %v2746
      %v2758 = vsel %vm814, %v2744, %v2745
      %v2759 = vsel %vm814, %v2743, %v2744
      %v2760 = vsel %vm814, %v2742, %v2743
      %v2761 = vsel %vm814, %v2741, %v2742
      %v2762 = vsel %vm814, %v2740, %v2741
      %v2763 = vsel %vm814, %v2739, %v2740
      %v2764 = vsel %vm814, %v2738, %v2739
      %v2765 = vsel %vm814, %v2737, %v2738
      %v2766 = vsel %vm814, %v2736, %v2737
      %v2767 = vsel %vm814, %v2735, %v2736
      %v2768 = vsel %vm814, %v2734, %v2735
      %v2769 = vsel %vm814, %v2733, %v2734
      %v2770 = vsel %vm814, %v2732, %v2733
      %v2771 = vsel %vm814, %v2731, %v2732
      %v2772 = vsel %vm814, %v2730, %v2731
      %v2773 = vsel %vm814, %v2729, %v2730
      %v2774 = vsel %vm814, %v2728, %v2729
      %v2775 = vsel %vm814, %v2727, %v2728
      %v2776 = vsel %vm814, %v2726, %v2727
      %v2777 = vsel %vm814, %v2725, %v2726
      %v2778 = vsel %vm814, %v2724, %v2725
      %v2779 = vsel %vm814, %v2723, %v2724
      %v2780 = vsel %vm814, %v2722, %v2723
      %v2781 = vsel %vm814, %v2721, %v2722
      %v2782 = vsel %vm814, %v2720, %v2721
      %v2783 = vsel %vm814, %v2719, %v2720
      %v2784 = vsel %vm814, %v2718, %v2719
      %v2785 = vsel %vm814, %v2717, %v2718
      %v2786 = vsel %vm814, %v2716, %v2717
      %v2787 = vsel %vm814, %v2715, %v2716
      %v2788 = vsel %vm814, %v2714, %v2715
      %v2789 = vsel %vm814, %v2713, %v2714
      %v2790 = vsel %vm814, %v2712, %v2713
      %v2791 = vsel %vm814, %v2751, %v2712
      %v2792 = vpack.c.bf16 %v2710, %v2711
      %v2793 = vpack.c.bf16 %v2708, %v2709
      %v2794 = vpack.c.bf16 %v2706, %v2707
      %v2795 = vpack.c.bf16 %v2704, %v2705
      %v2796 = vpack.c.bf16 %v2702, %v2703
      %v2797 = vpack.c.bf16 %v2700, %v2701
      %v2798 = vpack.c.bf16 %v2698, %v2699
      %v2799 = vpack.c.bf16 %v2696, %v2697
      %v2800 = vpack.c.bf16 %v2694, %v2695
      %v2801 = vpack.c.bf16 %v2692, %v2693
      %v2802 = vpack.c.bf16 %v2690, %v2691
      %v2803 = vpack.c.bf16 %v2688, %v2689
      %v2804 = vpack.c.bf16 %v2686, %v2687
      %v2805 = vpack.c.bf16 %v2684, %v2685
      %v2806 = vpack.c.bf16 %v2682, %v2683
      %v2807 = vpack.c.bf16 %v2680, %v2681
      %v2808 = vpack.c.bf16 %v2593, %v2592
      %v2809 = vpack.c.bf16 %v2595, %v2594
      %v2810 = vpack.c.bf16 %v2597, %v2596
      %v2811 = vpack.c.bf16 %v2599, %v2598
      %v2812 = vpack.c.bf16 %v2601, %v2600
      %v2813 = vpack.c.bf16 %v2603, %v2602
      %v2814 = vpack.c.bf16 %v2605, %v2604
      %v2815 = vpack.c.bf16 %v2607, %v2606
      %v2816 = vpack.c.bf16 %v2609, %v2608
      %v2817 = vpack.c.bf16 %v2611, %v2610
      %v2818 = vpack.c.bf16 %v2613, %v2612
      %v2819 = vpack.c.bf16 %v2615, %v2614
      %v2820 = vpack.c.bf16 %v2617, %v2616
      %v2821 = vpack.c.bf16 %v2619, %v2618
      %v2822 = vpack.c.bf16 %v2621, %v2620
      %v2823 = vpack.c.bf16 %v2623, %v2622
      %v2824 = vpack.c.bf16 %v2789, %v2790
      %v2825 = vpack.c.bf16 %v2787, %v2788
      %v2826 = vpack.c.bf16 %v2785, %v2786
      %v2827 = vpack.c.bf16 %v2783, %v2784
      %v2828 = vpack.c.bf16 %v2781, %v2782
      %v2829 = vpack.c.bf16 %v2779, %v2780
      %v2830 = vpack.c.bf16 %v2777, %v2778
      %v2831 = vpack.c.bf16 %v2775, %v2776
      %v2832 = vpack.c.bf16 %v2773, %v2774
      %v2833 = vpack.c.bf16 %v2771, %v2772
      %v2834 = vpack.c.bf16 %v2769, %v2770
      %v2835 = vpack.c.bf16 %v2767, %v2768
      %v2836 = vpack.c.bf16 %v2765, %v2766
      %v2837 = vpack.c.bf16 %v2763, %v2764
      %v2838 = vpack.c.bf16 %v2761, %v2762
      %v2839 = vpack.c.bf16 %v2759, %v2760
      %v2840 = vpack.c.bf16 %v2678, %v2679
      %v2841 = vpack.c.bf16 %v2676, %v2677
      %v2842 = vpack.c.bf16 %v2625, %v2624
      %v2843 = vpack.c.bf16 %v2627, %v2626
      %v2844 = vpack.c.bf16 %v2757, %v2758
      %v2845 = vpack.c.bf16 %v2755, %v2756
      %v2846 = vpack.c.bf16 %v2674, %v2675
      %v2847 = vpack.c.bf16 %v2672, %v2673
      %v2848 = vpack.c.bf16 %v2629, %v2628
      %v2849 = vpack.c.bf16 %v2631, %v2630
      %v2850 = vpack.c.bf16 %v2753, %v2754
      %v2851 = vpack.c.bf16 %v2791, %v2752
      %2868 = vrot.lane.b32.xlu0 %v2808, 4
      %v2869 = vpop.permute.xlu0 %2868
      %2870 = vrot.lane.b32.xlu0 %v2809, 4
      %v2871 = vpop.permute.xlu0 %2870
      %2872 = vrot.lane.b32.xlu0 %v2810, 4
      %v2873 = vpop.permute.xlu0 %2872
      %2874 = vrot.lane.b32.xlu0 %v2811, 4
      %v2875 = vpop.permute.xlu0 %2874
      %2876 = vrot.lane.b32.xlu0 %v2812, 4
      %v2877 = vpop.permute.xlu0 %2876
      %2878 = vrot.lane.b32.xlu0 %v2813, 4
      %v2879 = vpop.permute.xlu0 %2878
      %2880 = vrot.lane.b32.xlu0 %v2814, 4
      %v2881 = vpop.permute.xlu0 %2880
      %2882 = vrot.lane.b32.xlu0 %v2815, 4
      %v2883 = vpop.permute.xlu0 %2882
      %2884 = vrot.lane.b32.xlu0 %v2816, 4
      %v2885 = vpop.permute.xlu0 %2884
      %2886 = vrot.lane.b32.xlu0 %v2817, 4
      %v2887 = vpop.permute.xlu0 %2886
      %2888 = vrot.lane.b32.xlu0 %v2818, 4
      %v2889 = vpop.permute.xlu0 %2888
      %2890 = vrot.lane.b32.xlu0 %v2819, 4
      %v2891 = vpop.permute.xlu0 %2890
      %2892 = vrot.lane.b32.xlu0 %v2820, 4
      %v2893 = vpop.permute.xlu0 %2892
      %2894 = vrot.lane.b32.xlu0 %v2821, 4
      %v2895 = vpop.permute.xlu0 %2894
      %2896 = vrot.lane.b32.xlu0 %v2822, 4
      %v2897 = vpop.permute.xlu0 %2896
      %2898 = vrot.lane.b32.xlu0 %v2823, 4
      %v2899 = vpop.permute.xlu0 %2898
      %2916 = vrot.lane.b32.xlu0 %v2824, 8
      %v2917 = vpop.permute.xlu0 %2916
      %2918 = vrot.lane.b32.xlu0 %v2825, 8
      %v2919 = vpop.permute.xlu0 %2918
      %2920 = vrot.lane.b32.xlu0 %v2826, 8
      %v2921 = vpop.permute.xlu0 %2920
      %2922 = vrot.lane.b32.xlu0 %v2827, 8
      %v2923 = vpop.permute.xlu0 %2922
      %2924 = vrot.lane.b32.xlu0 %v2828, 8
      %v2925 = vpop.permute.xlu0 %2924
      %2926 = vrot.lane.b32.xlu0 %v2829, 8
      %v2927 = vpop.permute.xlu0 %2926
      %2928 = vrot.lane.b32.xlu0 %v2830, 8
      %v2929 = vpop.permute.xlu0 %2928
      %2930 = vrot.lane.b32.xlu0 %v2831, 8
      %v2931 = vpop.permute.xlu0 %2930
      %2932 = vrot.lane.b32.xlu0 %v2832, 8
      %v2933 = vpop.permute.xlu0 %2932
      %2934 = vrot.lane.b32.xlu0 %v2833, 8
      %v2935 = vpop.permute.xlu0 %2934
      %2936 = vrot.lane.b32.xlu0 %v2834, 8
      %v2937 = vpop.permute.xlu0 %2936
      %2938 = vrot.lane.b32.xlu0 %v2835, 8
      %v2939 = vpop.permute.xlu0 %2938
      %2940 = vrot.lane.b32.xlu0 %v2836, 8
      %v2941 = vpop.permute.xlu0 %2940
      %2942 = vrot.lane.b32.xlu0 %v2837, 8
      %v2943 = vpop.permute.xlu0 %2942
      %2944 = vrot.lane.b32.xlu0 %v2838, 8
      %v2945 = vpop.permute.xlu0 %2944
      %2946 = vrot.lane.b32.xlu0 %v2839, 8
      %v2947 = vpop.permute.xlu0 %2946
      %2964 = vrot.lane.b32.xlu0 %v2794, 12
      %v2965 = vpop.permute.xlu0 %2964
      %2966 = vrot.lane.b32.xlu0 %v2795, 12
      %v2967 = vpop.permute.xlu0 %2966
      %2968 = vrot.lane.b32.xlu0 %v2796, 12
      %v2969 = vpop.permute.xlu0 %2968
      %2970 = vrot.lane.b32.xlu0 %v2797, 12
      %v2971 = vpop.permute.xlu0 %2970
      %2972 = vrot.lane.b32.xlu0 %v2798, 12
      %v2973 = vpop.permute.xlu0 %2972
      %2974 = vrot.lane.b32.xlu0 %v2799, 12
      %v2975 = vpop.permute.xlu0 %2974
      %2976 = vrot.lane.b32.xlu0 %v2800, 12
      %v2977 = vpop.permute.xlu0 %2976
      %2978 = vrot.lane.b32.xlu0 %v2801, 12
      %v2979 = vpop.permute.xlu0 %2978
      %2980 = vrot.lane.b32.xlu0 %v2802, 12
      %v2981 = vpop.permute.xlu0 %2980
      %2982 = vrot.lane.b32.xlu0 %v2803, 12
      %v2983 = vpop.permute.xlu0 %2982
      %2984 = vrot.lane.b32.xlu0 %v2804, 12
      %v2985 = vpop.permute.xlu0 %2984
      %2986 = vrot.lane.b32.xlu0 %v2805, 12
      %v2987 = vpop.permute.xlu0 %2986
      %2988 = vrot.lane.b32.xlu0 %v2806, 12
      %v2989 = vpop.permute.xlu0 %2988
      %2990 = vrot.lane.b32.xlu0 %v2807, 12
      %v2991 = vpop.permute.xlu0 %2990
      %2992 = vrot.lane.b32.xlu0 %v2840, 12
      %v2993 = vpop.permute.xlu0 %2992
      %2994 = vrot.lane.b32.xlu0 %v2841, 12
      %v2995 = vpop.permute.xlu0 %2994
      %2998 = vrot.lane.b32.xlu0 %v2810, 16
      %v2999 = vpop.permute.xlu0 %2998
      %3000 = vrot.lane.b32.xlu0 %v2811, 16
      %v3001 = vpop.permute.xlu0 %3000
      %3002 = vrot.lane.b32.xlu0 %v2812, 16
      %v3003 = vpop.permute.xlu0 %3002
      %3004 = vrot.lane.b32.xlu0 %v2813, 16
      %v3005 = vpop.permute.xlu0 %3004
      %3006 = vrot.lane.b32.xlu0 %v2814, 16
      %v3007 = vpop.permute.xlu0 %3006
      %3008 = vrot.lane.b32.xlu0 %v2815, 16
      %v3009 = vpop.permute.xlu0 %3008
      %3010 = vrot.lane.b32.xlu0 %v2816, 16
      %v3011 = vpop.permute.xlu0 %3010
      %3012 = vrot.lane.b32.xlu0 %v2817, 16
      %v3013 = vpop.permute.xlu0 %3012
      %3014 = vrot.lane.b32.xlu0 %v2818, 16
      %v3015 = vpop.permute.xlu0 %3014
      %3016 = vrot.lane.b32.xlu0 %v2819, 16
      %v3017 = vpop.permute.xlu0 %3016
      %3018 = vrot.lane.b32.xlu0 %v2820, 16
      %v3019 = vpop.permute.xlu0 %3018
      %3020 = vrot.lane.b32.xlu0 %v2821, 16
      %v3021 = vpop.permute.xlu0 %3020
      %3022 = vrot.lane.b32.xlu0 %v2822, 16
      %v3023 = vpop.permute.xlu0 %3022
      %3024 = vrot.lane.b32.xlu0 %v2823, 16
      %v3025 = vpop.permute.xlu0 %3024
      %3026 = vrot.lane.b32.xlu0 %v2842, 16
      %v3027 = vpop.permute.xlu0 %3026
      %3028 = vrot.lane.b32.xlu0 %v2843, 16
      %v3029 = vpop.permute.xlu0 %3028
      %3032 = vrot.lane.b32.xlu0 %v2826, 20
      %v3033 = vpop.permute.xlu0 %3032
      %3034 = vrot.lane.b32.xlu0 %v2827, 20
      %v3035 = vpop.permute.xlu0 %3034
      %3036 = vrot.lane.b32.xlu0 %v2828, 20
      %v3037 = vpop.permute.xlu0 %3036
      %3038 = vrot.lane.b32.xlu0 %v2829, 20
      %v3039 = vpop.permute.xlu0 %3038
      %3040 = vrot.lane.b32.xlu0 %v2830, 20
      %v3041 = vpop.permute.xlu0 %3040
      %3042 = vrot.lane.b32.xlu0 %v2831, 20
      %v3043 = vpop.permute.xlu0 %3042
      %3044 = vrot.lane.b32.xlu0 %v2832, 20
      %v3045 = vpop.permute.xlu0 %3044
      %3046 = vrot.lane.b32.xlu0 %v2833, 20
      %v3047 = vpop.permute.xlu0 %3046
      %3048 = vrot.lane.b32.xlu0 %v2834, 20
      %v3049 = vpop.permute.xlu0 %3048
      %3050 = vrot.lane.b32.xlu0 %v2835, 20
      %v3051 = vpop.permute.xlu0 %3050
      %3052 = vrot.lane.b32.xlu0 %v2836, 20
      %v3053 = vpop.permute.xlu0 %3052
      %3054 = vrot.lane.b32.xlu0 %v2837, 20
      %v3055 = vpop.permute.xlu0 %3054
      %3056 = vrot.lane.b32.xlu0 %v2838, 20
      %v3057 = vpop.permute.xlu0 %3056
      %3058 = vrot.lane.b32.xlu0 %v2839, 20
      %v3059 = vpop.permute.xlu0 %3058
      %3060 = vrot.lane.b32.xlu0 %v2844, 20
      %v3061 = vpop.permute.xlu0 %3060
      %3062 = vrot.lane.b32.xlu0 %v2845, 20
      %v3063 = vpop.permute.xlu0 %3062
      %3066 = vrot.lane.b32.xlu0 %v2796, 24
      %v3067 = vpop.permute.xlu0 %3066
      %3068 = vrot.lane.b32.xlu0 %v2797, 24
      %v3069 = vpop.permute.xlu0 %3068
      %3070 = vrot.lane.b32.xlu0 %v2798, 24
      %v3071 = vpop.permute.xlu0 %3070
      %3072 = vrot.lane.b32.xlu0 %v2799, 24
      %v3073 = vpop.permute.xlu0 %3072
      %3074 = vrot.lane.b32.xlu0 %v2800, 24
      %v3075 = vpop.permute.xlu0 %3074
      %3076 = vrot.lane.b32.xlu0 %v2801, 24
      %v3077 = vpop.permute.xlu0 %3076
      %3078 = vrot.lane.b32.xlu0 %v2802, 24
      %v3079 = vpop.permute.xlu0 %3078
      %3080 = vrot.lane.b32.xlu0 %v2803, 24
      %v3081 = vpop.permute.xlu0 %3080
      %3082 = vrot.lane.b32.xlu0 %v2804, 24
      %v3083 = vpop.permute.xlu0 %3082
      %3084 = vrot.lane.b32.xlu0 %v2805, 24
      %v3085 = vpop.permute.xlu0 %3084
      %3086 = vrot.lane.b32.xlu0 %v2806, 24
      %v3087 = vpop.permute.xlu0 %3086
      %3088 = vrot.lane.b32.xlu0 %v2807, 24
      %v3089 = vpop.permute.xlu0 %3088
      %3090 = vrot.lane.b32.xlu0 %v2840, 24
      %v3091 = vpop.permute.xlu0 %3090
      %3092 = vrot.lane.b32.xlu0 %v2841, 24
      %v3093 = vpop.permute.xlu0 %3092
      %3094 = vrot.lane.b32.xlu0 %v2846, 24
      %v3095 = vpop.permute.xlu0 %3094
      %3096 = vrot.lane.b32.xlu0 %v2847, 24
      %v3097 = vpop.permute.xlu0 %3096
      %3100 = vrot.lane.b32.xlu0 %v2812, 28
      %v3101 = vpop.permute.xlu0 %3100
      %3102 = vrot.lane.b32.xlu0 %v2813, 28
      %v3103 = vpop.permute.xlu0 %3102
      %3104 = vrot.lane.b32.xlu0 %v2814, 28
      %v3105 = vpop.permute.xlu0 %3104
      %3106 = vrot.lane.b32.xlu0 %v2815, 28
      %v3107 = vpop.permute.xlu0 %3106
      %3108 = vrot.lane.b32.xlu0 %v2816, 28
      %v3109 = vpop.permute.xlu0 %3108
      %3110 = vrot.lane.b32.xlu0 %v2817, 28
      %v3111 = vpop.permute.xlu0 %3110
      %3112 = vrot.lane.b32.xlu0 %v2818, 28
      %v3113 = vpop.permute.xlu0 %3112
      %3114 = vrot.lane.b32.xlu0 %v2819, 28
      %v3115 = vpop.permute.xlu0 %3114
      %3116 = vrot.lane.b32.xlu0 %v2820, 28
      %v3117 = vpop.permute.xlu0 %3116
      %3118 = vrot.lane.b32.xlu0 %v2821, 28
      %v3119 = vpop.permute.xlu0 %3118
      %3120 = vrot.lane.b32.xlu0 %v2822, 28
      %v3121 = vpop.permute.xlu0 %3120
      %3122 = vrot.lane.b32.xlu0 %v2823, 28
      %v3123 = vpop.permute.xlu0 %3122
      %3124 = vrot.lane.b32.xlu0 %v2842, 28
      %v3125 = vpop.permute.xlu0 %3124
      %3126 = vrot.lane.b32.xlu0 %v2843, 28
      %v3127 = vpop.permute.xlu0 %3126
      %3128 = vrot.lane.b32.xlu0 %v2848, 28
      %v3129 = vpop.permute.xlu0 %3128
      %3130 = vrot.lane.b32.xlu0 %v2849, 28
      %v3131 = vpop.permute.xlu0 %3130
      %3134 = vrot.lane.b32.xlu0 %v2828, 32
      %v3135 = vpop.permute.xlu0 %3134
      %3136 = vrot.lane.b32.xlu0 %v2829, 32
      %v3137 = vpop.permute.xlu0 %3136
      %3138 = vrot.lane.b32.xlu0 %v2830, 32
      %v3139 = vpop.permute.xlu0 %3138
      %3140 = vrot.lane.b32.xlu0 %v2831, 32
      %v3141 = vpop.permute.xlu0 %3140
      %3142 = vrot.lane.b32.xlu0 %v2832, 32
      %v3143 = vpop.permute.xlu0 %3142
      %3144 = vrot.lane.b32.xlu0 %v2833, 32
      %v3145 = vpop.permute.xlu0 %3144
      %3146 = vrot.lane.b32.xlu0 %v2834, 32
      %v3147 = vpop.permute.xlu0 %3146
      %3148 = vrot.lane.b32.xlu0 %v2835, 32
      %v3149 = vpop.permute.xlu0 %3148
      %3150 = vrot.lane.b32.xlu0 %v2836, 32
      %v3151 = vpop.permute.xlu0 %3150
      %3152 = vrot.lane.b32.xlu0 %v2837, 32
      %v3153 = vpop.permute.xlu0 %3152
      %3154 = vrot.lane.b32.xlu0 %v2838, 32
      %v3155 = vpop.permute.xlu0 %3154
      %3156 = vrot.lane.b32.xlu0 %v2839, 32
      %v3157 = vpop.permute.xlu0 %3156
      %3158 = vrot.lane.b32.xlu0 %v2844, 32
      %v3159 = vpop.permute.xlu0 %3158
      %3160 = vrot.lane.b32.xlu0 %v2845, 32
      %v3161 = vpop.permute.xlu0 %3160
      %3162 = vrot.lane.b32.xlu0 %v2850, 32
      %v3163 = vpop.permute.xlu0 %3162
      %3164 = vrot.lane.b32.xlu0 %v2851, 32
      %v3165 = vpop.permute.xlu0 %3164
      %v3168 = vsel %vm1325, %v2792, %v2869
      %v3171 = vsel %vm1325, %v2793, %v2871
      %v3174 = vsel %vm1325, %v2794, %v2873
      %v3177 = vsel %vm1325, %v2795, %v2875
      %v3180 = vsel %vm1325, %v2796, %v2877
      %v3183 = vsel %vm1325, %v2797, %v2879
      %v3186 = vsel %vm1325, %v2798, %v2881
      %v3189 = vsel %vm1325, %v2799, %v2883
      %v3192 = vsel %vm1325, %v2800, %v2885
      %v3195 = vsel %vm1325, %v2801, %v2887
      %v3198 = vsel %vm1325, %v2802, %v2889
      %v3201 = vsel %vm1325, %v2803, %v2891
      %v3204 = vsel %vm1325, %v2804, %v2893
      %v3207 = vsel %vm1325, %v2805, %v2895
      %v3210 = vsel %vm1325, %v2806, %v2897
      %v3213 = vsel %vm1325, %v2807, %v2899
      %v3215 = vsel %vm1386, %v3168, %v2917
      %v3217 = vsel %vm1386, %v3171, %v2919
      %v3219 = vsel %vm1386, %v3174, %v2921
      %v3221 = vsel %vm1386, %v3177, %v2923
      %v3223 = vsel %vm1386, %v3180, %v2925
      %v3225 = vsel %vm1386, %v3183, %v2927
      %v3227 = vsel %vm1386, %v3186, %v2929
      %v3229 = vsel %vm1386, %v3189, %v2931
      %v3231 = vsel %vm1386, %v3192, %v2933
      %v3233 = vsel %vm1386, %v3195, %v2935
      %v3235 = vsel %vm1386, %v3198, %v2937
      %v3237 = vsel %vm1386, %v3201, %v2939
      %v3239 = vsel %vm1386, %v3204, %v2941
      %v3241 = vsel %vm1386, %v3207, %v2943
      %v3243 = vsel %vm1386, %v3210, %v2945
      %v3245 = vsel %vm1386, %v3213, %v2947
      %v3247 = vsel %vm1427, %v3215, %v2965
      %v3249 = vsel %vm1427, %v3217, %v2967
      %v3251 = vsel %vm1427, %v3219, %v2969
      %v3253 = vsel %vm1427, %v3221, %v2971
      %v3255 = vsel %vm1427, %v3223, %v2973
      %v3257 = vsel %vm1427, %v3225, %v2975
      %v3259 = vsel %vm1427, %v3227, %v2977
      %v3261 = vsel %vm1427, %v3229, %v2979
      %v3263 = vsel %vm1427, %v3231, %v2981
      %v3265 = vsel %vm1427, %v3233, %v2983
      %v3267 = vsel %vm1427, %v3235, %v2985
      %v3269 = vsel %vm1427, %v3237, %v2987
      %v3271 = vsel %vm1427, %v3239, %v2989
      %v3273 = vsel %vm1427, %v3241, %v2991
      %v3275 = vsel %vm1427, %v3243, %v2993
      %v3277 = vsel %vm1427, %v3245, %v2995
      %v3279 = vsel %vm1468, %v3247, %v2999
      %v3281 = vsel %vm1468, %v3249, %v3001
      %v3283 = vsel %vm1468, %v3251, %v3003
      %v3285 = vsel %vm1468, %v3253, %v3005
      %v3287 = vsel %vm1468, %v3255, %v3007
      %v3289 = vsel %vm1468, %v3257, %v3009
      %v3291 = vsel %vm1468, %v3259, %v3011
      %v3293 = vsel %vm1468, %v3261, %v3013
      %v3295 = vsel %vm1468, %v3263, %v3015
      %v3297 = vsel %vm1468, %v3265, %v3017
      %v3299 = vsel %vm1468, %v3267, %v3019
      %v3301 = vsel %vm1468, %v3269, %v3021
      %v3303 = vsel %vm1468, %v3271, %v3023
      %v3305 = vsel %vm1468, %v3273, %v3025
      %v3307 = vsel %vm1468, %v3275, %v3027
      %v3309 = vsel %vm1468, %v3277, %v3029
      %v3311 = vsel %vm1509, %v3279, %v3033
      %v3313 = vsel %vm1509, %v3281, %v3035
      %v3315 = vsel %vm1509, %v3283, %v3037
      %v3317 = vsel %vm1509, %v3285, %v3039
      %v3319 = vsel %vm1509, %v3287, %v3041
      %v3321 = vsel %vm1509, %v3289, %v3043
      %v3323 = vsel %vm1509, %v3291, %v3045
      %v3325 = vsel %vm1509, %v3293, %v3047
      %v3327 = vsel %vm1509, %v3295, %v3049
      %v3329 = vsel %vm1509, %v3297, %v3051
      %v3331 = vsel %vm1509, %v3299, %v3053
      %v3333 = vsel %vm1509, %v3301, %v3055
      %v3335 = vsel %vm1509, %v3303, %v3057
      %v3337 = vsel %vm1509, %v3305, %v3059
      %v3339 = vsel %vm1509, %v3307, %v3061
      %v3341 = vsel %vm1509, %v3309, %v3063
      %v3343 = vsel %vm1550, %v3311, %v3067
      %v3345 = vsel %vm1550, %v3313, %v3069
      %v3347 = vsel %vm1550, %v3315, %v3071
      %v3349 = vsel %vm1550, %v3317, %v3073
      %v3351 = vsel %vm1550, %v3319, %v3075
      %v3353 = vsel %vm1550, %v3321, %v3077
      %v3355 = vsel %vm1550, %v3323, %v3079
      %v3357 = vsel %vm1550, %v3325, %v3081
      %v3359 = vsel %vm1550, %v3327, %v3083
      %v3361 = vsel %vm1550, %v3329, %v3085
      %v3363 = vsel %vm1550, %v3331, %v3087
      %v3365 = vsel %vm1550, %v3333, %v3089
      %v3367 = vsel %vm1550, %v3335, %v3091
      %v3369 = vsel %vm1550, %v3337, %v3093
      %v3371 = vsel %vm1550, %v3339, %v3095
      %v3373 = vsel %vm1550, %v3341, %v3097
      %v3375 = vsel %vm1591, %v3343, %v3101
      %v3377 = vsel %vm1591, %v3345, %v3103
      %v3379 = vsel %vm1591, %v3347, %v3105
      %v3381 = vsel %vm1591, %v3349, %v3107
      %v3383 = vsel %vm1591, %v3351, %v3109
      %v3385 = vsel %vm1591, %v3353, %v3111
      %v3387 = vsel %vm1591, %v3355, %v3113
      %v3389 = vsel %vm1591, %v3357, %v3115
      %v3391 = vsel %vm1591, %v3359, %v3117
      %v3393 = vsel %vm1591, %v3361, %v3119
      %v3395 = vsel %vm1591, %v3363, %v3121
      %v3397 = vsel %vm1591, %v3365, %v3123
      %v3399 = vsel %vm1591, %v3367, %v3125
      %v3401 = vsel %vm1591, %v3369, %v3127
      %v3403 = vsel %vm1591, %v3371, %v3129
      %v3405 = vsel %vm1591, %v3373, %v3131
      %v3407 = vsel %vm1632, %v3375, %v3135
      %v3409 = vsel %vm1632, %v3377, %v3137
      %v3411 = vsel %vm1632, %v3379, %v3139
      %v3413 = vsel %vm1632, %v3381, %v3141
      %v3415 = vsel %vm1632, %v3383, %v3143
      %v3417 = vsel %vm1632, %v3385, %v3145
      %v3419 = vsel %vm1632, %v3387, %v3147
      %v3421 = vsel %vm1632, %v3389, %v3149
      %v3423 = vsel %vm1632, %v3391, %v3151
      %v3425 = vsel %vm1632, %v3393, %v3153
      %v3427 = vsel %vm1632, %v3395, %v3155
      %v3429 = vsel %vm1632, %v3397, %v3157
      %v3431 = vsel %vm1632, %v3399, %v3159
      %v3433 = vsel %vm1632, %v3401, %v3161
      %v3435 = vsel %vm1632, %v3403, %v3163
      %v3437 = vsel %vm1632, %v3405, %v3165
      %v3438 = vld [vmem:[%s4] sm:$0xf]
      %v3439 = vld [vmem:[%s4 + $0x4] sm:$0xf]
      %v3440 = vld [vmem:[%s4 + $0x8] sm:$0xf]
      %v3441 = vld [vmem:[%s4 + $0xc] sm:$0xf]
      %v3442 = vld [vmem:[%s4 + $0x10] sm:$0x3]
      %v3448 = vunpack.c.l.b16 %v3438
      %v3449 = vunpack.c.l.b16 %v3439
      %v3450 = vunpack.c.l.b16 %v3440
      %v3451 = vunpack.c.l.b16 %v3441
      %v3452 = vunpack.c.l.b16 %v3442
      %v3453 = vpack.c.b16 %v3449, %v3448
      %v3454 = vpack.c.b16 %v3451, %v3450
      %v3455 = vpack.c.b16 %v3452, %v3452
      %v3458 = vsel %vm1693, %v3407, 0
      %v3460 = vsel %vm1693, %v3409, 0
      %v3462 = vsel %vm1693, %v3411, 0
      %v3464 = vsel %vm1693, %v3413, 0
      %v3466 = vsel %vm1693, %v3415, 0
      %v3468 = vsel %vm1693, %v3417, 0
      %v3470 = vsel %vm1693, %v3419, 0
      %v3472 = vsel %vm1693, %v3421, 0
      %v3474 = vsel %vm1693, %v3423, 0
      %v3476 = vsel %vm1693, %v3425, 0
      %v3478 = vsel %vm1693, %v3427, 0
      %v3480 = vsel %vm1693, %v3429, 0
      %v3482 = vsel %vm1693, %v3431, 0
      %v3484 = vsel %vm1693, %v3433, 0
      %v3486 = vsel %vm1693, %v3435, 0
      %v3488 = vsel %vm1693, %v3437, 0
      %v3491 = vsel %vm1734, %v3455, 0
      %3493 = vmatprep.subr.bf16.mxu0 0
      %3494 = vmatpush1.bf16.msra.mxu0 %v3453
      %3495 = vmatprep.subr.bf16.mxu0 0
      %3496 = vmatpush1.bf16.msra.mxu0 %v3454
      %3497 = vmatprep.subr.bf16.mxu0 0
      %3498 = vmatpush1.bf16.msra.mxu0 %v3491
      %3499 = vmatprep.subr.bf16.mxu0 0
      %3500 = vmatpush1.bf16.msra.mxu0 0
      %3501 = vmatprep.subr.bf16.mxu0 0
      %3502 = vmatpush1.bf16.msra.mxu0 0
      %3503 = vmatprep.subr.bf16.mxu0 0
      %3504 = vmatpush1.bf16.msra.mxu0 0
      %3505 = vmatprep.subr.bf16.mxu0 0
      %3506 = vmatpush1.bf16.msra.mxu0 0
      %3507 = vmatprep.subr.bf16.mxu0 0
      %3508 = vmatpush1.bf16.msra.mxu0 0
      %3509 = vmatprep.subr.bf16.mxu0 0
      %3510 = vmatpush1.bf16.msra.mxu0 0
      %3511 = vmatprep.subr.bf16.mxu0 0
      %3512 = vmatpush1.bf16.msra.mxu0 0
      %3513 = vmatprep.subr.bf16.mxu0 0
      %3514 = vmatpush1.bf16.msra.mxu0 0
      %3515 = vmatprep.subr.bf16.mxu0 0
      %3516 = vmatpush1.bf16.msra.mxu0 0
      %3517 = vmatprep.subr.bf16.mxu0 0
      %3518 = vmatpush1.bf16.msra.mxu0 0
      %3519 = vmatprep.subr.bf16.mxu0 0
      %3520 = vmatpush1.bf16.msra.mxu0 0
      %3521 = vmatprep.subr.bf16.mxu0 0
      %3522 = vmatpush1.bf16.msra.mxu0 0
      %3523 = vmatprep.subr.bf16.mxu0 0
      %3524 = vmatpush1.bf16.msra.mxu0 0
      %3525 = vmatprep.mubr.bf16.mxu0 0
      %3526 = vmatmul.mubr.bf16.gmra.mrb[0].mxu0 %v3458
      %v3527 = vpop.f32.mrb[0].mxu0
      %v3528 = vadd.f32 0.0, %v3527
      %v3529 = vpop.f32.mrb[0].mxu0
      %v3530 = vpop.f32.mrb[0].mxu0
      %v3531 = vadd.f32 0.0, %v3530
      %v3532 = vpop.f32.mrb[0].mxu0
      %3533 = vmatprep.mubr.bf16.mxu0 0
      %3534 = vmatmul.mubr.bf16.gmra.mrb[0].mxu0 %v3460
      %v3535 = vpop.f32.mrb[0].mxu0
      %v3536 = vadd.f32 0.0, %v3535
      %v3537 = vpop.f32.mrb[0].mxu0
      %v3538 = vpop.f32.mrb[0].mxu0
      %v3539 = vadd.f32 0.0, %v3538
      %v3540 = vpop.f32.mrb[0].mxu0
      %3541 = vmatprep.mubr.bf16.mxu0 0
      %3542 = vmatmul.mubr.bf16.gmra.mrb[0].mxu0 %v3462
      %v3543 = vpop.f32.mrb[0].mxu0
      %v3544 = vadd.f32 0.0, %v3543
      %v3545 = vpop.f32.mrb[0].mxu0
      %v3546 = vpop.f32.mrb[0].mxu0
      %v3547 = vadd.f32 0.0, %v3546
      %v3548 = vpop.f32.mrb[0].mxu0
      %3549 = vmatprep.mubr.bf16.mxu0 0
      %3550 = vmatmul.mubr.bf16.gmra.mrb[0].mxu0 %v3464
      %v3551 = vpop.f32.mrb[0].mxu0
      %v3552 = vadd.f32 0.0, %v3551
      %v3553 = vpop.f32.mrb[0].mxu0
      %v3554 = vpop.f32.mrb[0].mxu0
      %v3555 = vadd.f32 0.0, %v3554
      %v3556 = vpop.f32.mrb[0].mxu0
      %3557 = vmatprep.mubr.bf16.mxu0 0
      %3558 = vmatmul.mubr.bf16.gmra.mrb[0].mxu0 %v3466
      %v3559 = vpop.f32.mrb[0].mxu0
      %v3560 = vadd.f32 0.0, %v3559
      %v3561 = vpop.f32.mrb[0].mxu0
      %v3562 = vpop.f32.mrb[0].mxu0
      %v3563 = vadd.f32 0.0, %v3562
      %v3564 = vpop.f32.mrb[0].mxu0
      %3565 = vmatprep.mubr.bf16.mxu0 0
      %3566 = vmatmul.mubr.bf16.gmra.mrb[0].mxu0 %v3468
      %v3567 = vpop.f32.mrb[0].mxu0
      %v3568 = vadd.f32 0.0, %v3567
      %v3569 = vpop.f32.mrb[0].mxu0
      %v3570 = vpop.f32.mrb[0].mxu0
      %v3571 = vadd.f32 0.0, %v3570
      %v3572 = vpop.f32.mrb[0].mxu0
      %3573 = vmatprep.mubr.bf16.mxu0 0
      %3574 = vmatmul.mubr.bf16.gmra.mrb[0].mxu0 %v3470
      %v3575 = vpop.f32.mrb[0].mxu0
      %v3576 = vadd.f32 0.0, %v3575
      %v3577 = vpop.f32.mrb[0].mxu0
      %v3578 = vpop.f32.mrb[0].mxu0
      %v3579 = vadd.f32 0.0, %v3578
      %v3580 = vpop.f32.mrb[0].mxu0
      %3581 = vmatprep.mubr.bf16.mxu0 0
      %3582 = vmatmul.mubr.bf16.gmra.mrb[0].mxu0 %v3472
      %v3583 = vpop.f32.mrb[0].mxu0
      %v3584 = vadd.f32 0.0, %v3583
      %v3585 = vpop.f32.mrb[0].mxu0
      %v3586 = vpop.f32.mrb[0].mxu0
      %v3587 = vadd.f32 0.0, %v3586
      %v3588 = vpop.f32.mrb[0].mxu0
      %3589 = vmatprep.mubr.bf16.mxu0 0
      %3590 = vmatmul.mubr.bf16.gmra.mrb[0].mxu0 %v3474
      %v3591 = vpop.f32.mrb[0].mxu0
      %v3592 = vadd.f32 0.0, %v3591
      %v3593 = vpop.f32.mrb[0].mxu0
      %v3594 = vpop.f32.mrb[0].mxu0
      %v3595 = vadd.f32 0.0, %v3594
      %v3596 = vpop.f32.mrb[0].mxu0
      %3597 = vmatprep.mubr.bf16.mxu0 0
      %3598 = vmatmul.mubr.bf16.gmra.mrb[0].mxu0 %v3476
      %v3599 = vpop.f32.mrb[0].mxu0
      %v3600 = vadd.f32 0.0, %v3599
      %v3601 = vpop.f32.mrb[0].mxu0
      %v3602 = vpop.f32.mrb[0].mxu0
      %v3603 = vadd.f32 0.0, %v3602
      %v3604 = vpop.f32.mrb[0].mxu0
      %3605 = vmatprep.mubr.bf16.mxu0 0
      %3606 = vmatmul.mubr.bf16.gmra.mrb[0].mxu0 %v3478
      %v3607 = vpop.f32.mrb[0].mxu0
      %v3608 = vadd.f32 0.0, %v3607
      %v3609 = vpop.f32.mrb[0].mxu0
      %v3610 = vpop.f32.mrb[0].mxu0
      %v3611 = vadd.f32 0.0, %v3610
      %v3612 = vpop.f32.mrb[0].mxu0
      %3613 = vmatprep.mubr.bf16.mxu0 0
      %3614 = vmatmul.mubr.bf16.gmra.mrb[0].mxu0 %v3480
      %v3615 = vpop.f32.mrb[0].mxu0
      %v3616 = vadd.f32 0.0, %v3615
      %v3617 = vpop.f32.mrb[0].mxu0
      %v3618 = vpop.f32.mrb[0].mxu0
      %v3619 = vadd.f32 0.0, %v3618
      %v3620 = vpop.f32.mrb[0].mxu0
      %3621 = vmatprep.mubr.bf16.mxu0 0
      %3622 = vmatmul.mubr.bf16.gmra.mrb[0].mxu0 %v3482
      %v3623 = vpop.f32.mrb[0].mxu0
      %v3624 = vadd.f32 0.0, %v3623
      %v3625 = vpop.f32.mrb[0].mxu0
      %v3626 = vpop.f32.mrb[0].mxu0
      %v3627 = vadd.f32 0.0, %v3626
      %v3628 = vpop.f32.mrb[0].mxu0
      %3629 = vmatprep.mubr.bf16.mxu0 0
      %3630 = vmatmul.mubr.bf16.gmra.mrb[0].mxu0 %v3484
      %v3631 = vpop.f32.mrb[0].mxu0
      %v3632 = vadd.f32 0.0, %v3631
      %v3633 = vpop.f32.mrb[0].mxu0
      %v3634 = vpop.f32.mrb[0].mxu0
      %v3635 = vadd.f32 0.0, %v3634
      %v3636 = vpop.f32.mrb[0].mxu0
      %3637 = vmatprep.mubr.bf16.mxu0 0
      %3638 = vmatmul.mubr.bf16.gmra.mrb[0].mxu0 %v3486
      %v3639 = vpop.f32.mrb[0].mxu0
      %v3640 = vadd.f32 0.0, %v3639
      %v3641 = vpop.f32.mrb[0].mxu0
      %v3642 = vpop.f32.mrb[0].mxu0
      %v3643 = vadd.f32 0.0, %v3642
      %v3644 = vpop.f32.mrb[0].mxu0
      %3645 = vmatprep.mubr.bf16.mxu0 0
      %3646 = vmatmul.mubr.bf16.gmra.mrb[0].mxu0 %v3488
      %v3647 = vpop.f32.mrb[0].mxu0
      %v3648 = vadd.f32 0.0, %v3647
      %v3649 = vpop.f32.mrb[0].mxu0
      %v3650 = vpop.f32.mrb[0].mxu0
      %v3651 = vadd.f32 0.0, %v3650
      %v3652 = vpop.f32.mrb[0].mxu0
      %3653 = vdwg.mxu0
      %v3654 = vld [vmem:[%s7] sm:$0x1]
      %v3656 = vlaneseq
      %v3657 = vshrl.u32 %v3656, 7
      %v3658 = vsub.s32 0, %v3657
      %v3659 = vrot.slane %v3654, %v3658
      %v3661 = vmul.f32 %v3528, %v3659
      %v3662 = vmul.f32 %v3531, %v3659
      %v3663 = vmul.f32 %v3536, %v3659
      %v3664 = vmul.f32 %v3539, %v3659
      %v3665 = vmul.f32 %v3544, %v3659
      %v3666 = vmul.f32 %v3547, %v3659
      %v3667 = vmul.f32 %v3552, %v3659
      %v3668 = vmul.f32 %v3555, %v3659
      %v3669 = vmul.f32 %v3560, %v3659
      %v3670 = vmul.f32 %v3563, %v3659
      %v3671 = vmul.f32 %v3568, %v3659
      %v3672 = vmul.f32 %v3571, %v3659
      %v3673 = vmul.f32 %v3576, %v3659
      %v3674 = vmul.f32 %v3579, %v3659
      %v3675 = vmul.f32 %v3584, %v3659
      %v3676 = vmul.f32 %v3587, %v3659
      %v3677 = vmul.f32 %v3592, %v3659
      %v3678 = vmul.f32 %v3595, %v3659
      %v3679 = vmul.f32 %v3600, %v3659
      %v3680 = vmul.f32 %v3603, %v3659
      %v3681 = vmul.f32 %v3608, %v3659
      %v3682 = vmul.f32 %v3611, %v3659
      %v3683 = vmul.f32 %v3616, %v3659
      %v3684 = vmul.f32 %v3619, %v3659
      %v3685 = vmul.f32 %v3624, %v3659
      %v3686 = vmul.f32 %v3627, %v3659
      %v3687 = vmul.f32 %v3632, %v3659
      %v3688 = vmul.f32 %v3635, %v3659
      %v3689 = vmul.f32 %v3640, %v3659
      %v3690 = vmul.f32 %v3643, %v3659
      %v3691 = vmul.f32 %v3648, %v3659
      %v3692 = vmul.f32 %v3651, %v3659
      %v3693 = vld [vmem:[%s8] sm:$0x1]
      %v3695 = vlaneseq
      %v3696 = vshrl.u32 %v3695, 7
      %v3697 = vsub.s32 0, %v3696
      %v3698 = vrot.slane %v3693, %v3697
      %v3700 = vadd.f32 %v3661, %v3698
      %v3701 = vadd.f32 %v3662, %v3698
      %v3702 = vadd.f32 %v3663, %v3698
      %v3703 = vadd.f32 %v3664, %v3698
      %v3704 = vadd.f32 %v3665, %v3698
      %v3705 = vadd.f32 %v3666, %v3698
      %v3706 = vadd.f32 %v3667, %v3698
      %v3707 = vadd.f32 %v3668, %v3698
      %v3708 = vadd.f32 %v3669, %v3698
      %v3709 = vadd.f32 %v3670, %v3698
      %v3710 = vadd.f32 %v3671, %v3698
      %v3711 = vadd.f32 %v3672, %v3698
      %v3712 = vadd.f32 %v3673, %v3698
      %v3713 = vadd.f32 %v3674, %v3698
      %v3714 = vadd.f32 %v3675, %v3698
      %v3715 = vadd.f32 %v3676, %v3698
      %v3716 = vadd.f32 %v3677, %v3698
      %v3717 = vadd.f32 %v3678, %v3698
      %v3718 = vadd.f32 %v3679, %v3698
      %v3719 = vadd.f32 %v3680, %v3698
      %v3720 = vadd.f32 %v3681, %v3698
      %v3721 = vadd.f32 %v3682, %v3698
      %v3722 = vadd.f32 %v3683, %v3698
      %v3723 = vadd.f32 %v3684, %v3698
      %v3724 = vadd.f32 %v3685, %v3698
      %v3725 = vadd.f32 %v3686, %v3698
      %v3726 = vadd.f32 %v3687, %v3698
      %v3727 = vadd.f32 %v3688, %v3698
      %v3728 = vadd.f32 %v3689, %v3698
      %v3729 = vadd.f32 %v3690, %v3698
      %v3730 = vadd.f32 %v3691, %v3698
      %v3731 = vadd.f32 %v3692, %v3698
      %v3732 = vadd.f32 %v627, %v3700
      %v3733 = vadd.f32 %v628, %v3701
      %v3734 = vadd.f32 %v629, %v3702
      %v3735 = vadd.f32 %v630, %v3703
      %v3736 = vadd.f32 %v631, %v3704
      %v3737 = vadd.f32 %v632, %v3705
      %v3738 = vadd.f32 %v633, %v3706
      %v3739 = vadd.f32 %v634, %v3707
      %v3740 = vadd.f32 %v635, %v3708
      %v3741 = vadd.f32 %v636, %v3709
      %v3742 = vadd.f32 %v637, %v3710
      %v3743 = vadd.f32 %v638, %v3711
      %v3744 = vadd.f32 %v639, %v3712
      %v3745 = vadd.f32 %v640, %v3713
      %v3746 = vadd.f32 %v641, %v3714
      %v3747 = vadd.f32 %v642, %v3715
      %v3748 = vadd.f32 %v643, %v3716
      %v3749 = vadd.f32 %v644, %v3717
      %v3750 = vadd.f32 %v645, %v3718
      %v3751 = vadd.f32 %v646, %v3719
      %v3752 = vadd.f32 %v647, %v3720
      %v3753 = vadd.f32 %v648, %v3721
      %v3754 = vadd.f32 %v649, %v3722
      %v3755 = vadd.f32 %v650, %v3723
      %v3756 = vadd.f32 %v651, %v3724
      %v3757 = vadd.f32 %v652, %v3725
      %v3758 = vadd.f32 %v653, %v3726
      %v3759 = vadd.f32 %v654, %v3727
      %v3760 = vadd.f32 %v655, %v3728
      %v3761 = vadd.f32 %v656, %v3729
      %v3762 = vadd.f32 %v657, %v3730
      %v3763 = vadd.f32 %v658, %v3731
      %v3764 = vmax.f32 %v3732, 0.0
      %v3765 = vmax.f32 %v3733, 0.0
      %v3766 = vmax.f32 %v3734, 0.0
      %v3767 = vmax.f32 %v3735, 0.0
      %v3768 = vmax.f32 %v3736, 0.0
      %v3769 = vmax.f32 %v3737, 0.0
      %v3770 = vmax.f32 %v3738, 0.0
      %v3771 = vmax.f32 %v3739, 0.0
      %v3772 = vmax.f32 %v3740, 0.0
      %v3773 = vmax.f32 %v3741, 0.0
      %v3774 = vmax.f32 %v3742, 0.0
      %v3775 = vmax.f32 %v3743, 0.0
      %v3776 = vmax.f32 %v3744, 0.0
      %v3777 = vmax.f32 %v3745, 0.0
      %v3778 = vmax.f32 %v3746, 0.0
      %v3779 = vmax.f32 %v3747, 0.0
      %v3780 = vmax.f32 %v3748, 0.0
      %v3781 = vmax.f32 %v3749, 0.0
      %v3782 = vmax.f32 %v3750, 0.0
      %v3783 = vmax.f32 %v3751, 0.0
      %v3784 = vmax.f32 %v3752, 0.0
      %v3785 = vmax.f32 %v3753, 0.0
      %v3786 = vmax.f32 %v3754, 0.0
      %v3787 = vmax.f32 %v3755, 0.0
      %v3788 = vmax.f32 %v3756, 0.0
      %v3789 = vmax.f32 %v3757, 0.0
      %v3790 = vmax.f32 %v3758, 0.0
      %v3791 = vmax.f32 %v3759, 0.0
      %v3792 = vmax.f32 %v3760, 0.0
      %v3793 = vmax.f32 %v3761, 0.0
      %v3794 = vmax.f32 %v3762, 0.0
      %v3795 = vmax.f32 %v3763, 0.0
      %3796 = vst.msk [vmem:[%s424] sm:$0xff] %vm1325, %v3764
      %3797 = vst.msk [vmem:[%s424 + $0x8] sm:$0xff] %vm1325, %v3765
      %3798 = vst.msk [vmem:[%s424 + $0x10] sm:$0xff] %vm1325, %v3766
      %3799 = vst.msk [vmem:[%s424 + $0x18] sm:$0xff] %vm1325, %v3767
      %3800 = vst.msk [vmem:[%s424 + $0x20] sm:$0xff] %vm1325, %v3768
      %3801 = vst.msk [vmem:[%s424 + $0x28] sm:$0xff] %vm1325, %v3769
      %3802 = vst.msk [vmem:[%s424 + $0x30] sm:$0xff] %vm1325, %v3770
      %3803 = vst.msk [vmem:[%s424 + $0x38] sm:$0xff] %vm1325, %v3771
      %3804 = vst.msk [vmem:[%s424 + $0x40] sm:$0xff] %vm1325, %v3772
      %3805 = vst.msk [vmem:[%s424 + $0x48] sm:$0xff] %vm1325, %v3773
      %3806 = vst.msk [vmem:[%s424 + $0x50] sm:$0xff] %vm1325, %v3774
      %3807 = vst.msk [vmem:[%s424 + $0x58] sm:$0xff] %vm1325, %v3775
      %3808 = vst.msk [vmem:[%s424 + $0x60] sm:$0xff] %vm1325, %v3776
      %3809 = vst.msk [vmem:[%s424 + $0x68] sm:$0xff] %vm1325, %v3777
      %3810 = vst.msk [vmem:[%s424 + $0x70] sm:$0xff] %vm1325, %v3778
      %3811 = vst.msk [vmem:[%s424 + $0x78] sm:$0xff] %vm1325, %v3779
      %3812 = vst.msk [vmem:[%s424 + $0x80] sm:$0xff] %vm1325, %v3780
      %3813 = vst.msk [vmem:[%s424 + $0x88] sm:$0xff] %vm1325, %v3781
      %3814 = vst.msk [vmem:[%s424 + $0x90] sm:$0xff] %vm1325, %v3782
      %3815 = vst.msk [vmem:[%s424 + $0x98] sm:$0xff] %vm1325, %v3783
      %3816 = vst.msk [vmem:[%s424 + $0xa0] sm:$0xff] %vm1325, %v3784
      %3817 = vst.msk [vmem:[%s424 + $0xa8] sm:$0xff] %vm1325, %v3785
      %3818 = vst.msk [vmem:[%s424 + $0xb0] sm:$0xff] %vm1325, %v3786
      %3819 = vst.msk [vmem:[%s424 + $0xb8] sm:$0xff] %vm1325, %v3787
      %3820 = vst.msk [vmem:[%s424 + $0xc0] sm:$0xff] %vm1325, %v3788
      %3821 = vst.msk [vmem:[%s424 + $0xc8] sm:$0xff] %vm1325, %v3789
      %3822 = vst.msk [vmem:[%s424 + $0xd0] sm:$0xff] %vm1325, %v3790
      %3823 = vst.msk [vmem:[%s424 + $0xd8] sm:$0xff] %vm1325, %v3791
      %3824 = vst.msk [vmem:[%s424 + $0xe0] sm:$0xff] %vm1325, %v3792
      %3825 = vst.msk [vmem:[%s424 + $0xe8] sm:$0xff] %vm1325, %v3793
      %3826 = vst.msk [vmem:[%s424 + $0xf0] sm:$0xff] %vm1325, %v3794
      %3827 = vst.msk [vmem:[%s424 + $0xf8] sm:$0xff] %vm1325, %v3795
      %s3828 = smul.u32 32, %s25
      %p3829 = scmp.lt.s32.totalorder %s24, 1
      %s3830 = scalar_select %p3829, %s24, 1
      %p3831 = scmp.lt.s32.totalorder %s3828, 63
      %s3832 = scalar_select %p3831, %s3828, 63
      %s3833 = smul.addr %s3830, 64
      %s3834 = sadd.s32 %s3832, %s3833
      %s3835 = smul.addr %s3834, 8
      %s3836 = scalar_lea.vmem %s9, %s3835
      // Predicated region
      $region57: #{tpu_custom_call.1} parent=55 // pred_check
        %p3837 = pneg %p255
      $region58: #{tpu_custom_call.1} parent=55 // pred_check_branch
        %3839 = sbr.rel (%p3837) target = $region60
      $region59: #{tpu_custom_call.1} parent=55 // pred_region
        %s3840 = smul.u32 32, %s25
      $region60: #{tpu_custom_call.1} parent=55 // pred_fallthru
        _
    $region56: #{tpu_custom_call.1} parent=5 // pred_fallthru
      _
    %p3841 = scmp.le.s32.totalorder 2, %s15
    // Predicated region
    $region61: #{tpu_custom_call.1} parent=5 // pred_check
      %p3842 = pneg %p3841
    $region62: #{tpu_custom_call.1} parent=5 // pred_check_branch
      %3844 = sbr.rel (%p3842) target = $region64
    $region63: #{tpu_custom_call.1} parent=5 // pred_region
      %s3845 = ssub.s32 %s15, 2
      // Predicated region
      $region65: #{tpu_custom_call.1} parent=63 // pred_check
        %p3846 = pneg %p261
      $region66: #{tpu_custom_call.1} parent=63 // pred_check_branch
        %3848 = sbr.rel (%p3846) target = $region68
      $region67: #{tpu_custom_call.1} parent=63 // pred_region
        %s3849 = smul.u32 32, %s27
        %p3850 = scmp.lt.s32.totalorder %s26, 1
        %s3851 = scalar_select %p3850, %s26, 1
        %p3852 = scmp.lt.s32.totalorder %s3849, 63
        %s3853 = scalar_select %p3852, %s3849, 63
        %s3854 = smul.addr %s3851, 64
        %s3855 = sadd.s32 %s3853, %s3854
        %s3856 = smul.addr %s3855, 8
        %s3857 = scalar_lea.vmem %s9, %s3856
      $region68: #{tpu_custom_call.1} parent=63 // pred_fallthru
        _
    $region64: #{tpu_custom_call.1} parent=5 // pred_fallthru
      _
  $region6: #{tpu_custom_call.1} parent=0 // loop_footer
    %s19 = sadd.s32 1, %s15
  $region7: #{tpu_custom_call.1} parent=0 // loop_footer_branch
    %14 = sbr.rel target = $region3
  $region8: #{tpu_custom_call.1} parent=0 // loop_exit
    _

</llo_original>
